<compile_context>
chip_gen: v6e
topology: v6e:2x2x1
jax: 0.10.0
libtpu: 0.0.40
codegen_flags: <defaults>
</compile_context>

<pallas_src>
import jax
import jax.numpy as jnp
from jax import lax
from jax.experimental import pallas as pl
from jax.experimental.pallas import tpu as pltpu

FEAT_DIM = 1280
CLASSNUM = 8
_TS_CAP = 1024   # max spatial tile (MXU M per step); keeps h well inside VMEM


def _silu_dtype():
    """bf16 epilogue on chips with bf16 VPU/EUP (v6e/v7x), f32 otherwise."""
    try:
        kind = jax.devices()[0].device_kind.lower()
    except Exception:
        return jnp.float32
    if any(v in kind for v in ("v2", "v3", "v4", "v5")):
        return jnp.float32
    return jnp.bfloat16


def _choose_ts(S, cap=_TS_CAP):
    """Spatial tile: full S if it fits, else largest 128-multiple divisor."""
    if S <= cap:
        return S
    best = None
    for ts in range(128, cap + 1, 128):   # last block dim must be 128-aligned
        if S % ts == 0:
            best = ts
    return best if best is not None else S


def _make_kernel(TS, C, S_total, silu_dtype):
    inv_s = 1.0 / float(S_total)   # exact mean: TS divides S, no spatial padding

    def kernel(x_ref, wf_ref, bf_ref, wh_ref, bh_ref, y_ref, acc_ref):
        s_idx = pl.program_id(1)

        @pl.when(s_idx == 0)
        def _init():
            acc_ref[...] = jnp.zeros_like(acc_ref)

        # ---- 1x1 projection: transposed-LHS MXU matmul ----------------------
        # x tile is (C, TS) with S on lanes (lane-dense, no host transpose).
        xb = x_ref[...].astype(jnp.bfloat16)
        h = lax.dot_general(
            xb, wf_ref[...],
            dimension_numbers=(((0,), (0,)), ((), ())),     # contract C with C
            preferred_element_type=jnp.float32)             # (TS, 1280) f32
        h = (h + bf_ref[...]).astype(silu_dtype)            # bias
        h = h * jax.nn.sigmoid(h)                           # SiLU (EUP)

        # ---- fused global average pool: spatial partial-sum on the MXU ------
        ones = jnp.ones((1, TS), dtype=h.dtype)
        acc_ref[...] += jnp.dot(ones, h, preferred_element_type=jnp.float32)

        # ---- finalize: mean, dropout(eval)=identity, fused heads ------------
        @pl.when(s_idx == pl.num_programs(1) - 1)
        def _finalize():
            pooled = acc_ref[...] * inv_s                   # (1, 1280) f32
            y = jnp.dot(pooled, wh_ref[...],                # f32 head GEMM
                        preferred_element_type=jnp.float32) + bh_ref[...]
            y_ref[...] = y.astype(y_ref.dtype)              # lane-dense store

    return kernel


@jax.jit
def customized_effnet_forward(x_nchw, params):
    """x_nchw: (B, C_in, H, W) float32.  Returns (y, y2), each (B, CLASSNUM)."""
    B, C, H, W = x_nchw.shape
    S = H * W

    # Free reshape only -- no transpose, no dtype-cast pass over x in HBM.
    x = x_nchw.reshape(B, C, S)

    wf = params["w_feat"].astype(jnp.bfloat16)      # (C, 1280) MXU operand
    bf = params["b_feat"].astype(jnp.float32)       # (1, 1280)

    # Concatenate both heads and pad N up to a 128-lane multiple so the output
    # store is unmasked / lane-dense (one MXU pass instead of two N=8 passes).
    n_out = 2 * CLASSNUM
    head_pad = ((n_out + 127) // 128) * 128
    wh = jnp.concatenate([params["w_head1"], params["w_head2"]], axis=1)
    bh = jnp.concatenate([params["b_head1"], params["b_head2"]], axis=1)
    wh = jnp.pad(wh, ((0, 0), (0, head_pad - n_out))).astype(jnp.float32)
    bh = jnp.pad(bh, ((0, 0), (0, head_pad - n_out))).astype(jnp.float32)

    TS = _choose_ts(S)
    grid = (B, S // TS)                 # batch parallel (megacore), spatial reduce
    kernel = _make_kernel(TS, C, S, _silu_dtype())

    y_pad = pl.pallas_call(
        kernel,
        out_shape=jax.ShapeDtypeStruct((B, 1, head_pad), jnp.float32),
        grid_spec=pltpu.PrefetchScalarGridSpec(
            num_scalar_prefetch=0,
            grid=grid,
            in_specs=[
                # x tile (batch squeezed): kernel sees (C, TS), S on lanes.
                pl.BlockSpec((None, C, TS), lambda b, s: (b, 0, s)),
                pl.BlockSpec((C, FEAT_DIM), lambda b, s: (0, 0)),
                pl.BlockSpec((1, FEAT_DIM), lambda b, s: (0, 0)),
                pl.BlockSpec((FEAT_DIM, head_pad), lambda b, s: (0, 0)),
                pl.BlockSpec((1, head_pad), lambda b, s: (0, 0)),
            ],
            out_specs=pl.BlockSpec((None, 1, head_pad), lambda b, s: (b, 0, 0)),
            scratch_shapes=[pltpu.VMEM((1, FEAT_DIM), jnp.float32)],
        ),
        compiler_params=pltpu.CompilerParams(
            dimension_semantics=("parallel", "arbitrary"),
            vmem_limit_bytes=32 << 20,   # fits v5e/v6e/v7x scoped VMEM
        ),
    )(x, wf, bf, wh, bh)

    y_pad = y_pad[:, 0, :]
    return y_pad[:, :CLASSNUM], y_pad[:, CLASSNUM:n_out]


def _reference_forward(x_nchw, params):
    """Pure-JAX f32 reference for correctness check."""
    B, C, H, W = x_nchw.shape
    x = jnp.transpose(x_nchw, (0, 2, 3, 1)).reshape(B, H * W, C)
    h = jnp.einsum("bsc,cf->bsf", x, params["w_feat"]) + params["b_feat"][None]
    h = h * jax.nn.sigmoid(h)
    pooled = jnp.mean(h, axis=1)
    y1 = pooled @ params["w_head1"] + params["b_head1"]
    y2 = pooled @ params["w_head2"] + params["b_head2"]
    return y1, y2


def init_params(key, c_in):
    ks = jax.random.split(key, 6)
    scale_f = 1.0 / jnp.sqrt(jnp.float32(c_in))
    scale_h = 1.0 / jnp.sqrt(jnp.float32(FEAT_DIM))
    return {
        "w_feat":  jax.random.normal(ks[0], (c_in, FEAT_DIM), jnp.float32) * scale_f,
        "b_feat":  jax.random.normal(ks[1], (1, FEAT_DIM), jnp.float32) * 0.01,
        "w_head1": jax.random.normal(ks[2], (FEAT_DIM, CLASSNUM), jnp.float32) * scale_h,
        "b_head1": jax.random.normal(ks[3], (1, CLASSNUM), jnp.float32) * 0.01,
        "w_head2": jax.random.normal(ks[4], (FEAT_DIM, CLASSNUM), jnp.float32) * scale_h,
        "b_head2": jax.random.normal(ks[5], (1, CLASSNUM), jnp.float32) * 0.01,
    }


if __name__ == "__main__":
    key = jax.random.PRNGKey(0)
    k_x, k_p = jax.random.split(key)

    B, C_IN, H, W = 2, 4, 16, 16
    x = jax.random.normal(k_x, (B, C_IN, H, W), jnp.float32)
    params = init_params(k_p, C_IN)

    y1, y2 = customized_effnet_forward(x, params)
    jax.block_until_ready((y1, y2))

    r1, r2 = _reference_forward(x, params)
    assert y1.shape == (B, CLASSNUM) and y2.shape == (B, CLASSNUM)
    # bf16 MXU operands / bf16 SiLU epilogue (f32 accumulate + f32 pooling and
    # head GEMM) -> compare against f32 ref with a tolerance covering bf16.
    assert jnp.allclose(y1, r1, atol=2e-2, rtol=2e-2)
    assert jnp.allclose(y2, r2, atol=2e-2, rtol=2e-2)

    print("KERNEL_OK")
</pallas_src>

<mosaic_0001>
module attributes {stable_mosaic.version = 11 : i64} {
  func.func @kernel(%arg0: i32, %arg1: i32, %arg2: memref<1x4x256xf32, #tpu.memory_space<vmem>>, %arg3: memref<4x1280xbf16, #tpu.memory_space<vmem>>, %arg4: memref<1x1280xf32, #tpu.memory_space<vmem>>, %arg5: memref<1280x128xf32, #tpu.memory_space<vmem>>, %arg6: memref<1x128xf32, #tpu.memory_space<vmem>>, %arg7: memref<1x1x128xf32, #tpu.memory_space<vmem>>, %arg8: memref<1x1280xf32, #tpu.memory_space<vmem>>) attributes {dimension_semantics = [#tpu.dimension_semantics<parallel>, #tpu.dimension_semantics<arbitrary>], iteration_bounds = array<i64: 2, 1>, scalar_prefetch = 0 : i64, scratch_operands = 1 : i64, tpu.core_type = #tpu.core_type<tc>, window_params = [{transform_indices = @transform_0, window_bounds = array<i64: 1, 4, 256>}, {pipeline_mode = #tpu.pipeline_mode<synchronous>, transform_indices = @transform_1, window_bounds = array<i64: 4, 1280>}, {pipeline_mode = #tpu.pipeline_mode<synchronous>, transform_indices = @transform_2, window_bounds = array<i64: 1, 1280>}, {pipeline_mode = #tpu.pipeline_mode<synchronous>, transform_indices = @transform_3, window_bounds = array<i64: 1280, 128>}, {pipeline_mode = #tpu.pipeline_mode<synchronous>, transform_indices = @transform_4, window_bounds = array<i64: 1, 128>}, {transform_indices = @transform_5, window_bounds = array<i64: 1, 1, 128>}]} {
    %c0_i32 = arith.constant 0 : i32
    %0 = arith.cmpi eq, %arg1, %c0_i32 : i32
    %1 = arith.extui %0 : i1 to i32
    %c0_i32_0 = arith.constant 0 : i32
    %2 = arith.cmpi ne, %1, %c0_i32_0 : i32
    scf.if %2 {
      %cst_16 = arith.constant 0.000000e+00 : f32
      %26 = vector.broadcast %cst_16 : f32 to vector<1x1280xf32>
      %c0_17 = arith.constant 0 : index
      %c0_18 = arith.constant 0 : index
      %27 = vector.load %arg8[%c0_17, %c0_18] : memref<1x1280xf32, #tpu.memory_space<vmem>>, vector<1x1280xf32>
      tpu.vector_store %arg8[%c0_17, %c0_18], %26 {strides = array<i32>} : memref<1x1280xf32, #tpu.memory_space<vmem>>, vector<1x1280xf32>,
    } else {
    }
    %c0 = arith.constant 0 : index
    %c0_1 = arith.constant 0 : index
    %c0_2 = arith.constant 0 : index
    %3 = vector.load %arg2[%c0, %c0_1, %c0_2] : memref<1x4x256xf32, #tpu.memory_space<vmem>>, vector<1x4x256xf32>
    %4 = vector.shape_cast %3 : vector<1x4x256xf32> to vector<4x256xf32>
    %5 = arith.truncf %4 : vector<4x256xf32> to vector<4x256xbf16>
    %c0_3 = arith.constant 0 : index
    %c0_4 = arith.constant 0 : index
    %6 = vector.load %arg3[%c0_3, %c0_4] : memref<4x1280xbf16, #tpu.memory_space<vmem>>, vector<4x1280xbf16>
    %cst = arith.constant dense<0.000000e+00> : vector<256x1280xf32>
    %7 = tpu.matmul %5, %6, %cst {dimension_numbers = #tpu.dot_dimension_numbers<[0], [0], [1], [1], [0, 1, 1, 1], [], []>} : vector<4x256xbf16>, vector<4x1280xbf16>, vector<256x1280xf32> -> vector<256x1280xf32>
    %c0_5 = arith.constant 0 : index
    %c0_6 = arith.constant 0 : index
    %8 = vector.load %arg4[%c0_5, %c0_6] : memref<1x1280xf32, #tpu.memory_space<vmem>>, vector<1x1280xf32>
    %9 = vector.broadcast %8 : vector<1x1280xf32> to vector<256x1280xf32>
    %10 = arith.addf %7, %9 : vector<256x1280xf32>
    %11 = arith.truncf %10 : vector<256x1280xf32> to vector<256x1280xbf16>
    %12 = arith.negf %11 : vector<256x1280xbf16>
    %13 = math.exp %12 : vector<256x1280xbf16>
    %cst_7 = arith.constant 1.000000e+00 : bf16
    %14 = vector.broadcast %cst_7 : bf16 to vector<256x1280xbf16>
    %15 = arith.addf %14, %13 : vector<256x1280xbf16>
    %16 = arith.divf %14, %15 : vector<256x1280xbf16>
    %17 = arith.mulf %11, %16 : vector<256x1280xbf16>
    %cst_8 = arith.constant 1.000000e+00 : bf16
    %18 = vector.broadcast %cst_8 : bf16 to vector<1x256xbf16>
    %c0_9 = arith.constant 0 : index
    %c0_10 = arith.constant 0 : index
    %19 = vector.load %arg8[%c0_9, %c0_10] : memref<1x1280xf32, #tpu.memory_space<vmem>>, vector<1x1280xf32>
    %cst_11 = arith.constant dense<0.000000e+00> : vector<1x1280xf32>
    %20 = tpu.matmul %18, %17, %cst_11 {dimension_numbers = #tpu.dot_dimension_numbers<[1], [0], [0], [1], [0, 0, 1, 1], [], []>} : vector<1x256xbf16>, vector<256x1280xbf16>, vector<1x1280xf32> -> vector<1x1280xf32>
    %21 = arith.addf %19, %20 : vector<1x1280xf32>
    %c0_12 = arith.constant 0 : index
    %c0_13 = arith.constant 0 : index
    %22 = vector.load %arg8[%c0_12, %c0_13] : memref<1x1280xf32, #tpu.memory_space<vmem>>, vector<1x1280xf32>
    tpu.vector_store %arg8[%c0_12, %c0_13], %21 {strides = array<i32>} : memref<1x1280xf32, #tpu.memory_space<vmem>>, vector<1x1280xf32>,
    %c0_i32_14 = arith.constant 0 : i32
    %23 = arith.cmpi eq, %arg1, %c0_i32_14 : i32
    %24 = arith.extui %23 : i1 to i32
    %c0_i32_15 = arith.constant 0 : i32
    %25 = arith.cmpi ne, %24, %c0_i32_15 : i32
    scf.if %25 {
      %c0_16 = arith.constant 0 : index
      %c0_17 = arith.constant 0 : index
      %26 = vector.load %arg8[%c0_16, %c0_17] : memref<1x1280xf32, #tpu.memory_space<vmem>>, vector<1x1280xf32>
      %cst_18 = arith.constant 3.906250e-03 : f32
      %27 = vector.broadcast %cst_18 : f32 to vector<1x1280xf32>
      %28 = arith.mulf %26, %27 : vector<1x1280xf32>
      %c0_19 = arith.constant 0 : index
      %c0_20 = arith.constant 0 : index
      %29 = vector.load %arg5[%c0_19, %c0_20] : memref<1280x128xf32, #tpu.memory_space<vmem>>, vector<1280x128xf32>
      %cst_21 = arith.constant dense<0.000000e+00> : vector<1x128xf32>
      %30 = tpu.matmul %28, %29, %cst_21 {dimension_numbers = #tpu.dot_dimension_numbers<[1], [0], [0], [1], [0, 0, 1, 1], [], []>} : vector<1x1280xf32>, vector<1280x128xf32>, vector<1x128xf32> -> vector<1x128xf32>
      %c0_22 = arith.constant 0 : index
      %c0_23 = arith.constant 0 : index
      %31 = vector.load %arg6[%c0_22, %c0_23] : memref<1x128xf32, #tpu.memory_space<vmem>>, vector<1x128xf32>
      %32 = arith.addf %30, %31 : vector<1x128xf32>
      %c0_24 = arith.constant 0 : index
      %c0_25 = arith.constant 0 : index
      %c0_26 = arith.constant 0 : index
      %33 = vector.load %arg7[%c0_24, %c0_25, %c0_26] : memref<1x1x128xf32, #tpu.memory_space<vmem>>, vector<1x1x128xf32>
      %34 = vector.shape_cast %33 : vector<1x1x128xf32> to vector<1x128xf32>
      %35 = vector.shape_cast %32 : vector<1x128xf32> to vector<1x1x128xf32>
      tpu.vector_store %arg7[%c0_24, %c0_25, %c0_26], %35 {strides = array<i32>} : memref<1x1x128xf32, #tpu.memory_space<vmem>>, vector<1x1x128xf32>,
    } else {
    }
    return
  }
  func.func @transform_0(%arg0: i32, %arg1: i32) -> (i32, i32, i32) {
    %c0_i32 = arith.constant 0 : i32
    %c0_i32_0 = arith.constant 0 : i32
    return %arg0, %c0_i32, %arg1 : i32, i32, i32
  }
  func.func @transform_1(%arg0: i32, %arg1: i32) -> (i32, i32) {
    %c0_i32 = arith.constant 0 : i32
    %c0_i32_0 = arith.constant 0 : i32
    %c0_i32_1 = arith.constant 0 : i32
    return %c0_i32, %c0_i32_0 : i32, i32
  }
  func.func @transform_2(%arg0: i32, %arg1: i32) -> (i32, i32) {
    %c0_i32 = arith.constant 0 : i32
    %c0_i32_0 = arith.constant 0 : i32
    %c0_i32_1 = arith.constant 0 : i32
    return %c0_i32, %c0_i32_0 : i32, i32
  }
  func.func @transform_3(%arg0: i32, %arg1: i32) -> (i32, i32) {
    %c0_i32 = arith.constant 0 : i32
    %c0_i32_0 = arith.constant 0 : i32
    %c0_i32_1 = arith.constant 0 : i32
    return %c0_i32, %c0_i32_0 : i32, i32
  }
  func.func @transform_4(%arg0: i32, %arg1: i32) -> (i32, i32) {
    %c0_i32 = arith.constant 0 : i32
    %c0_i32_0 = arith.constant 0 : i32
    %c0_i32_1 = arith.constant 0 : i32
    return %c0_i32, %c0_i32_0 : i32, i32
  }
  func.func @transform_5(%arg0: i32, %arg1: i32) -> (i32, i32, i32) {
    %c0_i32 = arith.constant 0 : i32
    %c0_i32_0 = arith.constant 0 : i32
    %c0_i32_1 = arith.constant 0 : i32
    return %arg0, %c0_i32, %c0_i32_0 : i32, i32, i32
  }
}

</mosaic_0001>

<llo_original>
// kernel: customized_effnet_forward.1
$region0: #{customized_effnet_forward.1}
  #allocation0 [shape = 'u32[]', space=smem, size = 0x4, offset = 0x4, fixed_abs, tag = 'smem constant byte address 0x4 - core index']
  #allocation1 [shape = 'u32[144,128]{1,0:T(1,128)}', space=vmem, size = 0x12000, scoped, tag = 'internal scratch']
  #allocation2 [shape = 'f32[1,1280]{1,0:T(1,128)}', space=vmem, size = 0x1400, scoped, tag = 'scratch operand']
  %s0 = inlined_call_operand.vmem [shape: f32[2,4,256], index: 0, kind: input, shape index: {}]
  %s1 = inlined_call_operand.vmem [shape: bf16[4,1280], index: 1, kind: input, shape index: {}]
  %s2 = inlined_call_operand.vmem [shape: f32[1,1280], index: 2, kind: input, shape index: {}]
  %s3 = inlined_call_operand.vmem [shape: f32[1280,128], index: 3, kind: input, shape index: {}]
  %s4 = inlined_call_operand.vmem [shape: f32[1,128], index: 4, kind: input, shape index: {}]
  %s5 = inlined_call_operand.vmem [shape: f32[2,1,128], index: 5, kind: output, shape index: {}]
  %s6 = sld [smem:[#allocation0]]
  $region61: #{customized_effnet_forward.1} parent=0
    _
  %s8 = ssub.s32 1, %s6
  %s9 = scalar_select 0, %s8, %s6
  loop: start=0, step=1, limit=4
  $region2: #{customized_effnet_forward.1} parent=0 // loop_pre_header
    _
  $region3: #{customized_effnet_forward.1} parent=0 // loop_header
    %s11 = sphi 0, %s15
    %p12 = scmp.ge.s32.totalorder %s11, 4
    %s18 = sphi 0, %s30
    %s19 = sphi 0, %s26
    %s20 = sphi 0, %s18
    %s21 = sphi 0, %s19
    %s22 = sphi 0, %s20
    %s23 = sphi 0, %s21
    %s35 = sphi 0, %s37
    %s38 = sphi 0, %s35
    %s39 = sphi 0, %s38
    %s55 = sphi 0, %s39
    %s59 = sphi 0, %s59
    %s61 = sphi 0, %s59
    %s62 = sphi 0, %s61
    %s76 = sphi 0, %s62
    %s80 = sphi 0, %s80
    %s82 = sphi 0, %s80
    %s83 = sphi 0, %s82
    %s97 = sphi 0, %s83
    %s101 = sphi 0, %s101
    %s103 = sphi 0, %s101
    %s104 = sphi 0, %s103
    %s118 = sphi 0, %s104
    %s122 = sphi 0, %s122
    %s124 = sphi 0, %s122
    %s125 = sphi 0, %s124
    %s139 = sphi 0, %s125
    %s145 = sphi 0, %s147
    %s148 = sphi 0, %s145
    %s149 = sphi 0, %s148
    %s165 = sphi 0, %s149
  $region4: #{customized_effnet_forward.1} parent=0 // loop_header_branch
    %14 = sbr.rel (%p12) target = $region8
  $region5: #{customized_effnet_forward.1} parent=0 // loop_body
    %s16 = ssub.s32 %s11, 1
    %s17 = ssub.s32 %s11, 2
    %s24 = sadd.s32 1, %s19
    %p25 = scmp.ge.s32.totalorder %s24, 1
    %s26 = scalar_select %p25, 0, %s24
    %s27 = sadd.s32 1, %s18
    %s28 = scalar_select %p25, %s27, %s18
    %p29 = scmp.ge.s32.totalorder %s28, 2
    %s30 = scalar_select %p29, 0, %s28
    %s31 = ssub.s32 %s18, %s30
    %s32 = ssub.s32 %s19, %s26
    %s33 = sor.u32 %s31, %s32
    %p34 = scmp.eq.s32.totalorder %s33, 0
    %s36 = sadd.s32 %s35, 1
    %s37 = scalar_select %p34, %s35, %s36
    %p40 = pneg %p34
    %p41 = scmp.eq.s32.totalorder %s11, 1
    %p42 = por %p40, %p41
    %p43 = scmp.ne.s32.totalorder %s35, %s38
    %p44 = scmp.eq.s32.totalorder %s11, 0
    %p45 = por %p43, %p44
    %p46 = scmp.ne.s32.totalorder %s35, %s38
    %p47 = scmp.eq.s32.totalorder %s16, 1
    %p48 = por %p46, %p47
    %p49 = scmp.ne.s32.totalorder %s38, %s39
    %p50 = scmp.eq.s32.totalorder %s16, 0
    %p51 = por %p49, %p50
    %p52 = scmp.ne.s32.totalorder %s38, %s39
    %p53 = scmp.eq.s32.totalorder %s17, 1
    %p54 = por %p52, %p53
    %p56 = scmp.ne.s32.totalorder %s39, %s55
    %p57 = scmp.eq.s32.totalorder %s17, 0
    %p58 = por %p56, %p57
    %s60 = sadd.s32 %s59, 1
    %p63 = scmp.eq.s32.totalorder %s11, 1
    %p64 = scmp.ne.s32.totalorder %s59, %s61
    %p65 = scmp.eq.s32.totalorder %s11, 0
    %p66 = por %p64, %p65
    %p67 = scmp.ne.s32.totalorder %s59, %s61
    %p68 = scmp.eq.s32.totalorder %s16, 1
    %p69 = por %p67, %p68
    %p70 = scmp.ne.s32.totalorder %s61, %s62
    %p71 = scmp.eq.s32.totalorder %s16, 0
    %p72 = por %p70, %p71
    %p73 = scmp.ne.s32.totalorder %s61, %s62
    %p74 = scmp.eq.s32.totalorder %s17, 1
    %p75 = por %p73, %p74
    %p77 = scmp.ne.s32.totalorder %s62, %s76
    %p78 = scmp.eq.s32.totalorder %s17, 0
    %p79 = por %p77, %p78
    %s81 = sadd.s32 %s80, 1
    %p84 = scmp.eq.s32.totalorder %s11, 1
    %p85 = scmp.ne.s32.totalorder %s80, %s82
    %p86 = scmp.eq.s32.totalorder %s11, 0
    %p87 = por %p85, %p86
    %p88 = scmp.ne.s32.totalorder %s80, %s82
    %p89 = scmp.eq.s32.totalorder %s16, 1
    %p90 = por %p88, %p89
    %p91 = scmp.ne.s32.totalorder %s82, %s83
    %p92 = scmp.eq.s32.totalorder %s16, 0
    %p93 = por %p91, %p92
    %p94 = scmp.ne.s32.totalorder %s82, %s83
    %p95 = scmp.eq.s32.totalorder %s17, 1
    %p96 = por %p94, %p95
    %p98 = scmp.ne.s32.totalorder %s83, %s97
    %p99 = scmp.eq.s32.totalorder %s17, 0
    %p100 = por %p98, %p99
    %s102 = sadd.s32 %s101, 1
    %p105 = scmp.eq.s32.totalorder %s11, 1
    %p106 = scmp.ne.s32.totalorder %s101, %s103
    %p107 = scmp.eq.s32.totalorder %s11, 0
    %p108 = por %p106, %p107
    %p109 = scmp.ne.s32.totalorder %s101, %s103
    %p110 = scmp.eq.s32.totalorder %s16, 1
    %p111 = por %p109, %p110
    %p112 = scmp.ne.s32.totalorder %s103, %s104
    %p113 = scmp.eq.s32.totalorder %s16, 0
    %p114 = por %p112, %p113
    %p115 = scmp.ne.s32.totalorder %s103, %s104
    %p116 = scmp.eq.s32.totalorder %s17, 1
    %p117 = por %p115, %p116
    %p119 = scmp.ne.s32.totalorder %s104, %s118
    %p120 = scmp.eq.s32.totalorder %s17, 0
    %p121 = por %p119, %p120
    %s123 = sadd.s32 %s122, 1
    %p126 = scmp.eq.s32.totalorder %s11, 1
    %p127 = scmp.ne.s32.totalorder %s122, %s124
    %p128 = scmp.eq.s32.totalorder %s11, 0
    %p129 = por %p127, %p128
    %p130 = scmp.ne.s32.totalorder %s122, %s124
    %p131 = scmp.eq.s32.totalorder %s16, 1
    %p132 = por %p130, %p131
    %p133 = scmp.ne.s32.totalorder %s124, %s125
    %p134 = scmp.eq.s32.totalorder %s16, 0
    %p135 = por %p133, %p134
    %p136 = scmp.ne.s32.totalorder %s124, %s125
    %p137 = scmp.eq.s32.totalorder %s17, 1
    %p138 = por %p136, %p137
    %p140 = scmp.ne.s32.totalorder %s125, %s139
    %p141 = scmp.eq.s32.totalorder %s17, 0
    %p142 = por %p140, %p141
    %s143 = ssub.s32 %s18, %s30
    %p144 = scmp.eq.s32.totalorder %s143, 0
    %s146 = sadd.s32 %s145, 1
    %s147 = scalar_select %p144, %s145, %s146
    %p150 = pneg %p144
    %p151 = scmp.eq.s32.totalorder %s11, 1
    %p152 = por %p150, %p151
    %p153 = scmp.ne.s32.totalorder %s145, %s148
    %p154 = scmp.eq.s32.totalorder %s11, 0
    %p155 = por %p153, %p154
    %p156 = scmp.ne.s32.totalorder %s145, %s148
    %p157 = scmp.eq.s32.totalorder %s16, 1
    %p158 = por %p156, %p157
    %p159 = scmp.ne.s32.totalorder %s148, %s149
    %p160 = scmp.eq.s32.totalorder %s16, 0
    %p161 = por %p159, %p160
    %p162 = scmp.ne.s32.totalorder %s148, %s149
    %p163 = scmp.eq.s32.totalorder %s17, 1
    %p164 = por %p162, %p163
    %p166 = scmp.ne.s32.totalorder %s149, %s165
    %p167 = scmp.eq.s32.totalorder %s17, 0
    %p168 = por %p166, %p167
    %p169 = scmp.le.s32.totalorder 1, %s11
    %p170 = scmp.lt.s32.totalorder %s11, 3
    %p171 = pnand %p169, %p170
    %p172 = pneg %p171
    // Predicated region
    $region9: #{customized_effnet_forward.1} parent=5 // pred_check
      _
    $region10: #{customized_effnet_forward.1} parent=5 // pred_check_branch
      %174 = sbr.rel (%p171) target = $region12
    $region11: #{customized_effnet_forward.1} parent=5 // pred_region
      %s175 = ssub.s32 %s11, 1
      // Predicated region
      $region13: #{customized_effnet_forward.1} parent=11 // pred_check
        %p176 = pneg %p72
      $region14: #{customized_effnet_forward.1} parent=11 // pred_check_branch
        %178 = sbr.rel (%p176) target = $region16
      $region15: #{customized_effnet_forward.1} parent=11 // pred_region
        _
      $region16: #{customized_effnet_forward.1} parent=11 // pred_fallthru
        _
      // Predicated region
      $region17: #{customized_effnet_forward.1} parent=11 // pred_check
        %p179 = pneg %p93
      $region18: #{customized_effnet_forward.1} parent=11 // pred_check_branch
        %181 = sbr.rel (%p179) target = $region20
      $region19: #{customized_effnet_forward.1} parent=11 // pred_region
        _
      $region20: #{customized_effnet_forward.1} parent=11 // pred_fallthru
        _
      // Predicated region
      $region21: #{customized_effnet_forward.1} parent=11 // pred_check
        %p182 = pneg %p114
      $region22: #{customized_effnet_forward.1} parent=11 // pred_check_branch
        %184 = sbr.rel (%p182) target = $region24
      $region23: #{customized_effnet_forward.1} parent=11 // pred_region
        _
      $region24: #{customized_effnet_forward.1} parent=11 // pred_fallthru
        _
      // Predicated region
      $region25: #{customized_effnet_forward.1} parent=11 // pred_check
        %p185 = pneg %p135
      $region26: #{customized_effnet_forward.1} parent=11 // pred_check_branch
        %187 = sbr.rel (%p185) target = $region28
      $region27: #{customized_effnet_forward.1} parent=11 // pred_region
        _
      $region28: #{customized_effnet_forward.1} parent=11 // pred_fallthru
        _
    $region12: #{customized_effnet_forward.1} parent=5 // pred_fallthru
      _
    %p188 = scmp.lt.s32.totalorder %s11, 2
    // Predicated region
    $region29: #{customized_effnet_forward.1} parent=5 // pred_check
      %p189 = pneg %p188
    $region30: #{customized_effnet_forward.1} parent=5 // pred_check_branch
      %191 = sbr.rel (%p189) target = $region32
    $region31: #{customized_effnet_forward.1} parent=5 // pred_region
      // Predicated region
      $region33: #{customized_effnet_forward.1} parent=31 // pred_check
        %p192 = pneg %p45
      $region34: #{customized_effnet_forward.1} parent=31 // pred_check_branch
        %194 = sbr.rel (%p192) target = $region36
      $region35: #{customized_effnet_forward.1} parent=31 // pred_region
        %s195 = smul.u32 2, %s19
        %p196 = scmp.lt.s32.totalorder %s18, 1
        %s197 = scalar_select %p196, %s18, 1
        %p198 = scmp.lt.s32.totalorder %s195, 1
        %s199 = scalar_select %p198, %s195, 1
        %s200 = smul.addr %s197, 2
        %s201 = sadd.s32 %s199, %s200
        %s202 = smul.addr %s201, 4
        %s203 = scalar_lea.vmem %s0, %s202
        %s204 = smul.u32 2, %s19
      $region36: #{customized_effnet_forward.1} parent=31 // pred_fallthru
        _
    $region32: #{customized_effnet_forward.1} parent=5 // pred_fallthru
      _
    %p205 = scmp.le.s32.totalorder 1, %s11
    %p206 = scmp.lt.s32.totalorder %s11, 3
    %p207 = pnand %p205, %p206
    %p208 = pneg %p207
    // Predicated region
    $region37: #{customized_effnet_forward.1} parent=5 // pred_check
      _
    $region38: #{customized_effnet_forward.1} parent=5 // pred_check_branch
      %210 = sbr.rel (%p207) target = $region40
    $region39: #{customized_effnet_forward.1} parent=5 // pred_region
      %s211 = ssub.s32 %s11, 1
      %s212 = smul.u32 2, %s21
      %p213 = scmp.lt.s32.totalorder %s20, 1
      %s214 = scalar_select %p213, %s20, 1
      %p215 = scmp.lt.s32.totalorder %s212, 1
      %s216 = scalar_select %p215, %s212, 1
      %s217 = smul.addr %s214, 2
      %s218 = sadd.s32 %s216, %s217
      %s219 = smul.addr %s218, 4
      %s220 = scalar_lea.vmem %s0, %s219
      %p221 = pneg %p51
      %p222 = pneg %p48
      %p223 = pneg %p72
      %p224 = pneg %p69
      %p225 = pneg %p93
      %p226 = pneg %p90
      %p227 = pneg %p114
      %p228 = pneg %p111
      %p229 = pneg %p135
      %p230 = pneg %p132
      %p231 = pneg %p161
      %p232 = pneg %p158
      %p233 = scmp.lt.s32.totalorder %s20, 1
      %s234 = scalar_select %p233, %s20, 1
      %s235 = scalar_lea.vmem %s5, %s234
      %s236 = smul.u32 2, %s21
      %p237 = scmp.lt.s32.totalorder %s20, 1
      %s238 = scalar_select %p237, %s20, 1
      %p239 = scmp.lt.s32.totalorder %s236, 1
      %s240 = scalar_select %p239, %s236, 1
      %s241 = smul.addr %s238, 2
      %s242 = sadd.s32 %s240, %s241
      %s243 = smul.addr %s242, 4
      %s244 = scalar_lea.vmem %s0, %s243
      %s245 = smul.u32 2, %s21
      %p246 = scmp.lt.s32.totalorder %s20, 1
      %s247 = scalar_select %p246, %s20, 1
      %s248 = scalar_lea.vmem %s5, %s247
      %p251 = scmp.eq.s32.totalorder %s21, 0
      // Predicated region
      $region41: #{customized_effnet_forward.1} parent=39 // pred_check
        %p252 = pneg %p251
      $region42: #{customized_effnet_forward.1} parent=39 // pred_check_branch
        %254 = sbr.rel (%p252) target = $region44
      $region43: #{customized_effnet_forward.1} parent=39 // pred_region
        %255 = vst [vmem:[#allocation2] sm:$0xff] 0.0
        %v256 = vlaneseq
        %vm257 = vcmp.ge.s32.totalorder %v256, 0
        %vm258 = vcmp.lt.s32.totalorder %v256, 256
        %vm259 = vmand %vm257, %vm258
        %260 = vst.msk [vmem:[#allocation2 + $0x8] sm:$0x3] %vm259, 0.0
      $region44: #{customized_effnet_forward.1} parent=39 // pred_fallthru
        _
      %v261 = vld [vmem:[%s244] sm:$0xff]
      %v263 = vcombine.high %v261, %v261
      %v265 = vpack.c.bf16 %v261, %v261
      %v266 = vpack.c.bf16 %v263, %v263
      %v267 = vld [vmem:[%s1] sm:$0xff]
      %v268 = vld [vmem:[%s1 + $0x8] sm:$0xff]
      %v269 = vld [vmem:[%s1 + $0x10] sm:$0xf]
      %v270 = vld [vmem:[%s2] sm:$0xff]
      %v271 = vld [vmem:[%s2 + $0x8] sm:$0x3]
      %v274 = vlaneseq
      %v275 = vshrl.u32 %v274, 7
      %v276 = vsub.s32 0, %v275
      %v277 = vrot.slane %v270, %v276
      %v278 = vlaneseq
      %v279 = vshrl.u32 %v278, 7
      %v280 = vsub.s32 1, %v279
      %v281 = vrot.slane %v270, %v280
      %v282 = vlaneseq
      %v283 = vshrl.u32 %v282, 7
      %v284 = vsub.s32 2, %v283
      %v285 = vrot.slane %v270, %v284
      %v286 = vlaneseq
      %v287 = vshrl.u32 %v286, 7
      %v288 = vsub.s32 3, %v287
      %v289 = vrot.slane %v270, %v288
      %v290 = vlaneseq
      %v291 = vshrl.u32 %v290, 7
      %v292 = vsub.s32 4, %v291
      %v293 = vrot.slane %v270, %v292
      %v294 = vlaneseq
      %v295 = vshrl.u32 %v294, 7
      %v296 = vsub.s32 5, %v295
      %v297 = vrot.slane %v270, %v296
      %v298 = vlaneseq
      %v299 = vshrl.u32 %v298, 7
      %v300 = vsub.s32 6, %v299
      %v301 = vrot.slane %v270, %v300
      %v302 = vlaneseq
      %v303 = vshrl.u32 %v302, 7
      %v304 = vsub.s32 7, %v303
      %v305 = vrot.slane %v270, %v304
      %v306 = vlaneseq
      %v307 = vshrl.u32 %v306, 7
      %v308 = vsub.s32 0, %v307
      %v309 = vrot.slane %v271, %v308
      %v310 = vlaneseq
      %v311 = vshrl.u32 %v310, 7
      %v312 = vsub.s32 1, %v311
      %v313 = vrot.slane %v271, %v312
      %324 = vxpose.xlu0.c.b16.start [1/8] %v265, 128
      %325 = vxpose.xlu0.c.b16.cont [2/8] 0, 128
      %326 = vxpose.xlu0.c.b16.cont [3/8] 0, 128
      %327 = vxpose.xlu0.c.b16.cont [4/8] 0, 128
      %328 = vxpose.xlu0.c.b16.cont [5/8] 0, 128
      %329 = vxpose.xlu0.c.b16.cont [6/8] 0, 128
      %330 = vxpose.xlu0.c.b16.cont [7/8] 0, 128
      %331 = vxpose.xlu0.c.b16.end [8/8] 0, 128
      %v332 = vpop.trf.xlu0
      %v333 = vpop.trf.xlu0
      %v334 = vpop.trf.xlu0
      %v335 = vpop.trf.xlu0
      %v336 = vpop.trf.xlu0
      %v337 = vpop.trf.xlu0
      %v338 = vpop.trf.xlu0
      %v339 = vpop.trf.xlu0
      %340 = vxpose.xlu0.c.b16.start [1/8] %v266, 128
      %341 = vxpose.xlu0.c.b16.cont [2/8] 0, 128
      %342 = vxpose.xlu0.c.b16.cont [3/8] 0, 128
      %343 = vxpose.xlu0.c.b16.cont [4/8] 0, 128
      %344 = vxpose.xlu0.c.b16.cont [5/8] 0, 128
      %345 = vxpose.xlu0.c.b16.cont [6/8] 0, 128
      %346 = vxpose.xlu0.c.b16.cont [7/8] 0, 128
      %347 = vxpose.xlu0.c.b16.end [8/8] 0, 128
      %v348 = vpop.trf.xlu0
      %v349 = vpop.trf.xlu0
      %v350 = vpop.trf.xlu0
      %v351 = vpop.trf.xlu0
      %v352 = vpop.trf.xlu0
      %v353 = vpop.trf.xlu0
      %v354 = vpop.trf.xlu0
      %v355 = vpop.trf.xlu0
      %v359 = vcombine.high %v267, %v267
      %v361 = vunpack.c.l.s4 1983009808
      %v362 = vunpack.c.0.s8 %v361
      %v363 = vlaneseq
      %v364 = vshrl.u32 %v363, 7
      %v365 = vsub.s32 %v362, %v364
      %v366 = vrot.slane %v267, %v365
      %v368 = vunpack.c.l.s4 1983009808
      %v369 = vunpack.c.0.s8 %v368
      %v370 = vlaneseq
      %v371 = vshrl.u32 %v370, 7
      %v372 = vsub.s32 %v369, %v371
      %v373 = vrot.slane %v359, %v372
      %v374 = vcombine.high %v366, %v366
      %v375 = vcombine.high %v373, %v373
      %v376 = vcombine.high %v268, %v268
      %v378 = vunpack.c.l.s4 1983009808
      %v379 = vunpack.c.0.s8 %v378
      %v380 = vlaneseq
      %v381 = vshrl.u32 %v380, 7
      %v382 = vsub.s32 %v379, %v381
      %v383 = vrot.slane %v268, %v382
      %v385 = vunpack.c.l.s4 1983009808
      %v386 = vunpack.c.0.s8 %v385
      %v387 = vlaneseq
      %v388 = vshrl.u32 %v387, 7
      %v389 = vsub.s32 %v386, %v388
      %v390 = vrot.slane %v376, %v389
      %v391 = vcombine.high %v383, %v383
      %v392 = vcombine.high %v390, %v390
      %v394 = vunpack.c.l.s4 1983009808
      %v395 = vunpack.c.0.s8 %v394
      %v396 = vlaneseq
      %v397 = vshrl.u32 %v396, 7
      %v398 = vsub.s32 %v395, %v397
      %v399 = vrot.slane %v269, %v398
      %v400 = vcombine.high %v399, %v399
      %vm401 = vcmask 31744
      %v403 = vsel %vm401, %v332, 0
      %v406 = vsel %vm401, %v333, 0
      %v409 = vsel %vm401, %v334, 0
      %v412 = vsel %vm401, %v335, 0
      %v415 = vsel %vm401, %v336, 0
      %v418 = vsel %vm401, %v337, 0
      %v421 = vsel %vm401, %v338, 0
      %v424 = vsel %vm401, %v339, 0
      %v427 = vsel %vm401, %v348, 0
      %v430 = vsel %vm401, %v349, 0
      %v433 = vsel %vm401, %v350, 0
      %v436 = vsel %vm401, %v351, 0
      %v439 = vsel %vm401, %v352, 0
      %v442 = vsel %vm401, %v353, 0
      %v445 = vsel %vm401, %v354, 0
      %v448 = vsel %vm401, %v355, 0
      %vm450 = vcmask 1041408
      %v452 = vsel %vm450, %v366, 0
      %v455 = vsel %vm450, %v374, 0
      %v458 = vsel %vm450, %v373, 0
      %v461 = vsel %vm450, %v375, 0
      %v464 = vsel %vm450, %v383, 0
      %v467 = vsel %vm450, %v391, 0
      %v470 = vsel %vm450, %v390, 0
      %v473 = vsel %vm450, %v392, 0
      %v476 = vsel %vm450, %v399, 0
      %v479 = vsel %vm450, %v400, 0
      %481 = vmatprep.subr.bf16.mxu0 0
      %482 = vmatpush1.bf16.msra.mxu0 0
      %483 = vmatprep.subr.bf16.mxu0 0
      %484 = vmatpush1.bf16.msra.mxu0 0
      %485 = vmatprep.subr.bf16.mxu0 0
      %486 = vmatpush1.bf16.msra.mxu0 0
      %487 = vmatprep.subr.bf16.mxu0 0
      %488 = vmatpush1.bf16.msra.mxu0 0
      %489 = vmatprep.subr.bf16.mxu0 0
      %490 = vmatpush1.bf16.msra.mxu0 0
      %491 = vmatprep.subr.bf16.mxu0 0
      %492 = vmatpush1.bf16.msra.mxu0 0
      %493 = vmatprep.subr.bf16.mxu0 0
      %494 = vmatpush1.bf16.msra.mxu0 0
      %495 = vmatprep.subr.bf16.mxu0 %v455
      %496 = vmatpush1.bf16.msra.mxu0 %v452
      %497 = vmatprep.subr.bf16.mxu0 0
      %498 = vmatpush2.bf16.msra.mxu0 0
      %499 = vmatprep.subr.bf16.mxu0 0
      %500 = vmatpush2.bf16.msra.mxu0 0
      %501 = vmatprep.subr.bf16.mxu0 0
      %502 = vmatpush2.bf16.msra.mxu0 0
      %503 = vmatprep.subr.bf16.mxu0 0
      %504 = vmatpush2.bf16.msra.mxu0 0
      %505 = vmatprep.subr.bf16.mxu0 0
      %506 = vmatpush2.bf16.msra.mxu0 0
      %507 = vmatprep.subr.bf16.mxu0 0
      %508 = vmatpush2.bf16.msra.mxu0 0
      %509 = vmatprep.subr.bf16.mxu0 0
      %510 = vmatpush2.bf16.msra.mxu0 0
      %511 = vmatprep.subr.bf16.mxu0 0
      %512 = vmatpush2.bf16.msra.mxu0 0
      %513 = vmatprep.mubr.bf16.mxu0 0
      %514 = vmatmul.mubr.bf16.gmra.mxu0 %v403
      %v515 = vpop.f32.mrf.mxu0
      %v516 = vadd.f32 %v277, %v515
      %v517 = vpop.f32.mrf.mxu0
      %v518 = vadd.f32 %v281, %v517
      %v519 = vpop.f32.mrf.mxu0
      %v520 = vadd.f32 %v277, %v519
      %v521 = vpop.f32.mrf.mxu0
      %v522 = vadd.f32 %v281, %v521
      %523 = vmatprep.mubr.bf16.mxu0 0
      %524 = vmatmul.mubr.bf16.gmra.mxu0 %v406
      %v525 = vpop.f32.mrf.mxu0
      %v526 = vadd.f32 %v277, %v525
      %v527 = vpop.f32.mrf.mxu0
      %v528 = vadd.f32 %v281, %v527
      %v529 = vpop.f32.mrf.mxu0
      %v530 = vadd.f32 %v277, %v529
      %v531 = vpop.f32.mrf.mxu0
      %v532 = vadd.f32 %v281, %v531
      %533 = vmatprep.mubr.bf16.mxu0 0
      %534 = vmatmul.mubr.bf16.gmra.mxu0 %v409
      %v535 = vpop.f32.mrf.mxu0
      %v536 = vadd.f32 %v277, %v535
      %v537 = vpop.f32.mrf.mxu0
      %v538 = vadd.f32 %v281, %v537
      %v539 = vpop.f32.mrf.mxu0
      %v540 = vadd.f32 %v277, %v539
      %v541 = vpop.f32.mrf.mxu0
      %v542 = vadd.f32 %v281, %v541
      %543 = vmatprep.mubr.bf16.mxu0 0
      %544 = vmatmul.mubr.bf16.gmra.mxu0 %v412
      %v545 = vpop.f32.mrf.mxu0
      %v546 = vadd.f32 %v277, %v545
      %v547 = vpop.f32.mrf.mxu0
      %v548 = vadd.f32 %v281, %v547
      %v549 = vpop.f32.mrf.mxu0
      %v550 = vadd.f32 %v277, %v549
      %v551 = vpop.f32.mrf.mxu0
      %v552 = vadd.f32 %v281, %v551
      %553 = vmatprep.mubr.bf16.mxu0 0
      %554 = vmatmul.mubr.bf16.gmra.mxu0 %v415
      %v555 = vpop.f32.mrf.mxu0
      %v556 = vadd.f32 %v277, %v555
      %v557 = vpop.f32.mrf.mxu0
      %v558 = vadd.f32 %v281, %v557
      %v559 = vpop.f32.mrf.mxu0
      %v560 = vadd.f32 %v277, %v559
      %v561 = vpop.f32.mrf.mxu0
      %v562 = vadd.f32 %v281, %v561
      %563 = vmatprep.mubr.bf16.mxu0 0
      %564 = vmatmul.mubr.bf16.gmra.mxu0 %v418
      %v565 = vpop.f32.mrf.mxu0
      %v566 = vadd.f32 %v277, %v565
      %v567 = vpop.f32.mrf.mxu0
      %v568 = vadd.f32 %v281, %v567
      %v569 = vpop.f32.mrf.mxu0
      %v570 = vadd.f32 %v277, %v569
      %v571 = vpop.f32.mrf.mxu0
      %v572 = vadd.f32 %v281, %v571
      %573 = vmatprep.mubr.bf16.mxu0 0
      %574 = vmatmul.mubr.bf16.gmra.mxu0 %v421
      %v575 = vpop.f32.mrf.mxu0
      %v576 = vadd.f32 %v277, %v575
      %v577 = vpop.f32.mrf.mxu0
      %v578 = vadd.f32 %v281, %v577
      %v579 = vpop.f32.mrf.mxu0
      %v580 = vadd.f32 %v277, %v579
      %v581 = vpop.f32.mrf.mxu0
      %v582 = vadd.f32 %v281, %v581
      %583 = vmatprep.mubr.bf16.mxu0 0
      %584 = vmatmul.mubr.bf16.gmra.mxu0 %v424
      %v585 = vpop.f32.mrf.mxu0
      %v586 = vadd.f32 %v277, %v585
      %v587 = vpop.f32.mrf.mxu0
      %v588 = vadd.f32 %v281, %v587
      %v589 = vpop.f32.mrf.mxu0
      %v590 = vadd.f32 %v277, %v589
      %v591 = vpop.f32.mrf.mxu0
      %v592 = vadd.f32 %v281, %v591
      %593 = vmatprep.mubr.bf16.mxu0 0
      %594 = vmatmul.mubr.bf16.gmra.mxu0 %v427
      %v595 = vpop.f32.mrf.mxu0
      %v596 = vadd.f32 %v277, %v595
      %v597 = vpop.f32.mrf.mxu0
      %v598 = vadd.f32 %v281, %v597
      %v599 = vpop.f32.mrf.mxu0
      %v600 = vadd.f32 %v277, %v599
      %v601 = vpop.f32.mrf.mxu0
      %v602 = vadd.f32 %v281, %v601
      %603 = vmatprep.mubr.bf16.mxu0 0
      %604 = vmatmul.mubr.bf16.gmra.mxu0 %v430
      %v605 = vpop.f32.mrf.mxu0
      %v606 = vadd.f32 %v277, %v605
      %v607 = vpop.f32.mrf.mxu0
      %v608 = vadd.f32 %v281, %v607
      %v609 = vpop.f32.mrf.mxu0
      %v610 = vadd.f32 %v277, %v609
      %v611 = vpop.f32.mrf.mxu0
      %v612 = vadd.f32 %v281, %v611
      %613 = vmatprep.mubr.bf16.mxu0 0
      %614 = vmatmul.mubr.bf16.gmra.mxu0 %v433
      %v615 = vpop.f32.mrf.mxu0
      %v616 = vadd.f32 %v277, %v615
      %v617 = vpop.f32.mrf.mxu0
      %v618 = vadd.f32 %v281, %v617
      %v619 = vpop.f32.mrf.mxu0
      %v620 = vadd.f32 %v277, %v619
      %v621 = vpop.f32.mrf.mxu0
      %v622 = vadd.f32 %v281, %v621
      %623 = vmatprep.mubr.bf16.mxu0 0
      %624 = vmatmul.mubr.bf16.gmra.mxu0 %v436
      %v625 = vpop.f32.mrf.mxu0
      %v626 = vadd.f32 %v277, %v625
      %v627 = vpop.f32.mrf.mxu0
      %v628 = vadd.f32 %v281, %v627
      %v629 = vpop.f32.mrf.mxu0
      %v630 = vadd.f32 %v277, %v629
      %v631 = vpop.f32.mrf.mxu0
      %v632 = vadd.f32 %v281, %v631
      %633 = vmatprep.mubr.bf16.mxu0 0
      %634 = vmatmul.mubr.bf16.gmra.mxu0 %v439
      %v635 = vpop.f32.mrf.mxu0
      %v636 = vadd.f32 %v277, %v635
      %v637 = vpop.f32.mrf.mxu0
      %v638 = vadd.f32 %v281, %v637
      %v639 = vpop.f32.mrf.mxu0
      %v640 = vadd.f32 %v277, %v639
      %v641 = vpop.f32.mrf.mxu0
      %v642 = vadd.f32 %v281, %v641
      %643 = vmatprep.mubr.bf16.mxu0 0
      %644 = vmatmul.mubr.bf16.gmra.mxu0 %v442
      %v645 = vpop.f32.mrf.mxu0
      %v646 = vadd.f32 %v277, %v645
      %v647 = vpop.f32.mrf.mxu0
      %v648 = vadd.f32 %v281, %v647
      %v649 = vpop.f32.mrf.mxu0
      %v650 = vadd.f32 %v277, %v649
      %v651 = vpop.f32.mrf.mxu0
      %v652 = vadd.f32 %v281, %v651
      %653 = vmatprep.mubr.bf16.mxu0 0
      %654 = vmatmul.mubr.bf16.gmra.mxu0 %v445
      %v655 = vpop.f32.mrf.mxu0
      %v656 = vadd.f32 %v277, %v655
      %v657 = vpop.f32.mrf.mxu0
      %v658 = vadd.f32 %v281, %v657
      %v659 = vpop.f32.mrf.mxu0
      %v660 = vadd.f32 %v277, %v659
      %v661 = vpop.f32.mrf.mxu0
      %v662 = vadd.f32 %v281, %v661
      %663 = vmatprep.mubr.bf16.mxu0 0
      %664 = vmatmul.mubr.bf16.gmra.mxu0 %v448
      %v665 = vpop.f32.mrf.mxu0
      %v666 = vadd.f32 %v277, %v665
      %v667 = vpop.f32.mrf.mxu0
      %v668 = vadd.f32 %v281, %v667
      %v669 = vpop.f32.mrf.mxu0
      %v670 = vadd.f32 %v277, %v669
      %v671 = vpop.f32.mrf.mxu0
      %v672 = vadd.f32 %v281, %v671
      %673 = vdwg.mxu0
      %674 = vmatprep.subr.bf16.mxu0 0
      %675 = vmatpush1.bf16.msra.mxu0 0
      %676 = vmatprep.subr.bf16.mxu0 0
      %677 = vmatpush1.bf16.msra.mxu0 0
      %678 = vmatprep.subr.bf16.mxu0 0
      %679 = vmatpush1.bf16.msra.mxu0 0
      %680 = vmatprep.subr.bf16.mxu0 0
      %681 = vmatpush1.bf16.msra.mxu0 0
      %682 = vmatprep.subr.bf16.mxu0 0
      %683 = vmatpush1.bf16.msra.mxu0 0
      %684 = vmatprep.subr.bf16.mxu0 0
      %685 = vmatpush1.bf16.msra.mxu0 0
      %686 = vmatprep.subr.bf16.mxu0 0
      %687 = vmatpush1.bf16.msra.mxu0 0
      %688 = vmatprep.subr.bf16.mxu0 %v461
      %689 = vmatpush1.bf16.msra.mxu0 %v458
      %690 = vmatprep.subr.bf16.mxu0 0
      %691 = vmatpush2.bf16.msra.mxu0 0
      %692 = vmatprep.subr.bf16.mxu0 0
      %693 = vmatpush2.bf16.msra.mxu0 0
      %694 = vmatprep.subr.bf16.mxu0 0
      %695 = vmatpush2.bf16.msra.mxu0 0
      %696 = vmatprep.subr.bf16.mxu0 0
      %697 = vmatpush2.bf16.msra.mxu0 0
      %698 = vmatprep.subr.bf16.mxu0 0
      %699 = vmatpush2.bf16.msra.mxu0 0
      %700 = vmatprep.subr.bf16.mxu0 0
      %701 = vmatpush2.bf16.msra.mxu0 0
      %702 = vmatprep.subr.bf16.mxu0 0
      %703 = vmatpush2.bf16.msra.mxu0 0
      %704 = vmatprep.subr.bf16.mxu0 0
      %705 = vmatpush2.bf16.msra.mxu0 0
      %706 = vmatprep.mubr.bf16.mxu0 0
      %707 = vmatmul.mubr.bf16.gmra.mxu0 %v403
      %v708 = vpop.f32.mrf.mxu0
      %v709 = vadd.f32 %v285, %v708
      %v710 = vpop.f32.mrf.mxu0
      %v711 = vadd.f32 %v289, %v710
      %v712 = vpop.f32.mrf.mxu0
      %v713 = vadd.f32 %v285, %v712
      %v714 = vpop.f32.mrf.mxu0
      %v715 = vadd.f32 %v289, %v714
      %716 = vmatprep.mubr.bf16.mxu0 0
      %717 = vmatmul.mubr.bf16.gmra.mxu0 %v406
      %v718 = vpop.f32.mrf.mxu0
      %v719 = vadd.f32 %v285, %v718
      %v720 = vpop.f32.mrf.mxu0
      %v721 = vadd.f32 %v289, %v720
      %v722 = vpop.f32.mrf.mxu0
      %v723 = vadd.f32 %v285, %v722
      %v724 = vpop.f32.mrf.mxu0
      %v725 = vadd.f32 %v289, %v724
      %726 = vmatprep.mubr.bf16.mxu0 0
      %727 = vmatmul.mubr.bf16.gmra.mxu0 %v409
      %v728 = vpop.f32.mrf.mxu0
      %v729 = vadd.f32 %v285, %v728
      %v730 = vpop.f32.mrf.mxu0
      %v731 = vadd.f32 %v289, %v730
      %v732 = vpop.f32.mrf.mxu0
      %v733 = vadd.f32 %v285, %v732
      %v734 = vpop.f32.mrf.mxu0
      %v735 = vadd.f32 %v289, %v734
      %736 = vmatprep.mubr.bf16.mxu0 0
      %737 = vmatmul.mubr.bf16.gmra.mxu0 %v412
      %v738 = vpop.f32.mrf.mxu0
      %v739 = vadd.f32 %v285, %v738
      %v740 = vpop.f32.mrf.mxu0
      %v741 = vadd.f32 %v289, %v740
      %v742 = vpop.f32.mrf.mxu0
      %v743 = vadd.f32 %v285, %v742
      %v744 = vpop.f32.mrf.mxu0
      %v745 = vadd.f32 %v289, %v744
      %746 = vmatprep.mubr.bf16.mxu0 0
      %747 = vmatmul.mubr.bf16.gmra.mxu0 %v415
      %v748 = vpop.f32.mrf.mxu0
      %v749 = vadd.f32 %v285, %v748
      %v750 = vpop.f32.mrf.mxu0
      %v751 = vadd.f32 %v289, %v750
      %v752 = vpop.f32.mrf.mxu0
      %v753 = vadd.f32 %v285, %v752
      %v754 = vpop.f32.mrf.mxu0
      %v755 = vadd.f32 %v289, %v754
      %756 = vmatprep.mubr.bf16.mxu0 0
      %757 = vmatmul.mubr.bf16.gmra.mxu0 %v418
      %v758 = vpop.f32.mrf.mxu0
      %v759 = vadd.f32 %v285, %v758
      %v760 = vpop.f32.mrf.mxu0
      %v761 = vadd.f32 %v289, %v760
      %v762 = vpop.f32.mrf.mxu0
      %v763 = vadd.f32 %v285, %v762
      %v764 = vpop.f32.mrf.mxu0
      %v765 = vadd.f32 %v289, %v764
      %766 = vmatprep.mubr.bf16.mxu0 0
      %767 = vmatmul.mubr.bf16.gmra.mxu0 %v421
      %v768 = vpop.f32.mrf.mxu0
      %v769 = vadd.f32 %v285, %v768
      %v770 = vpop.f32.mrf.mxu0
      %v771 = vadd.f32 %v289, %v770
      %v772 = vpop.f32.mrf.mxu0
      %v773 = vadd.f32 %v285, %v772
      %v774 = vpop.f32.mrf.mxu0
      %v775 = vadd.f32 %v289, %v774
      %776 = vmatprep.mubr.bf16.mxu0 0
      %777 = vmatmul.mubr.bf16.gmra.mxu0 %v424
      %v778 = vpop.f32.mrf.mxu0
      %v779 = vadd.f32 %v285, %v778
      %v780 = vpop.f32.mrf.mxu0
      %v781 = vadd.f32 %v289, %v780
      %v782 = vpop.f32.mrf.mxu0
      %v783 = vadd.f32 %v285, %v782
      %v784 = vpop.f32.mrf.mxu0
      %v785 = vadd.f32 %v289, %v784
      %786 = vmatprep.mubr.bf16.mxu0 0
      %787 = vmatmul.mubr.bf16.gmra.mxu0 %v427
      %v788 = vpop.f32.mrf.mxu0
      %v789 = vadd.f32 %v285, %v788
      %v790 = vpop.f32.mrf.mxu0
      %v791 = vadd.f32 %v289, %v790
      %v792 = vpop.f32.mrf.mxu0
      %v793 = vadd.f32 %v285, %v792
      %v794 = vpop.f32.mrf.mxu0
      %v795 = vadd.f32 %v289, %v794
      %796 = vmatprep.mubr.bf16.mxu0 0
      %797 = vmatmul.mubr.bf16.gmra.mxu0 %v430
      %v798 = vpop.f32.mrf.mxu0
      %v799 = vadd.f32 %v285, %v798
      %v800 = vpop.f32.mrf.mxu0
      %v801 = vadd.f32 %v289, %v800
      %v802 = vpop.f32.mrf.mxu0
      %v803 = vadd.f32 %v285, %v802
      %v804 = vpop.f32.mrf.mxu0
      %v805 = vadd.f32 %v289, %v804
      %806 = vmatprep.mubr.bf16.mxu0 0
      %807 = vmatmul.mubr.bf16.gmra.mxu0 %v433
      %v808 = vpop.f32.mrf.mxu0
      %v809 = vadd.f32 %v285, %v808
      %v810 = vpop.f32.mrf.mxu0
      %v811 = vadd.f32 %v289, %v810
      %v812 = vpop.f32.mrf.mxu0
      %v813 = vadd.f32 %v285, %v812
      %v814 = vpop.f32.mrf.mxu0
      %v815 = vadd.f32 %v289, %v814
      %816 = vmatprep.mubr.bf16.mxu0 0
      %817 = vmatmul.mubr.bf16.gmra.mxu0 %v436
      %v818 = vpop.f32.mrf.mxu0
      %v819 = vadd.f32 %v285, %v818
      %v820 = vpop.f32.mrf.mxu0
      %v821 = vadd.f32 %v289, %v820
      %v822 = vpop.f32.mrf.mxu0
      %v823 = vadd.f32 %v285, %v822
      %v824 = vpop.f32.mrf.mxu0
      %v825 = vadd.f32 %v289, %v824
      %826 = vmatprep.mubr.bf16.mxu0 0
      %827 = vmatmul.mubr.bf16.gmra.mxu0 %v439
      %v828 = vpop.f32.mrf.mxu0
      %v829 = vadd.f32 %v285, %v828
      %v830 = vpop.f32.mrf.mxu0
      %v831 = vadd.f32 %v289, %v830
      %v832 = vpop.f32.mrf.mxu0
      %v833 = vadd.f32 %v285, %v832
      %v834 = vpop.f32.mrf.mxu0
      %v835 = vadd.f32 %v289, %v834
      %836 = vmatprep.mubr.bf16.mxu0 0
      %837 = vmatmul.mubr.bf16.gmra.mxu0 %v442
      %v838 = vpop.f32.mrf.mxu0
      %v839 = vadd.f32 %v285, %v838
      %v840 = vpop.f32.mrf.mxu0
      %v841 = vadd.f32 %v289, %v840
      %v842 = vpop.f32.mrf.mxu0
      %v843 = vadd.f32 %v285, %v842
      %v844 = vpop.f32.mrf.mxu0
      %v845 = vadd.f32 %v289, %v844
      %846 = vmatprep.mubr.bf16.mxu0 0
      %847 = vmatmul.mubr.bf16.gmra.mxu0 %v445
      %v848 = vpop.f32.mrf.mxu0
      %v849 = vadd.f32 %v285, %v848
      %v850 = vpop.f32.mrf.mxu0
      %v851 = vadd.f32 %v289, %v850
      %v852 = vpop.f32.mrf.mxu0
      %v853 = vadd.f32 %v285, %v852
      %v854 = vpop.f32.mrf.mxu0
      %v855 = vadd.f32 %v289, %v854
      %856 = vmatprep.mubr.bf16.mxu0 0
      %857 = vmatmul.mubr.bf16.gmra.mxu0 %v448
      %v858 = vpop.f32.mrf.mxu0
      %v859 = vadd.f32 %v285, %v858
      %v860 = vpop.f32.mrf.mxu0
      %v861 = vadd.f32 %v289, %v860
      %v862 = vpop.f32.mrf.mxu0
      %v863 = vadd.f32 %v285, %v862
      %v864 = vpop.f32.mrf.mxu0
      %v865 = vadd.f32 %v289, %v864
      %866 = vdwg.mxu0
      %867 = vmatprep.subr.bf16.mxu0 0
      %868 = vmatpush1.bf16.msra.mxu0 0
      %869 = vmatprep.subr.bf16.mxu0 0
      %870 = vmatpush1.bf16.msra.mxu0 0
      %871 = vmatprep.subr.bf16.mxu0 0
      %872 = vmatpush1.bf16.msra.mxu0 0
      %873 = vmatprep.subr.bf16.mxu0 0
      %874 = vmatpush1.bf16.msra.mxu0 0
      %875 = vmatprep.subr.bf16.mxu0 0
      %876 = vmatpush1.bf16.msra.mxu0 0
      %877 = vmatprep.subr.bf16.mxu0 0
      %878 = vmatpush1.bf16.msra.mxu0 0
      %879 = vmatprep.subr.bf16.mxu0 0
      %880 = vmatpush1.bf16.msra.mxu0 0
      %881 = vmatprep.subr.bf16.mxu0 %v467
      %882 = vmatpush1.bf16.msra.mxu0 %v464
      %883 = vmatprep.subr.bf16.mxu0 0
      %884 = vmatpush2.bf16.msra.mxu0 0
      %885 = vmatprep.subr.bf16.mxu0 0
      %886 = vmatpush2.bf16.msra.mxu0 0
      %887 = vmatprep.subr.bf16.mxu0 0
      %888 = vmatpush2.bf16.msra.mxu0 0
      %889 = vmatprep.subr.bf16.mxu0 0
      %890 = vmatpush2.bf16.msra.mxu0 0
      %891 = vmatprep.subr.bf16.mxu0 0
      %892 = vmatpush2.bf16.msra.mxu0 0
      %893 = vmatprep.subr.bf16.mxu0 0
      %894 = vmatpush2.bf16.msra.mxu0 0
      %895 = vmatprep.subr.bf16.mxu0 0
      %896 = vmatpush2.bf16.msra.mxu0 0
      %897 = vmatprep.subr.bf16.mxu0 0
      %898 = vmatpush2.bf16.msra.mxu0 0
      %899 = vmatprep.mubr.bf16.mxu0 0
      %900 = vmatmul.mubr.bf16.gmra.mxu0 %v403
      %v901 = vpop.f32.mrf.mxu0
      %v902 = vadd.f32 %v293, %v901
      %v903 = vpop.f32.mrf.mxu0
      %v904 = vadd.f32 %v297, %v903
      %v905 = vpop.f32.mrf.mxu0
      %v906 = vadd.f32 %v293, %v905
      %v907 = vpop.f32.mrf.mxu0
      %v908 = vadd.f32 %v297, %v907
      %909 = vmatprep.mubr.bf16.mxu0 0
      %910 = vmatmul.mubr.bf16.gmra.mxu0 %v406
      %v911 = vpop.f32.mrf.mxu0
      %v912 = vadd.f32 %v293, %v911
      %v913 = vpop.f32.mrf.mxu0
      %v914 = vadd.f32 %v297, %v913
      %v915 = vpop.f32.mrf.mxu0
      %v916 = vadd.f32 %v293, %v915
      %v917 = vpop.f32.mrf.mxu0
      %v918 = vadd.f32 %v297, %v917
      %919 = vmatprep.mubr.bf16.mxu0 0
      %920 = vmatmul.mubr.bf16.gmra.mxu0 %v409
      %v921 = vpop.f32.mrf.mxu0
      %v922 = vadd.f32 %v293, %v921
      %v923 = vpop.f32.mrf.mxu0
      %v924 = vadd.f32 %v297, %v923
      %v925 = vpop.f32.mrf.mxu0
      %v926 = vadd.f32 %v293, %v925
      %v927 = vpop.f32.mrf.mxu0
      %v928 = vadd.f32 %v297, %v927
      %929 = vmatprep.mubr.bf16.mxu0 0
      %930 = vmatmul.mubr.bf16.gmra.mxu0 %v412
      %v931 = vpop.f32.mrf.mxu0
      %v932 = vadd.f32 %v293, %v931
      %v933 = vpop.f32.mrf.mxu0
      %v934 = vadd.f32 %v297, %v933
      %v935 = vpop.f32.mrf.mxu0
      %v936 = vadd.f32 %v293, %v935
      %v937 = vpop.f32.mrf.mxu0
      %v938 = vadd.f32 %v297, %v937
      %939 = vmatprep.mubr.bf16.mxu0 0
      %940 = vmatmul.mubr.bf16.gmra.mxu0 %v415
      %v941 = vpop.f32.mrf.mxu0
      %v942 = vadd.f32 %v293, %v941
      %v943 = vpop.f32.mrf.mxu0
      %v944 = vadd.f32 %v297, %v943
      %v945 = vpop.f32.mrf.mxu0
      %v946 = vadd.f32 %v293, %v945
      %v947 = vpop.f32.mrf.mxu0
      %v948 = vadd.f32 %v297, %v947
      %949 = vmatprep.mubr.bf16.mxu0 0
      %950 = vmatmul.mubr.bf16.gmra.mxu0 %v418
      %v951 = vpop.f32.mrf.mxu0
      %v952 = vadd.f32 %v293, %v951
      %v953 = vpop.f32.mrf.mxu0
      %v954 = vadd.f32 %v297, %v953
      %v955 = vpop.f32.mrf.mxu0
      %v956 = vadd.f32 %v293, %v955
      %v957 = vpop.f32.mrf.mxu0
      %v958 = vadd.f32 %v297, %v957
      %959 = vmatprep.mubr.bf16.mxu0 0
      %960 = vmatmul.mubr.bf16.gmra.mxu0 %v421
      %v961 = vpop.f32.mrf.mxu0
      %v962 = vadd.f32 %v293, %v961
      %v963 = vpop.f32.mrf.mxu0
      %v964 = vadd.f32 %v297, %v963
      %v965 = vpop.f32.mrf.mxu0
      %v966 = vadd.f32 %v293, %v965
      %v967 = vpop.f32.mrf.mxu0
      %v968 = vadd.f32 %v297, %v967
      %969 = vmatprep.mubr.bf16.mxu0 0
      %970 = vmatmul.mubr.bf16.gmra.mxu0 %v424
      %v971 = vpop.f32.mrf.mxu0
      %v972 = vadd.f32 %v293, %v971
      %v973 = vpop.f32.mrf.mxu0
      %v974 = vadd.f32 %v297, %v973
      %v975 = vpop.f32.mrf.mxu0
      %v976 = vadd.f32 %v293, %v975
      %v977 = vpop.f32.mrf.mxu0
      %v978 = vadd.f32 %v297, %v977
      %979 = vmatprep.mubr.bf16.mxu0 0
      %980 = vmatmul.mubr.bf16.gmra.mxu0 %v427
      %v981 = vpop.f32.mrf.mxu0
      %v982 = vadd.f32 %v293, %v981
      %v983 = vpop.f32.mrf.mxu0
      %v984 = vadd.f32 %v297, %v983
      %v985 = vpop.f32.mrf.mxu0
      %v986 = vadd.f32 %v293, %v985
      %v987 = vpop.f32.mrf.mxu0
      %v988 = vadd.f32 %v297, %v987
      %989 = vmatprep.mubr.bf16.mxu0 0
      %990 = vmatmul.mubr.bf16.gmra.mxu0 %v430
      %v991 = vpop.f32.mrf.mxu0
      %v992 = vadd.f32 %v293, %v991
      %v993 = vpop.f32.mrf.mxu0
      %v994 = vadd.f32 %v297, %v993
      %v995 = vpop.f32.mrf.mxu0
      %v996 = vadd.f32 %v293, %v995
      %v997 = vpop.f32.mrf.mxu0
      %v998 = vadd.f32 %v297, %v997
      %999 = vmatprep.mubr.bf16.mxu0 0
      %1000 = vmatmul.mubr.bf16.gmra.mxu0 %v433
      %v1001 = vpop.f32.mrf.mxu0
      %v1002 = vadd.f32 %v293, %v1001
      %v1003 = vpop.f32.mrf.mxu0
      %v1004 = vadd.f32 %v297, %v1003
      %v1005 = vpop.f32.mrf.mxu0
      %v1006 = vadd.f32 %v293, %v1005
      %v1007 = vpop.f32.mrf.mxu0
      %v1008 = vadd.f32 %v297, %v1007
      %1009 = vmatprep.mubr.bf16.mxu0 0
      %1010 = vmatmul.mubr.bf16.gmra.mxu0 %v436
      %v1011 = vpop.f32.mrf.mxu0
      %v1012 = vadd.f32 %v293, %v1011
      %v1013 = vpop.f32.mrf.mxu0
      %v1014 = vadd.f32 %v297, %v1013
      %v1015 = vpop.f32.mrf.mxu0
      %v1016 = vadd.f32 %v293, %v1015
      %v1017 = vpop.f32.mrf.mxu0
      %v1018 = vadd.f32 %v297, %v1017
      %1019 = vmatprep.mubr.bf16.mxu0 0
      %1020 = vmatmul.mubr.bf16.gmra.mxu0 %v439
      %v1021 = vpop.f32.mrf.mxu0
      %v1022 = vadd.f32 %v293, %v1021
      %v1023 = vpop.f32.mrf.mxu0
      %v1024 = vadd.f32 %v297, %v1023
      %v1025 = vpop.f32.mrf.mxu0
      %v1026 = vadd.f32 %v293, %v1025
      %v1027 = vpop.f32.mrf.mxu0
      %v1028 = vadd.f32 %v297, %v1027
      %1029 = vmatprep.mubr.bf16.mxu0 0
      %1030 = vmatmul.mubr.bf16.gmra.mxu0 %v442
      %v1031 = vpop.f32.mrf.mxu0
      %v1032 = vadd.f32 %v293, %v1031
      %v1033 = vpop.f32.mrf.mxu0
      %v1034 = vadd.f32 %v297, %v1033
      %v1035 = vpop.f32.mrf.mxu0
      %v1036 = vadd.f32 %v293, %v1035
      %v1037 = vpop.f32.mrf.mxu0
      %v1038 = vadd.f32 %v297, %v1037
      %1039 = vmatprep.mubr.bf16.mxu0 0
      %1040 = vmatmul.mubr.bf16.gmra.mxu0 %v445
      %v1041 = vpop.f32.mrf.mxu0
      %v1042 = vadd.f32 %v293, %v1041
      %v1043 = vpop.f32.mrf.mxu0
      %v1044 = vadd.f32 %v297, %v1043
      %v1045 = vpop.f32.mrf.mxu0
      %v1046 = vadd.f32 %v293, %v1045
      %v1047 = vpop.f32.mrf.mxu0
      %v1048 = vadd.f32 %v297, %v1047
      %1049 = vmatprep.mubr.bf16.mxu0 0
      %1050 = vmatmul.mubr.bf16.gmra.mxu0 %v448
      %v1051 = vpop.f32.mrf.mxu0
      %v1052 = vadd.f32 %v293, %v1051
      %v1053 = vpop.f32.mrf.mxu0
      %v1054 = vadd.f32 %v297, %v1053
      %v1055 = vpop.f32.mrf.mxu0
      %v1056 = vadd.f32 %v293, %v1055
      %v1057 = vpop.f32.mrf.mxu0
      %v1058 = vadd.f32 %v297, %v1057
      %1059 = vdwg.mxu0
      %1060 = vmatprep.subr.bf16.mxu0 0
      %1061 = vmatpush1.bf16.msra.mxu0 0
      %1062 = vmatprep.subr.bf16.mxu0 0
      %1063 = vmatpush1.bf16.msra.mxu0 0
      %1064 = vmatprep.subr.bf16.mxu0 0
      %1065 = vmatpush1.bf16.msra.mxu0 0
      %1066 = vmatprep.subr.bf16.mxu0 0
      %1067 = vmatpush1.bf16.msra.mxu0 0
      %1068 = vmatprep.subr.bf16.mxu0 0
      %1069 = vmatpush1.bf16.msra.mxu0 0
      %1070 = vmatprep.subr.bf16.mxu0 0
      %1071 = vmatpush1.bf16.msra.mxu0 0
      %1072 = vmatprep.subr.bf16.mxu0 0
      %1073 = vmatpush1.bf16.msra.mxu0 0
      %1074 = vmatprep.subr.bf16.mxu0 %v473
      %1075 = vmatpush1.bf16.msra.mxu0 %v470
      %1076 = vmatprep.subr.bf16.mxu0 0
      %1077 = vmatpush2.bf16.msra.mxu0 0
      %1078 = vmatprep.subr.bf16.mxu0 0
      %1079 = vmatpush2.bf16.msra.mxu0 0
      %1080 = vmatprep.subr.bf16.mxu0 0
      %1081 = vmatpush2.bf16.msra.mxu0 0
      %1082 = vmatprep.subr.bf16.mxu0 0
      %1083 = vmatpush2.bf16.msra.mxu0 0
      %1084 = vmatprep.subr.bf16.mxu0 0
      %1085 = vmatpush2.bf16.msra.mxu0 0
      %1086 = vmatprep.subr.bf16.mxu0 0
      %1087 = vmatpush2.bf16.msra.mxu0 0
      %1088 = vmatprep.subr.bf16.mxu0 0
      %1089 = vmatpush2.bf16.msra.mxu0 0
      %1090 = vmatprep.subr.bf16.mxu0 0
      %1091 = vmatpush2.bf16.msra.mxu0 0
      %1092 = vmatprep.mubr.bf16.mxu0 0
      %1093 = vmatmul.mubr.bf16.gmra.mxu0 %v403
      %v1094 = vpop.f32.mrf.mxu0
      %v1095 = vadd.f32 %v301, %v1094
      %v1096 = vpop.f32.mrf.mxu0
      %v1097 = vadd.f32 %v305, %v1096
      %v1098 = vpop.f32.mrf.mxu0
      %v1099 = vadd.f32 %v301, %v1098
      %v1100 = vpop.f32.mrf.mxu0
      %v1101 = vadd.f32 %v305, %v1100
      %1102 = vmatprep.mubr.bf16.mxu0 0
      %1103 = vmatmul.mubr.bf16.gmra.mxu0 %v406
      %v1104 = vpop.f32.mrf.mxu0
      %v1105 = vadd.f32 %v301, %v1104
      %v1106 = vpop.f32.mrf.mxu0
      %v1107 = vadd.f32 %v305, %v1106
      %v1108 = vpop.f32.mrf.mxu0
      %v1109 = vadd.f32 %v301, %v1108
      %v1110 = vpop.f32.mrf.mxu0
      %v1111 = vadd.f32 %v305, %v1110
      %1112 = vmatprep.mubr.bf16.mxu0 0
      %1113 = vmatmul.mubr.bf16.gmra.mxu0 %v409
      %v1114 = vpop.f32.mrf.mxu0
      %v1115 = vadd.f32 %v301, %v1114
      %v1116 = vpop.f32.mrf.mxu0
      %v1117 = vadd.f32 %v305, %v1116
      %v1118 = vpop.f32.mrf.mxu0
      %v1119 = vadd.f32 %v301, %v1118
      %v1120 = vpop.f32.mrf.mxu0
      %v1121 = vadd.f32 %v305, %v1120
      %1122 = vmatprep.mubr.bf16.mxu0 0
      %1123 = vmatmul.mubr.bf16.gmra.mxu0 %v412
      %v1124 = vpop.f32.mrf.mxu0
      %v1125 = vadd.f32 %v301, %v1124
      %v1126 = vpop.f32.mrf.mxu0
      %v1127 = vadd.f32 %v305, %v1126
      %v1128 = vpop.f32.mrf.mxu0
      %v1129 = vadd.f32 %v301, %v1128
      %v1130 = vpop.f32.mrf.mxu0
      %v1131 = vadd.f32 %v305, %v1130
      %1132 = vmatprep.mubr.bf16.mxu0 0
      %1133 = vmatmul.mubr.bf16.gmra.mxu0 %v415
      %v1134 = vpop.f32.mrf.mxu0
      %v1135 = vadd.f32 %v301, %v1134
      %v1136 = vpop.f32.mrf.mxu0
      %v1137 = vadd.f32 %v305, %v1136
      %v1138 = vpop.f32.mrf.mxu0
      %v1139 = vadd.f32 %v301, %v1138
      %v1140 = vpop.f32.mrf.mxu0
      %v1141 = vadd.f32 %v305, %v1140
      %1142 = vmatprep.mubr.bf16.mxu0 0
      %1143 = vmatmul.mubr.bf16.gmra.mxu0 %v418
      %v1144 = vpop.f32.mrf.mxu0
      %v1145 = vadd.f32 %v301, %v1144
      %v1146 = vpop.f32.mrf.mxu0
      %v1147 = vadd.f32 %v305, %v1146
      %v1148 = vpop.f32.mrf.mxu0
      %v1149 = vadd.f32 %v301, %v1148
      %v1150 = vpop.f32.mrf.mxu0
      %v1151 = vadd.f32 %v305, %v1150
      %1152 = vmatprep.mubr.bf16.mxu0 0
      %1153 = vmatmul.mubr.bf16.gmra.mxu0 %v421
      %v1154 = vpop.f32.mrf.mxu0
      %v1155 = vadd.f32 %v301, %v1154
      %v1156 = vpop.f32.mrf.mxu0
      %v1157 = vadd.f32 %v305, %v1156
      %v1158 = vpop.f32.mrf.mxu0
      %v1159 = vadd.f32 %v301, %v1158
      %v1160 = vpop.f32.mrf.mxu0
      %v1161 = vadd.f32 %v305, %v1160
      %1162 = vmatprep.mubr.bf16.mxu0 0
      %1163 = vmatmul.mubr.bf16.gmra.mxu0 %v424
      %v1164 = vpop.f32.mrf.mxu0
      %v1165 = vadd.f32 %v301, %v1164
      %v1166 = vpop.f32.mrf.mxu0
      %v1167 = vadd.f32 %v305, %v1166
      %v1168 = vpop.f32.mrf.mxu0
      %v1169 = vadd.f32 %v301, %v1168
      %v1170 = vpop.f32.mrf.mxu0
      %v1171 = vadd.f32 %v305, %v1170
      %1172 = vmatprep.mubr.bf16.mxu0 0
      %1173 = vmatmul.mubr.bf16.gmra.mxu0 %v427
      %v1174 = vpop.f32.mrf.mxu0
      %v1175 = vadd.f32 %v301, %v1174
      %v1176 = vpop.f32.mrf.mxu0
      %v1177 = vadd.f32 %v305, %v1176
      %v1178 = vpop.f32.mrf.mxu0
      %v1179 = vadd.f32 %v301, %v1178
      %v1180 = vpop.f32.mrf.mxu0
      %v1181 = vadd.f32 %v305, %v1180
      %1182 = vmatprep.mubr.bf16.mxu0 0
      %1183 = vmatmul.mubr.bf16.gmra.mxu0 %v430
      %v1184 = vpop.f32.mrf.mxu0
      %v1185 = vadd.f32 %v301, %v1184
      %v1186 = vpop.f32.mrf.mxu0
      %v1187 = vadd.f32 %v305, %v1186
      %v1188 = vpop.f32.mrf.mxu0
      %v1189 = vadd.f32 %v301, %v1188
      %v1190 = vpop.f32.mrf.mxu0
      %v1191 = vadd.f32 %v305, %v1190
      %1192 = vmatprep.mubr.bf16.mxu0 0
      %1193 = vmatmul.mubr.bf16.gmra.mxu0 %v433
      %v1194 = vpop.f32.mrf.mxu0
      %v1195 = vadd.f32 %v301, %v1194
      %v1196 = vpop.f32.mrf.mxu0
      %v1197 = vadd.f32 %v305, %v1196
      %v1198 = vpop.f32.mrf.mxu0
      %v1199 = vadd.f32 %v301, %v1198
      %v1200 = vpop.f32.mrf.mxu0
      %v1201 = vadd.f32 %v305, %v1200
      %1202 = vmatprep.mubr.bf16.mxu0 0
      %1203 = vmatmul.mubr.bf16.gmra.mxu0 %v436
      %v1204 = vpop.f32.mrf.mxu0
      %v1205 = vadd.f32 %v301, %v1204
      %v1206 = vpop.f32.mrf.mxu0
      %v1207 = vadd.f32 %v305, %v1206
      %v1208 = vpop.f32.mrf.mxu0
      %v1209 = vadd.f32 %v301, %v1208
      %v1210 = vpop.f32.mrf.mxu0
      %v1211 = vadd.f32 %v305, %v1210
      %1212 = vmatprep.mubr.bf16.mxu0 0
      %1213 = vmatmul.mubr.bf16.gmra.mxu0 %v439
      %v1214 = vpop.f32.mrf.mxu0
      %v1215 = vadd.f32 %v301, %v1214
      %v1216 = vpop.f32.mrf.mxu0
      %v1217 = vadd.f32 %v305, %v1216
      %v1218 = vpop.f32.mrf.mxu0
      %v1219 = vadd.f32 %v301, %v1218
      %v1220 = vpop.f32.mrf.mxu0
      %v1221 = vadd.f32 %v305, %v1220
      %1222 = vmatprep.mubr.bf16.mxu0 0
      %1223 = vmatmul.mubr.bf16.gmra.mxu0 %v442
      %v1224 = vpop.f32.mrf.mxu0
      %v1225 = vadd.f32 %v301, %v1224
      %v1226 = vpop.f32.mrf.mxu0
      %v1227 = vadd.f32 %v305, %v1226
      %v1228 = vpop.f32.mrf.mxu0
      %v1229 = vadd.f32 %v301, %v1228
      %v1230 = vpop.f32.mrf.mxu0
      %v1231 = vadd.f32 %v305, %v1230
      %1232 = vmatprep.mubr.bf16.mxu0 0
      %1233 = vmatmul.mubr.bf16.gmra.mxu0 %v445
      %v1234 = vpop.f32.mrf.mxu0
      %v1235 = vadd.f32 %v301, %v1234
      %v1236 = vpop.f32.mrf.mxu0
      %v1237 = vadd.f32 %v305, %v1236
      %v1238 = vpop.f32.mrf.mxu0
      %v1239 = vadd.f32 %v301, %v1238
      %v1240 = vpop.f32.mrf.mxu0
      %v1241 = vadd.f32 %v305, %v1240
      %1242 = vmatprep.mubr.bf16.mxu0 0
      %1243 = vmatmul.mubr.bf16.gmra.mxu0 %v448
      %v1244 = vpop.f32.mrf.mxu0
      %v1245 = vadd.f32 %v301, %v1244
      %v1246 = vpop.f32.mrf.mxu0
      %v1247 = vadd.f32 %v305, %v1246
      %v1248 = vpop.f32.mrf.mxu0
      %v1249 = vadd.f32 %v301, %v1248
      %v1250 = vpop.f32.mrf.mxu0
      %v1251 = vadd.f32 %v305, %v1250
      %1252 = vdwg.mxu0
      %1253 = vmatprep.subr.bf16.mxu0 0
      %1254 = vmatpush1.bf16.msra.mxu0 0
      %1255 = vmatprep.subr.bf16.mxu0 0
      %1256 = vmatpush1.bf16.msra.mxu0 0
      %1257 = vmatprep.subr.bf16.mxu0 0
      %1258 = vmatpush1.bf16.msra.mxu0 0
      %1259 = vmatprep.subr.bf16.mxu0 0
      %1260 = vmatpush1.bf16.msra.mxu0 0
      %1261 = vmatprep.subr.bf16.mxu0 0
      %1262 = vmatpush1.bf16.msra.mxu0 0
      %1263 = vmatprep.subr.bf16.mxu0 0
      %1264 = vmatpush1.bf16.msra.mxu0 0
      %1265 = vmatprep.subr.bf16.mxu0 0
      %1266 = vmatpush1.bf16.msra.mxu0 0
      %1267 = vmatprep.subr.bf16.mxu0 %v479
      %1268 = vmatpush1.bf16.msra.mxu0 %v476
      %1269 = vmatprep.subr.bf16.mxu0 0
      %1270 = vmatpush2.bf16.msra.mxu0 0
      %1271 = vmatprep.subr.bf16.mxu0 0
      %1272 = vmatpush2.bf16.msra.mxu0 0
      %1273 = vmatprep.subr.bf16.mxu0 0
      %1274 = vmatpush2.bf16.msra.mxu0 0
      %1275 = vmatprep.subr.bf16.mxu0 0
      %1276 = vmatpush2.bf16.msra.mxu0 0
      %1277 = vmatprep.subr.bf16.mxu0 0
      %1278 = vmatpush2.bf16.msra.mxu0 0
      %1279 = vmatprep.subr.bf16.mxu0 0
      %1280 = vmatpush2.bf16.msra.mxu0 0
      %1281 = vmatprep.subr.bf16.mxu0 0
      %1282 = vmatpush2.bf16.msra.mxu0 0
      %1283 = vmatprep.subr.bf16.mxu0 0
      %1284 = vmatpush2.bf16.msra.mxu0 0
      %1285 = vmatprep.mubr.bf16.mxu0 0
      %1286 = vmatmul.mubr.bf16.gmra.mxu0 %v403
      %v1287 = vpop.f32.mrf.mxu0
      %v1288 = vadd.f32 %v309, %v1287
      %v1289 = vpop.f32.mrf.mxu0
      %v1290 = vadd.f32 %v313, %v1289
      %v1291 = vpop.f32.mrf.mxu0
      %v1292 = vadd.f32 %v309, %v1291
      %v1293 = vpop.f32.mrf.mxu0
      %v1294 = vadd.f32 %v313, %v1293
      %1295 = vmatprep.mubr.bf16.mxu0 0
      %1296 = vmatmul.mubr.bf16.gmra.mxu0 %v406
      %v1297 = vpop.f32.mrf.mxu0
      %v1298 = vadd.f32 %v309, %v1297
      %v1299 = vpop.f32.mrf.mxu0
      %v1300 = vadd.f32 %v313, %v1299
      %v1301 = vpop.f32.mrf.mxu0
      %v1302 = vadd.f32 %v309, %v1301
      %v1303 = vpop.f32.mrf.mxu0
      %v1304 = vadd.f32 %v313, %v1303
      %1305 = vmatprep.mubr.bf16.mxu0 0
      %1306 = vmatmul.mubr.bf16.gmra.mxu0 %v409
      %v1307 = vpop.f32.mrf.mxu0
      %v1308 = vadd.f32 %v309, %v1307
      %v1309 = vpop.f32.mrf.mxu0
      %v1310 = vadd.f32 %v313, %v1309
      %v1311 = vpop.f32.mrf.mxu0
      %v1312 = vadd.f32 %v309, %v1311
      %v1313 = vpop.f32.mrf.mxu0
      %v1314 = vadd.f32 %v313, %v1313
      %1315 = vmatprep.mubr.bf16.mxu0 0
      %1316 = vmatmul.mubr.bf16.gmra.mxu0 %v412
      %v1317 = vpop.f32.mrf.mxu0
      %v1318 = vadd.f32 %v309, %v1317
      %v1319 = vpop.f32.mrf.mxu0
      %v1320 = vadd.f32 %v313, %v1319
      %v1321 = vpop.f32.mrf.mxu0
      %v1322 = vadd.f32 %v309, %v1321
      %v1323 = vpop.f32.mrf.mxu0
      %v1324 = vadd.f32 %v313, %v1323
      %1325 = vmatprep.mubr.bf16.mxu0 0
      %1326 = vmatmul.mubr.bf16.gmra.mxu0 %v415
      %v1327 = vpop.f32.mrf.mxu0
      %v1328 = vadd.f32 %v309, %v1327
      %v1329 = vpop.f32.mrf.mxu0
      %v1330 = vadd.f32 %v313, %v1329
      %v1331 = vpop.f32.mrf.mxu0
      %v1332 = vadd.f32 %v309, %v1331
      %v1333 = vpop.f32.mrf.mxu0
      %v1334 = vadd.f32 %v313, %v1333
      %1335 = vmatprep.mubr.bf16.mxu0 0
      %1336 = vmatmul.mubr.bf16.gmra.mxu0 %v418
      %v1337 = vpop.f32.mrf.mxu0
      %v1338 = vadd.f32 %v309, %v1337
      %v1339 = vpop.f32.mrf.mxu0
      %v1340 = vadd.f32 %v313, %v1339
      %v1341 = vpop.f32.mrf.mxu0
      %v1342 = vadd.f32 %v309, %v1341
      %v1343 = vpop.f32.mrf.mxu0
      %v1344 = vadd.f32 %v313, %v1343
      %1345 = vmatprep.mubr.bf16.mxu0 0
      %1346 = vmatmul.mubr.bf16.gmra.mxu0 %v421
      %v1347 = vpop.f32.mrf.mxu0
      %v1348 = vadd.f32 %v309, %v1347
      %v1349 = vpop.f32.mrf.mxu0
      %v1350 = vadd.f32 %v313, %v1349
      %v1351 = vpop.f32.mrf.mxu0
      %v1352 = vadd.f32 %v309, %v1351
      %v1353 = vpop.f32.mrf.mxu0
      %v1354 = vadd.f32 %v313, %v1353
      %1355 = vmatprep.mubr.bf16.mxu0 0
      %1356 = vmatmul.mubr.bf16.gmra.mxu0 %v424
      %v1357 = vpop.f32.mrf.mxu0
      %v1358 = vadd.f32 %v309, %v1357
      %v1359 = vpop.f32.mrf.mxu0
      %v1360 = vadd.f32 %v313, %v1359
      %v1361 = vpop.f32.mrf.mxu0
      %v1362 = vadd.f32 %v309, %v1361
      %v1363 = vpop.f32.mrf.mxu0
      %v1364 = vadd.f32 %v313, %v1363
      %1365 = vmatprep.mubr.bf16.mxu0 0
      %1366 = vmatmul.mubr.bf16.gmra.mxu0 %v427
      %v1367 = vpop.f32.mrf.mxu0
      %v1368 = vadd.f32 %v309, %v1367
      %v1369 = vpop.f32.mrf.mxu0
      %v1370 = vadd.f32 %v313, %v1369
      %v1371 = vpop.f32.mrf.mxu0
      %v1372 = vadd.f32 %v309, %v1371
      %v1373 = vpop.f32.mrf.mxu0
      %v1374 = vadd.f32 %v313, %v1373
      %1375 = vmatprep.mubr.bf16.mxu0 0
      %1376 = vmatmul.mubr.bf16.gmra.mxu0 %v430
      %v1377 = vpop.f32.mrf.mxu0
      %v1378 = vadd.f32 %v309, %v1377
      %v1379 = vpop.f32.mrf.mxu0
      %v1380 = vadd.f32 %v313, %v1379
      %v1381 = vpop.f32.mrf.mxu0
      %v1382 = vadd.f32 %v309, %v1381
      %v1383 = vpop.f32.mrf.mxu0
      %v1384 = vadd.f32 %v313, %v1383
      %1385 = vmatprep.mubr.bf16.mxu0 0
      %1386 = vmatmul.mubr.bf16.gmra.mxu0 %v433
      %v1387 = vpop.f32.mrf.mxu0
      %v1388 = vadd.f32 %v309, %v1387
      %v1389 = vpop.f32.mrf.mxu0
      %v1390 = vadd.f32 %v313, %v1389
      %v1391 = vpop.f32.mrf.mxu0
      %v1392 = vadd.f32 %v309, %v1391
      %v1393 = vpop.f32.mrf.mxu0
      %v1394 = vadd.f32 %v313, %v1393
      %1395 = vmatprep.mubr.bf16.mxu0 0
      %1396 = vmatmul.mubr.bf16.gmra.mxu0 %v436
      %v1397 = vpop.f32.mrf.mxu0
      %v1398 = vadd.f32 %v309, %v1397
      %v1399 = vpop.f32.mrf.mxu0
      %v1400 = vadd.f32 %v313, %v1399
      %v1401 = vpop.f32.mrf.mxu0
      %v1402 = vadd.f32 %v309, %v1401
      %v1403 = vpop.f32.mrf.mxu0
      %v1404 = vadd.f32 %v313, %v1403
      %1405 = vmatprep.mubr.bf16.mxu0 0
      %1406 = vmatmul.mubr.bf16.gmra.mxu0 %v439
      %v1407 = vpop.f32.mrf.mxu0
      %v1408 = vadd.f32 %v309, %v1407
      %v1409 = vpop.f32.mrf.mxu0
      %v1410 = vadd.f32 %v313, %v1409
      %v1411 = vpop.f32.mrf.mxu0
      %v1412 = vadd.f32 %v309, %v1411
      %v1413 = vpop.f32.mrf.mxu0
      %v1414 = vadd.f32 %v313, %v1413
      %1415 = vmatprep.mubr.bf16.mxu0 0
      %1416 = vmatmul.mubr.bf16.gmra.mxu0 %v442
      %v1417 = vpop.f32.mrf.mxu0
      %v1418 = vadd.f32 %v309, %v1417
      %v1419 = vpop.f32.mrf.mxu0
      %v1420 = vadd.f32 %v313, %v1419
      %v1421 = vpop.f32.mrf.mxu0
      %v1422 = vadd.f32 %v309, %v1421
      %v1423 = vpop.f32.mrf.mxu0
      %v1424 = vadd.f32 %v313, %v1423
      %1425 = vmatprep.mubr.bf16.mxu0 0
      %1426 = vmatmul.mubr.bf16.gmra.mxu0 %v445
      %v1427 = vpop.f32.mrf.mxu0
      %v1428 = vadd.f32 %v309, %v1427
      %v1429 = vpop.f32.mrf.mxu0
      %v1430 = vadd.f32 %v313, %v1429
      %v1431 = vpop.f32.mrf.mxu0
      %v1432 = vadd.f32 %v309, %v1431
      %v1433 = vpop.f32.mrf.mxu0
      %v1434 = vadd.f32 %v313, %v1433
      %1435 = vmatprep.mubr.bf16.mxu0 0
      %1436 = vmatmul.mubr.bf16.gmra.mxu0 %v448
      %v1437 = vpop.f32.mrf.mxu0
      %v1438 = vadd.f32 %v309, %v1437
      %v1439 = vpop.f32.mrf.mxu0
      %v1440 = vadd.f32 %v313, %v1439
      %v1441 = vpop.f32.mrf.mxu0
      %v1442 = vadd.f32 %v309, %v1441
      %v1443 = vpop.f32.mrf.mxu0
      %v1444 = vadd.f32 %v313, %v1443
      %1445 = vdwg.mxu0
      %v1446 = vpack.c.bf16 %v520, %v516
      %v1447 = vpack.c.bf16 %v522, %v518
      %v1448 = vpack.c.bf16 %v713, %v709
      %v1449 = vpack.c.bf16 %v715, %v711
      %v1450 = vpack.c.bf16 %v906, %v902
      %v1451 = vpack.c.bf16 %v908, %v904
      %v1452 = vpack.c.bf16 %v1099, %v1095
      %v1453 = vpack.c.bf16 %v1101, %v1097
      %v1454 = vpack.c.bf16 %v1292, %v1288
      %v1455 = vpack.c.bf16 %v1294, %v1290
      %v1456 = vpack.c.bf16 %v530, %v526
      %v1457 = vpack.c.bf16 %v532, %v528
      %v1458 = vpack.c.bf16 %v723, %v719
      %v1459 = vpack.c.bf16 %v725, %v721
      %v1460 = vpack.c.bf16 %v916, %v912
      %v1461 = vpack.c.bf16 %v918, %v914
      %v1462 = vpack.c.bf16 %v1109, %v1105
      %v1463 = vpack.c.bf16 %v1111, %v1107
      %v1464 = vpack.c.bf16 %v1302, %v1298
      %v1465 = vpack.c.bf16 %v1304, %v1300
      %v1466 = vpack.c.bf16 %v540, %v536
      %v1467 = vpack.c.bf16 %v542, %v538
      %v1468 = vpack.c.bf16 %v733, %v729
      %v1469 = vpack.c.bf16 %v735, %v731
      %v1470 = vpack.c.bf16 %v926, %v922
      %v1471 = vpack.c.bf16 %v928, %v924
      %v1472 = vpack.c.bf16 %v1119, %v1115
      %v1473 = vpack.c.bf16 %v1121, %v1117
      %v1474 = vpack.c.bf16 %v1312, %v1308
      %v1475 = vpack.c.bf16 %v1314, %v1310
      %v1476 = vpack.c.bf16 %v550, %v546
      %v1477 = vpack.c.bf16 %v552, %v548
      %v1478 = vpack.c.bf16 %v743, %v739
      %v1479 = vpack.c.bf16 %v745, %v741
      %v1480 = vpack.c.bf16 %v936, %v932
      %v1481 = vpack.c.bf16 %v938, %v934
      %v1482 = vpack.c.bf16 %v1129, %v1125
      %v1483 = vpack.c.bf16 %v1131, %v1127
      %v1484 = vpack.c.bf16 %v1322, %v1318
      %v1485 = vpack.c.bf16 %v1324, %v1320
      %v1486 = vpack.c.bf16 %v560, %v556
      %v1487 = vpack.c.bf16 %v562, %v558
      %v1488 = vpack.c.bf16 %v753, %v749
      %v1489 = vpack.c.bf16 %v755, %v751
      %v1490 = vpack.c.bf16 %v946, %v942
      %v1491 = vpack.c.bf16 %v948, %v944
      %v1492 = vpack.c.bf16 %v1139, %v1135
      %v1493 = vpack.c.bf16 %v1141, %v1137
      %v1494 = vpack.c.bf16 %v1332, %v1328
      %v1495 = vpack.c.bf16 %v1334, %v1330
      %v1496 = vpack.c.bf16 %v570, %v566
      %v1497 = vpack.c.bf16 %v572, %v568
      %v1498 = vpack.c.bf16 %v763, %v759
      %v1499 = vpack.c.bf16 %v765, %v761
      %v1500 = vpack.c.bf16 %v956, %v952
      %v1501 = vpack.c.bf16 %v958, %v954
      %v1502 = vpack.c.bf16 %v1149, %v1145
      %v1503 = vpack.c.bf16 %v1151, %v1147
      %v1504 = vpack.c.bf16 %v1342, %v1338
      %v1505 = vpack.c.bf16 %v1344, %v1340
      %v1506 = vpack.c.bf16 %v580, %v576
      %v1507 = vpack.c.bf16 %v582, %v578
      %v1508 = vpack.c.bf16 %v773, %v769
      %v1509 = vpack.c.bf16 %v775, %v771
      %v1510 = vpack.c.bf16 %v966, %v962
      %v1511 = vpack.c.bf16 %v968, %v964
      %v1512 = vpack.c.bf16 %v1159, %v1155
      %v1513 = vpack.c.bf16 %v1161, %v1157
      %v1514 = vpack.c.bf16 %v1352, %v1348
      %v1515 = vpack.c.bf16 %v1354, %v1350
      %v1516 = vpack.c.bf16 %v590, %v586
      %v1517 = vpack.c.bf16 %v592, %v588
      %v1518 = vpack.c.bf16 %v783, %v779
      %v1519 = vpack.c.bf16 %v785, %v781
      %v1520 = vpack.c.bf16 %v976, %v972
      %v1521 = vpack.c.bf16 %v978, %v974
      %v1522 = vpack.c.bf16 %v1169, %v1165
      %v1523 = vpack.c.bf16 %v1171, %v1167
      %v1524 = vpack.c.bf16 %v1362, %v1358
      %v1525 = vpack.c.bf16 %v1364, %v1360
      %v1526 = vpack.c.bf16 %v600, %v596
      %v1527 = vpack.c.bf16 %v602, %v598
      %v1528 = vpack.c.bf16 %v793, %v789
      %v1529 = vpack.c.bf16 %v795, %v791
      %v1530 = vpack.c.bf16 %v986, %v982
      %v1531 = vpack.c.bf16 %v988, %v984
      %v1532 = vpack.c.bf16 %v1179, %v1175
      %v1533 = vpack.c.bf16 %v1181, %v1177
      %v1534 = vpack.c.bf16 %v1372, %v1368
      %v1535 = vpack.c.bf16 %v1374, %v1370
      %v1536 = vpack.c.bf16 %v610, %v606
      %v1537 = vpack.c.bf16 %v612, %v608
      %v1538 = vpack.c.bf16 %v803, %v799
      %v1539 = vpack.c.bf16 %v805, %v801
      %v1540 = vpack.c.bf16 %v996, %v992
      %v1541 = vpack.c.bf16 %v998, %v994
      %v1542 = vpack.c.bf16 %v1189, %v1185
      %v1543 = vpack.c.bf16 %v1191, %v1187
      %v1544 = vpack.c.bf16 %v1382, %v1378
      %v1545 = vpack.c.bf16 %v1384, %v1380
      %v1546 = vpack.c.bf16 %v620, %v616
      %v1547 = vpack.c.bf16 %v622, %v618
      %v1548 = vpack.c.bf16 %v813, %v809
      %v1549 = vpack.c.bf16 %v815, %v811
      %v1550 = vpack.c.bf16 %v1006, %v1002
      %v1551 = vpack.c.bf16 %v1008, %v1004
      %v1552 = vpack.c.bf16 %v1199, %v1195
      %v1553 = vpack.c.bf16 %v1201, %v1197
      %v1554 = vpack.c.bf16 %v1392, %v1388
      %v1555 = vpack.c.bf16 %v1394, %v1390
      %v1556 = vpack.c.bf16 %v630, %v626
      %v1557 = vpack.c.bf16 %v632, %v628
      %v1558 = vpack.c.bf16 %v823, %v819
      %v1559 = vpack.c.bf16 %v825, %v821
      %v1560 = vpack.c.bf16 %v1016, %v1012
      %v1561 = vpack.c.bf16 %v1018, %v1014
      %v1562 = vpack.c.bf16 %v1209, %v1205
      %v1563 = vpack.c.bf16 %v1211, %v1207
      %v1564 = vpack.c.bf16 %v1402, %v1398
      %v1565 = vpack.c.bf16 %v1404, %v1400
      %v1566 = vpack.c.bf16 %v640, %v636
      %v1567 = vpack.c.bf16 %v642, %v638
      %v1568 = vpack.c.bf16 %v833, %v829
      %v1569 = vpack.c.bf16 %v835, %v831
      %v1570 = vpack.c.bf16 %v1026, %v1022
      %v1571 = vpack.c.bf16 %v1028, %v1024
      %v1572 = vpack.c.bf16 %v1219, %v1215
      %v1573 = vpack.c.bf16 %v1221, %v1217
      %v1574 = vpack.c.bf16 %v1412, %v1408
      %v1575 = vpack.c.bf16 %v1414, %v1410
      %v1576 = vpack.c.bf16 %v650, %v646
      %v1577 = vpack.c.bf16 %v652, %v648
      %v1578 = vpack.c.bf16 %v843, %v839
      %v1579 = vpack.c.bf16 %v845, %v841
      %v1580 = vpack.c.bf16 %v1036, %v1032
      %v1581 = vpack.c.bf16 %v1038, %v1034
      %v1582 = vpack.c.bf16 %v1229, %v1225
      %v1583 = vpack.c.bf16 %v1231, %v1227
      %v1584 = vpack.c.bf16 %v1422, %v1418
      %v1585 = vpack.c.bf16 %v1424, %v1420
      %v1586 = vpack.c.bf16 %v660, %v656
      %v1587 = vpack.c.bf16 %v662, %v658
      %v1588 = vpack.c.bf16 %v853, %v849
      %v1589 = vpack.c.bf16 %v855, %v851
      %v1590 = vpack.c.bf16 %v1046, %v1042
      %v1591 = vpack.c.bf16 %v1048, %v1044
      %v1592 = vpack.c.bf16 %v1239, %v1235
      %v1593 = vpack.c.bf16 %v1241, %v1237
      %v1594 = vpack.c.bf16 %v1432, %v1428
      %v1595 = vpack.c.bf16 %v1434, %v1430
      %v1596 = vpack.c.bf16 %v670, %v666
      %v1597 = vpack.c.bf16 %v672, %v668
      %v1598 = vpack.c.bf16 %v863, %v859
      %v1599 = vpack.c.bf16 %v865, %v861
      %v1600 = vpack.c.bf16 %v1056, %v1052
      %v1601 = vpack.c.bf16 %v1058, %v1054
      %v1602 = vpack.c.bf16 %v1249, %v1245
      %v1603 = vpack.c.bf16 %v1251, %v1247
      %v1604 = vpack.c.bf16 %v1442, %v1438
      %v1605 = vpack.c.bf16 %v1444, %v1440
      %v1606 = vxor.u32 %v1446, 2147516416
      %v1607 = vxor.u32 %v1447, 2147516416
      %v1608 = vxor.u32 %v1448, 2147516416
      %v1609 = vxor.u32 %v1449, 2147516416
      %v1610 = vxor.u32 %v1450, 2147516416
      %v1611 = vxor.u32 %v1451, 2147516416
      %v1612 = vxor.u32 %v1452, 2147516416
      %v1613 = vxor.u32 %v1453, 2147516416
      %v1614 = vxor.u32 %v1454, 2147516416
      %v1615 = vxor.u32 %v1455, 2147516416
      %v1616 = vxor.u32 %v1456, 2147516416
      %v1617 = vxor.u32 %v1457, 2147516416
      %v1618 = vxor.u32 %v1458, 2147516416
      %v1619 = vxor.u32 %v1459, 2147516416
      %v1620 = vxor.u32 %v1460, 2147516416
      %v1621 = vxor.u32 %v1461, 2147516416
      %v1622 = vxor.u32 %v1462, 2147516416
      %v1623 = vxor.u32 %v1463, 2147516416
      %v1624 = vxor.u32 %v1464, 2147516416
      %v1625 = vxor.u32 %v1465, 2147516416
      %v1626 = vxor.u32 %v1466, 2147516416
      %v1627 = vxor.u32 %v1467, 2147516416
      %v1628 = vxor.u32 %v1468, 2147516416
      %v1629 = vxor.u32 %v1469, 2147516416
      %v1630 = vxor.u32 %v1470, 2147516416
      %v1631 = vxor.u32 %v1471, 2147516416
      %v1632 = vxor.u32 %v1472, 2147516416
      %v1633 = vxor.u32 %v1473, 2147516416
      %v1634 = vxor.u32 %v1474, 2147516416
      %v1635 = vxor.u32 %v1475, 2147516416
      %v1636 = vxor.u32 %v1476, 2147516416
      %v1637 = vxor.u32 %v1477, 2147516416
      %v1638 = vxor.u32 %v1478, 2147516416
      %v1639 = vxor.u32 %v1479, 2147516416
      %v1640 = vxor.u32 %v1480, 2147516416
      %v1641 = vxor.u32 %v1481, 2147516416
      %v1642 = vxor.u32 %v1482, 2147516416
      %v1643 = vxor.u32 %v1483, 2147516416
      %v1644 = vxor.u32 %v1484, 2147516416
      %v1645 = vxor.u32 %v1485, 2147516416
      %v1646 = vxor.u32 %v1486, 2147516416
      %v1647 = vxor.u32 %v1487, 2147516416
      %v1648 = vxor.u32 %v1488, 2147516416
      %v1649 = vxor.u32 %v1489, 2147516416
      %v1650 = vxor.u32 %v1490, 2147516416
      %v1651 = vxor.u32 %v1491, 2147516416
      %v1652 = vxor.u32 %v1492, 2147516416
      %v1653 = vxor.u32 %v1493, 2147516416
      %v1654 = vxor.u32 %v1494, 2147516416
      %v1655 = vxor.u32 %v1495, 2147516416
      %v1656 = vxor.u32 %v1496, 2147516416
      %v1657 = vxor.u32 %v1497, 2147516416
      %v1658 = vxor.u32 %v1498, 2147516416
      %v1659 = vxor.u32 %v1499, 2147516416
      %v1660 = vxor.u32 %v1500, 2147516416
      %v1661 = vxor.u32 %v1501, 2147516416
      %v1662 = vxor.u32 %v1502, 2147516416
      %v1663 = vxor.u32 %v1503, 2147516416
      %v1664 = vxor.u32 %v1504, 2147516416
      %v1665 = vxor.u32 %v1505, 2147516416
      %v1666 = vxor.u32 %v1506, 2147516416
      %v1667 = vxor.u32 %v1507, 2147516416
      %v1668 = vxor.u32 %v1508, 2147516416
      %v1669 = vxor.u32 %v1509, 2147516416
      %v1670 = vxor.u32 %v1510, 2147516416
      %v1671 = vxor.u32 %v1511, 2147516416
      %v1672 = vxor.u32 %v1512, 2147516416
      %v1673 = vxor.u32 %v1513, 2147516416
      %v1674 = vxor.u32 %v1514, 2147516416
      %v1675 = vxor.u32 %v1515, 2147516416
      %v1676 = vxor.u32 %v1516, 2147516416
      %v1677 = vxor.u32 %v1517, 2147516416
      %v1678 = vxor.u32 %v1518, 2147516416
      %v1679 = vxor.u32 %v1519, 2147516416
      %v1680 = vxor.u32 %v1520, 2147516416
      %v1681 = vxor.u32 %v1521, 2147516416
      %v1682 = vxor.u32 %v1522, 2147516416
      %v1683 = vxor.u32 %v1523, 2147516416
      %v1684 = vxor.u32 %v1524, 2147516416
      %v1685 = vxor.u32 %v1525, 2147516416
      %v1686 = vxor.u32 %v1526, 2147516416
      %v1687 = vxor.u32 %v1527, 2147516416
      %v1688 = vxor.u32 %v1528, 2147516416
      %v1689 = vxor.u32 %v1529, 2147516416
      %v1690 = vxor.u32 %v1530, 2147516416
      %v1691 = vxor.u32 %v1531, 2147516416
      %v1692 = vxor.u32 %v1532, 2147516416
      %v1693 = vxor.u32 %v1533, 2147516416
      %v1694 = vxor.u32 %v1534, 2147516416
      %v1695 = vxor.u32 %v1535, 2147516416
      %v1696 = vxor.u32 %v1536, 2147516416
      %v1697 = vxor.u32 %v1537, 2147516416
      %v1698 = vxor.u32 %v1538, 2147516416
      %v1699 = vxor.u32 %v1539, 2147516416
      %v1700 = vxor.u32 %v1540, 2147516416
      %v1701 = vxor.u32 %v1541, 2147516416
      %v1702 = vxor.u32 %v1542, 2147516416
      %v1703 = vxor.u32 %v1543, 2147516416
      %v1704 = vxor.u32 %v1544, 2147516416
      %v1705 = vxor.u32 %v1545, 2147516416
      %v1706 = vxor.u32 %v1546, 2147516416
      %v1707 = vxor.u32 %v1547, 2147516416
      %v1708 = vxor.u32 %v1548, 2147516416
      %v1709 = vxor.u32 %v1549, 2147516416
      %v1710 = vxor.u32 %v1550, 2147516416
      %v1711 = vxor.u32 %v1551, 2147516416
      %v1712 = vxor.u32 %v1552, 2147516416
      %v1713 = vxor.u32 %v1553, 2147516416
      %v1714 = vxor.u32 %v1554, 2147516416
      %v1715 = vxor.u32 %v1555, 2147516416
      %v1716 = vxor.u32 %v1556, 2147516416
      %v1717 = vxor.u32 %v1557, 2147516416
      %v1718 = vxor.u32 %v1558, 2147516416
      %v1719 = vxor.u32 %v1559, 2147516416
      %v1720 = vxor.u32 %v1560, 2147516416
      %v1721 = vxor.u32 %v1561, 2147516416
      %v1722 = vxor.u32 %v1562, 2147516416
      %v1723 = vxor.u32 %v1563, 2147516416
      %v1724 = vxor.u32 %v1564, 2147516416
      %v1725 = vxor.u32 %v1565, 2147516416
      %v1726 = vxor.u32 %v1566, 2147516416
      %v1727 = vxor.u32 %v1567, 2147516416
      %v1728 = vxor.u32 %v1568, 2147516416
      %v1729 = vxor.u32 %v1569, 2147516416
      %v1730 = vxor.u32 %v1570, 2147516416
      %v1731 = vxor.u32 %v1571, 2147516416
      %v1732 = vxor.u32 %v1572, 2147516416
      %v1733 = vxor.u32 %v1573, 2147516416
      %v1734 = vxor.u32 %v1574, 2147516416
      %v1735 = vxor.u32 %v1575, 2147516416
      %v1736 = vxor.u32 %v1576, 2147516416
      %v1737 = vxor.u32 %v1577, 2147516416
      %v1738 = vxor.u32 %v1578, 2147516416
      %v1739 = vxor.u32 %v1579, 2147516416
      %v1740 = vxor.u32 %v1580, 2147516416
      %v1741 = vxor.u32 %v1581, 2147516416
      %v1742 = vxor.u32 %v1582, 2147516416
      %v1743 = vxor.u32 %v1583, 2147516416
      %v1744 = vxor.u32 %v1584, 2147516416
      %v1745 = vxor.u32 %v1585, 2147516416
      %v1746 = vxor.u32 %v1586, 2147516416
      %v1747 = vxor.u32 %v1587, 2147516416
      %v1748 = vxor.u32 %v1588, 2147516416
      %v1749 = vxor.u32 %v1589, 2147516416
      %v1750 = vxor.u32 %v1590, 2147516416
      %v1751 = vxor.u32 %v1591, 2147516416
      %v1752 = vxor.u32 %v1592, 2147516416
      %v1753 = vxor.u32 %v1593, 2147516416
      %v1754 = vxor.u32 %v1594, 2147516416
      %v1755 = vxor.u32 %v1595, 2147516416
      %v1756 = vxor.u32 %v1596, 2147516416
      %v1757 = vxor.u32 %v1597, 2147516416
      %v1758 = vxor.u32 %v1598, 2147516416
      %v1759 = vxor.u32 %v1599, 2147516416
      %v1760 = vxor.u32 %v1600, 2147516416
      %v1761 = vxor.u32 %v1601, 2147516416
      %v1762 = vxor.u32 %v1602, 2147516416
      %v1763 = vxor.u32 %v1603, 2147516416
      %v1764 = vxor.u32 %v1604, 2147516416
      %v1765 = vxor.u32 %v1605, 2147516416
      %v1767 = vmul.bf16 %v1606, 1069105081
      %v1768 = vpow.bf16.pop %v1767
      %v1770 = vmul.bf16 %v1607, 1069105081
      %v1771 = vpow.bf16.pop %v1770
      %v1773 = vmul.bf16 %v1608, 1069105081
      %v1774 = vpow.bf16.pop %v1773
      %v1776 = vmul.bf16 %v1609, 1069105081
      %v1777 = vpow.bf16.pop %v1776
      %v1779 = vmul.bf16 %v1610, 1069105081
      %v1780 = vpow.bf16.pop %v1779
      %v1782 = vmul.bf16 %v1611, 1069105081
      %v1783 = vpow.bf16.pop %v1782
      %v1785 = vmul.bf16 %v1612, 1069105081
      %v1786 = vpow.bf16.pop %v1785
      %v1788 = vmul.bf16 %v1613, 1069105081
      %v1789 = vpow.bf16.pop %v1788
      %v1791 = vmul.bf16 %v1614, 1069105081
      %v1792 = vpow.bf16.pop %v1791
      %v1794 = vmul.bf16 %v1615, 1069105081
      %v1795 = vpow.bf16.pop %v1794
      %v1797 = vmul.bf16 %v1616, 1069105081
      %v1798 = vpow.bf16.pop %v1797
      %v1800 = vmul.bf16 %v1617, 1069105081
      %v1801 = vpow.bf16.pop %v1800
      %v1803 = vmul.bf16 %v1618, 1069105081
      %v1804 = vpow.bf16.pop %v1803
      %v1806 = vmul.bf16 %v1619, 1069105081
      %v1807 = vpow.bf16.pop %v1806
      %v1809 = vmul.bf16 %v1620, 1069105081
      %v1810 = vpow.bf16.pop %v1809
      %v1812 = vmul.bf16 %v1621, 1069105081
      %v1813 = vpow.bf16.pop %v1812
      %v1815 = vmul.bf16 %v1622, 1069105081
      %v1816 = vpow.bf16.pop %v1815
      %v1818 = vmul.bf16 %v1623, 1069105081
      %v1819 = vpow.bf16.pop %v1818
      %v1821 = vmul.bf16 %v1624, 1069105081
      %v1822 = vpow.bf16.pop %v1821
      %v1824 = vmul.bf16 %v1625, 1069105081
      %v1825 = vpow.bf16.pop %v1824
      %v1827 = vmul.bf16 %v1626, 1069105081
      %v1828 = vpow.bf16.pop %v1827
      %v1830 = vmul.bf16 %v1627, 1069105081
      %v1831 = vpow.bf16.pop %v1830
      %v1833 = vmul.bf16 %v1628, 1069105081
      %v1834 = vpow.bf16.pop %v1833
      %v1836 = vmul.bf16 %v1629, 1069105081
      %v1837 = vpow.bf16.pop %v1836
      %v1839 = vmul.bf16 %v1630, 1069105081
      %v1840 = vpow.bf16.pop %v1839
      %v1842 = vmul.bf16 %v1631, 1069105081
      %v1843 = vpow.bf16.pop %v1842
      %v1845 = vmul.bf16 %v1632, 1069105081
      %v1846 = vpow.bf16.pop %v1845
      %v1848 = vmul.bf16 %v1633, 1069105081
      %v1849 = vpow.bf16.pop %v1848
      %v1851 = vmul.bf16 %v1634, 1069105081
      %v1852 = vpow.bf16.pop %v1851
      %v1854 = vmul.bf16 %v1635, 1069105081
      %v1855 = vpow.bf16.pop %v1854
      %v1857 = vmul.bf16 %v1636, 1069105081
      %v1858 = vpow.bf16.pop %v1857
      %v1860 = vmul.bf16 %v1637, 1069105081
      %v1861 = vpow.bf16.pop %v1860
      %v1863 = vmul.bf16 %v1638, 1069105081
      %v1864 = vpow.bf16.pop %v1863
      %v1866 = vmul.bf16 %v1639, 1069105081
      %v1867 = vpow.bf16.pop %v1866
      %v1869 = vmul.bf16 %v1640, 1069105081
      %v1870 = vpow.bf16.pop %v1869
      %v1872 = vmul.bf16 %v1641, 1069105081
      %v1873 = vpow.bf16.pop %v1872
      %v1875 = vmul.bf16 %v1642, 1069105081
      %v1876 = vpow.bf16.pop %v1875
      %v1878 = vmul.bf16 %v1643, 1069105081
      %v1879 = vpow.bf16.pop %v1878
      %v1881 = vmul.bf16 %v1644, 1069105081
      %v1882 = vpow.bf16.pop %v1881
      %v1884 = vmul.bf16 %v1645, 1069105081
      %v1885 = vpow.bf16.pop %v1884
      %v1887 = vmul.bf16 %v1646, 1069105081
      %v1888 = vpow.bf16.pop %v1887
      %v1890 = vmul.bf16 %v1647, 1069105081
      %v1891 = vpow.bf16.pop %v1890
      %v1893 = vmul.bf16 %v1648, 1069105081
      %v1894 = vpow.bf16.pop %v1893
      %v1896 = vmul.bf16 %v1649, 1069105081
      %v1897 = vpow.bf16.pop %v1896
      %v1899 = vmul.bf16 %v1650, 1069105081
      %v1900 = vpow.bf16.pop %v1899
      %v1902 = vmul.bf16 %v1651, 1069105081
      %v1903 = vpow.bf16.pop %v1902
      %v1905 = vmul.bf16 %v1652, 1069105081
      %v1906 = vpow.bf16.pop %v1905
      %v1908 = vmul.bf16 %v1653, 1069105081
      %v1909 = vpow.bf16.pop %v1908
      %v1911 = vmul.bf16 %v1654, 1069105081
      %v1912 = vpow.bf16.pop %v1911
      %v1914 = vmul.bf16 %v1655, 1069105081
      %v1915 = vpow.bf16.pop %v1914
      %v1917 = vmul.bf16 %v1656, 1069105081
      %v1918 = vpow.bf16.pop %v1917
      %v1920 = vmul.bf16 %v1657, 1069105081
      %v1921 = vpow.bf16.pop %v1920
      %v1923 = vmul.bf16 %v1658, 1069105081
      %v1924 = vpow.bf16.pop %v1923
      %v1926 = vmul.bf16 %v1659, 1069105081
      %v1927 = vpow.bf16.pop %v1926
      %v1929 = vmul.bf16 %v1660, 1069105081
      %v1930 = vpow.bf16.pop %v1929
      %v1932 = vmul.bf16 %v1661, 1069105081
      %v1933 = vpow.bf16.pop %v1932
      %v1935 = vmul.bf16 %v1662, 1069105081
      %v1936 = vpow.bf16.pop %v1935
      %v1938 = vmul.bf16 %v1663, 1069105081
      %v1939 = vpow.bf16.pop %v1938
      %v1941 = vmul.bf16 %v1664, 1069105081
      %v1942 = vpow.bf16.pop %v1941
      %v1944 = vmul.bf16 %v1665, 1069105081
      %v1945 = vpow.bf16.pop %v1944
      %v1947 = vmul.bf16 %v1666, 1069105081
      %v1948 = vpow.bf16.pop %v1947
      %v1950 = vmul.bf16 %v1667, 1069105081
      %v1951 = vpow.bf16.pop %v1950
      %v1953 = vmul.bf16 %v1668, 1069105081
      %v1954 = vpow.bf16.pop %v1953
      %v1956 = vmul.bf16 %v1669, 1069105081
      %v1957 = vpow.bf16.pop %v1956
      %v1959 = vmul.bf16 %v1670, 1069105081
      %v1960 = vpow.bf16.pop %v1959
      %v1962 = vmul.bf16 %v1671, 1069105081
      %v1963 = vpow.bf16.pop %v1962
      %v1965 = vmul.bf16 %v1672, 1069105081
      %v1966 = vpow.bf16.pop %v1965
      %v1968 = vmul.bf16 %v1673, 1069105081
      %v1969 = vpow.bf16.pop %v1968
      %v1971 = vmul.bf16 %v1674, 1069105081
      %v1972 = vpow.bf16.pop %v1971
      %v1974 = vmul.bf16 %v1675, 1069105081
      %v1975 = vpow.bf16.pop %v1974
      %v1977 = vmul.bf16 %v1676, 1069105081
      %v1978 = vpow.bf16.pop %v1977
      %v1980 = vmul.bf16 %v1677, 1069105081
      %v1981 = vpow.bf16.pop %v1980
      %v1983 = vmul.bf16 %v1678, 1069105081
      %v1984 = vpow.bf16.pop %v1983
      %v1986 = vmul.bf16 %v1679, 1069105081
      %v1987 = vpow.bf16.pop %v1986
      %v1989 = vmul.bf16 %v1680, 1069105081
      %v1990 = vpow.bf16.pop %v1989
      %v1992 = vmul.bf16 %v1681, 1069105081
      %v1993 = vpow.bf16.pop %v1992
      %v1995 = vmul.bf16 %v1682, 1069105081
      %v1996 = vpow.bf16.pop %v1995
      %v1998 = vmul.bf16 %v1683, 1069105081
      %v1999 = vpow.bf16.pop %v1998
      %v2001 = vmul.bf16 %v1684, 1069105081
      %v2002 = vpow.bf16.pop %v2001
      %v2004 = vmul.bf16 %v1685, 1069105081
      %v2005 = vpow.bf16.pop %v2004
      %v2007 = vmul.bf16 %v1686, 1069105081
      %v2008 = vpow.bf16.pop %v2007
      %v2010 = vmul.bf16 %v1687, 1069105081
      %v2011 = vpow.bf16.pop %v2010
      %v2013 = vmul.bf16 %v1688, 1069105081
      %v2014 = vpow.bf16.pop %v2013
      %v2016 = vmul.bf16 %v1689, 1069105081
      %v2017 = vpow.bf16.pop %v2016
      %v2019 = vmul.bf16 %v1690, 1069105081
      %v2020 = vpow.bf16.pop %v2019
      %v2022 = vmul.bf16 %v1691, 1069105081
      %v2023 = vpow.bf16.pop %v2022
      %v2025 = vmul.bf16 %v1692, 1069105081
      %v2026 = vpow.bf16.pop %v2025
      %v2028 = vmul.bf16 %v1693, 1069105081
      %v2029 = vpow.bf16.pop %v2028
      %v2031 = vmul.bf16 %v1694, 1069105081
      %v2032 = vpow.bf16.pop %v2031
      %v2034 = vmul.bf16 %v1695, 1069105081
      %v2035 = vpow.bf16.pop %v2034
      %v2037 = vmul.bf16 %v1696, 1069105081
      %v2038 = vpow.bf16.pop %v2037
      %v2040 = vmul.bf16 %v1697, 1069105081
      %v2041 = vpow.bf16.pop %v2040
      %v2043 = vmul.bf16 %v1698, 1069105081
      %v2044 = vpow.bf16.pop %v2043
      %v2046 = vmul.bf16 %v1699, 1069105081
      %v2047 = vpow.bf16.pop %v2046
      %v2049 = vmul.bf16 %v1700, 1069105081
      %v2050 = vpow.bf16.pop %v2049
      %v2052 = vmul.bf16 %v1701, 1069105081
      %v2053 = vpow.bf16.pop %v2052
      %v2055 = vmul.bf16 %v1702, 1069105081
      %v2056 = vpow.bf16.pop %v2055
      %v2058 = vmul.bf16 %v1703, 1069105081
      %v2059 = vpow.bf16.pop %v2058
      %v2061 = vmul.bf16 %v1704, 1069105081
      %v2062 = vpow.bf16.pop %v2061
      %v2064 = vmul.bf16 %v1705, 1069105081
      %v2065 = vpow.bf16.pop %v2064
      %v2067 = vmul.bf16 %v1706, 1069105081
      %v2068 = vpow.bf16.pop %v2067
      %v2070 = vmul.bf16 %v1707, 1069105081
      %v2071 = vpow.bf16.pop %v2070
      %v2073 = vmul.bf16 %v1708, 1069105081
      %v2074 = vpow.bf16.pop %v2073
      %v2076 = vmul.bf16 %v1709, 1069105081
      %v2077 = vpow.bf16.pop %v2076
      %v2079 = vmul.bf16 %v1710, 1069105081
      %v2080 = vpow.bf16.pop %v2079
      %v2082 = vmul.bf16 %v1711, 1069105081
      %v2083 = vpow.bf16.pop %v2082
      %v2085 = vmul.bf16 %v1712, 1069105081
      %v2086 = vpow.bf16.pop %v2085
      %v2088 = vmul.bf16 %v1713, 1069105081
      %v2089 = vpow.bf16.pop %v2088
      %v2091 = vmul.bf16 %v1714, 1069105081
      %v2092 = vpow.bf16.pop %v2091
      %v2094 = vmul.bf16 %v1715, 1069105081
      %v2095 = vpow.bf16.pop %v2094
      %v2097 = vmul.bf16 %v1716, 1069105081
      %v2098 = vpow.bf16.pop %v2097
      %v2100 = vmul.bf16 %v1717, 1069105081
      %v2101 = vpow.bf16.pop %v2100
      %v2103 = vmul.bf16 %v1718, 1069105081
      %v2104 = vpow.bf16.pop %v2103
      %v2106 = vmul.bf16 %v1719, 1069105081
      %v2107 = vpow.bf16.pop %v2106
      %v2109 = vmul.bf16 %v1720, 1069105081
      %v2110 = vpow.bf16.pop %v2109
      %v2112 = vmul.bf16 %v1721, 1069105081
      %v2113 = vpow.bf16.pop %v2112
      %v2115 = vmul.bf16 %v1722, 1069105081
      %v2116 = vpow.bf16.pop %v2115
      %v2118 = vmul.bf16 %v1723, 1069105081
      %v2119 = vpow.bf16.pop %v2118
      %v2121 = vmul.bf16 %v1724, 1069105081
      %v2122 = vpow.bf16.pop %v2121
      %v2124 = vmul.bf16 %v1725, 1069105081
      %v2125 = vpow.bf16.pop %v2124
      %v2127 = vmul.bf16 %v1726, 1069105081
      %v2128 = vpow.bf16.pop %v2127
      %v2130 = vmul.bf16 %v1727, 1069105081
      %v2131 = vpow.bf16.pop %v2130
      %v2133 = vmul.bf16 %v1728, 1069105081
      %v2134 = vpow.bf16.pop %v2133
      %v2136 = vmul.bf16 %v1729, 1069105081
      %v2137 = vpow.bf16.pop %v2136
      %v2139 = vmul.bf16 %v1730, 1069105081
      %v2140 = vpow.bf16.pop %v2139
      %v2142 = vmul.bf16 %v1731, 1069105081
      %v2143 = vpow.bf16.pop %v2142
      %v2145 = vmul.bf16 %v1732, 1069105081
      %v2146 = vpow.bf16.pop %v2145
      %v2148 = vmul.bf16 %v1733, 1069105081
      %v2149 = vpow.bf16.pop %v2148
      %v2151 = vmul.bf16 %v1734, 1069105081
      %v2152 = vpow.bf16.pop %v2151
      %v2154 = vmul.bf16 %v1735, 1069105081
      %v2155 = vpow.bf16.pop %v2154
      %v2157 = vmul.bf16 %v1736, 1069105081
      %v2158 = vpow.bf16.pop %v2157
      %v2160 = vmul.bf16 %v1737, 1069105081
      %v2161 = vpow.bf16.pop %v2160
      %v2163 = vmul.bf16 %v1738, 1069105081
      %v2164 = vpow.bf16.pop %v2163
      %v2166 = vmul.bf16 %v1739, 1069105081
      %v2167 = vpow.bf16.pop %v2166
      %v2169 = vmul.bf16 %v1740, 1069105081
      %v2170 = vpow.bf16.pop %v2169
      %v2172 = vmul.bf16 %v1741, 1069105081
      %v2173 = vpow.bf16.pop %v2172
      %v2175 = vmul.bf16 %v1742, 1069105081
      %v2176 = vpow.bf16.pop %v2175
      %v2178 = vmul.bf16 %v1743, 1069105081
      %v2179 = vpow.bf16.pop %v2178
      %v2181 = vmul.bf16 %v1744, 1069105081
      %v2182 = vpow.bf16.pop %v2181
      %v2184 = vmul.bf16 %v1745, 1069105081
      %v2185 = vpow.bf16.pop %v2184
      %v2187 = vmul.bf16 %v1746, 1069105081
      %v2188 = vpow.bf16.pop %v2187
      %v2190 = vmul.bf16 %v1747, 1069105081
      %v2191 = vpow.bf16.pop %v2190
      %v2193 = vmul.bf16 %v1748, 1069105081
      %v2194 = vpow.bf16.pop %v2193
      %v2196 = vmul.bf16 %v1749, 1069105081
      %v2197 = vpow.bf16.pop %v2196
      %v2199 = vmul.bf16 %v1750, 1069105081
      %v2200 = vpow.bf16.pop %v2199
      %v2202 = vmul.bf16 %v1751, 1069105081
      %v2203 = vpow.bf16.pop %v2202
      %v2205 = vmul.bf16 %v1752, 1069105081
      %v2206 = vpow.bf16.pop %v2205
      %v2208 = vmul.bf16 %v1753, 1069105081
      %v2209 = vpow.bf16.pop %v2208
      %v2211 = vmul.bf16 %v1754, 1069105081
      %v2212 = vpow.bf16.pop %v2211
      %v2214 = vmul.bf16 %v1755, 1069105081
      %v2215 = vpow.bf16.pop %v2214
      %v2217 = vmul.bf16 %v1756, 1069105081
      %v2218 = vpow.bf16.pop %v2217
      %v2220 = vmul.bf16 %v1757, 1069105081
      %v2221 = vpow.bf16.pop %v2220
      %v2223 = vmul.bf16 %v1758, 1069105081
      %v2224 = vpow.bf16.pop %v2223
      %v2226 = vmul.bf16 %v1759, 1069105081
      %v2227 = vpow.bf16.pop %v2226
      %v2229 = vmul.bf16 %v1760, 1069105081
      %v2230 = vpow.bf16.pop %v2229
      %v2232 = vmul.bf16 %v1761, 1069105081
      %v2233 = vpow.bf16.pop %v2232
      %v2235 = vmul.bf16 %v1762, 1069105081
      %v2236 = vpow.bf16.pop %v2235
      %v2238 = vmul.bf16 %v1763, 1069105081
      %v2239 = vpow.bf16.pop %v2238
      %v2241 = vmul.bf16 %v1764, 1069105081
      %v2242 = vpow.bf16.pop %v2241
      %v2244 = vmul.bf16 %v1765, 1069105081
      %v2245 = vpow.bf16.pop %v2244
      %v2246 = vadd.bf16 %v1768, 1065369472
      %v2247 = vadd.bf16 %v1771, 1065369472
      %v2248 = vadd.bf16 %v1774, 1065369472
      %v2249 = vadd.bf16 %v1777, 1065369472
      %v2250 = vadd.bf16 %v1780, 1065369472
      %v2251 = vadd.bf16 %v1783, 1065369472
      %v2252 = vadd.bf16 %v1786, 1065369472
      %v2253 = vadd.bf16 %v1789, 1065369472
      %v2254 = vadd.bf16 %v1792, 1065369472
      %v2255 = vadd.bf16 %v1795, 1065369472
      %v2256 = vadd.bf16 %v1798, 1065369472
      %v2257 = vadd.bf16 %v1801, 1065369472
      %v2258 = vadd.bf16 %v1804, 1065369472
      %v2259 = vadd.bf16 %v1807, 1065369472
      %v2260 = vadd.bf16 %v1810, 1065369472
      %v2261 = vadd.bf16 %v1813, 1065369472
      %v2262 = vadd.bf16 %v1816, 1065369472
      %v2263 = vadd.bf16 %v1819, 1065369472
      %v2264 = vadd.bf16 %v1822, 1065369472
      %v2265 = vadd.bf16 %v1825, 1065369472
      %v2266 = vadd.bf16 %v1828, 1065369472
      %v2267 = vadd.bf16 %v1831, 1065369472
      %v2268 = vadd.bf16 %v1834, 1065369472
      %v2269 = vadd.bf16 %v1837, 1065369472
      %v2270 = vadd.bf16 %v1840, 1065369472
      %v2271 = vadd.bf16 %v1843, 1065369472
      %v2272 = vadd.bf16 %v1846, 1065369472
      %v2273 = vadd.bf16 %v1849, 1065369472
      %v2274 = vadd.bf16 %v1852, 1065369472
      %v2275 = vadd.bf16 %v1855, 1065369472
      %v2276 = vadd.bf16 %v1858, 1065369472
      %v2277 = vadd.bf16 %v1861, 1065369472
      %v2278 = vadd.bf16 %v1864, 1065369472
      %v2279 = vadd.bf16 %v1867, 1065369472
      %v2280 = vadd.bf16 %v1870, 1065369472
      %v2281 = vadd.bf16 %v1873, 1065369472
      %v2282 = vadd.bf16 %v1876, 1065369472
      %v2283 = vadd.bf16 %v1879, 1065369472
      %v2284 = vadd.bf16 %v1882, 1065369472
      %v2285 = vadd.bf16 %v1885, 1065369472
      %v2286 = vadd.bf16 %v1888, 1065369472
      %v2287 = vadd.bf16 %v1891, 1065369472
      %v2288 = vadd.bf16 %v1894, 1065369472
      %v2289 = vadd.bf16 %v1897, 1065369472
      %v2290 = vadd.bf16 %v1900, 1065369472
      %v2291 = vadd.bf16 %v1903, 1065369472
      %v2292 = vadd.bf16 %v1906, 1065369472
      %v2293 = vadd.bf16 %v1909, 1065369472
      %v2294 = vadd.bf16 %v1912, 1065369472
      %v2295 = vadd.bf16 %v1915, 1065369472
      %v2296 = vadd.bf16 %v1918, 1065369472
      %v2297 = vadd.bf16 %v1921, 1065369472
      %v2298 = vadd.bf16 %v1924, 1065369472
      %v2299 = vadd.bf16 %v1927, 1065369472
      %v2300 = vadd.bf16 %v1930, 1065369472
      %v2301 = vadd.bf16 %v1933, 1065369472
      %v2302 = vadd.bf16 %v1936, 1065369472
      %v2303 = vadd.bf16 %v1939, 1065369472
      %v2304 = vadd.bf16 %v1942, 1065369472
      %v2305 = vadd.bf16 %v1945, 1065369472
      %v2306 = vadd.bf16 %v1948, 1065369472
      %v2307 = vadd.bf16 %v1951, 1065369472
      %v2308 = vadd.bf16 %v1954, 1065369472
      %v2309 = vadd.bf16 %v1957, 1065369472
      %v2310 = vadd.bf16 %v1960, 1065369472
      %v2311 = vadd.bf16 %v1963, 1065369472
      %v2312 = vadd.bf16 %v1966, 1065369472
      %v2313 = vadd.bf16 %v1969, 1065369472
      %v2314 = vadd.bf16 %v1972, 1065369472
      %v2315 = vadd.bf16 %v1975, 1065369472
      %v2316 = vadd.bf16 %v1978, 1065369472
      %v2317 = vadd.bf16 %v1981, 1065369472
      %v2318 = vadd.bf16 %v1984, 1065369472
      %v2319 = vadd.bf16 %v1987, 1065369472
      %v2320 = vadd.bf16 %v1990, 1065369472
      %v2321 = vadd.bf16 %v1993, 1065369472
      %v2322 = vadd.bf16 %v1996, 1065369472
      %v2323 = vadd.bf16 %v1999, 1065369472
      %v2324 = vadd.bf16 %v2002, 1065369472
      %v2325 = vadd.bf16 %v2005, 1065369472
      %v2326 = vadd.bf16 %v2008, 1065369472
      %v2327 = vadd.bf16 %v2011, 1065369472
      %v2328 = vadd.bf16 %v2014, 1065369472
      %v2329 = vadd.bf16 %v2017, 1065369472
      %v2330 = vadd.bf16 %v2020, 1065369472
      %v2331 = vadd.bf16 %v2023, 1065369472
      %v2332 = vadd.bf16 %v2026, 1065369472
      %v2333 = vadd.bf16 %v2029, 1065369472
      %v2334 = vadd.bf16 %v2032, 1065369472
      %v2335 = vadd.bf16 %v2035, 1065369472
      %v2336 = vadd.bf16 %v2038, 1065369472
      %v2337 = vadd.bf16 %v2041, 1065369472
      %v2338 = vadd.bf16 %v2044, 1065369472
      %v2339 = vadd.bf16 %v2047, 1065369472
      %v2340 = vadd.bf16 %v2050, 1065369472
      %v2341 = vadd.bf16 %v2053, 1065369472
      %v2342 = vadd.bf16 %v2056, 1065369472
      %v2343 = vadd.bf16 %v2059, 1065369472
      %v2344 = vadd.bf16 %v2062, 1065369472
      %v2345 = vadd.bf16 %v2065, 1065369472
      %v2346 = vadd.bf16 %v2068, 1065369472
      %v2347 = vadd.bf16 %v2071, 1065369472
      %v2348 = vadd.bf16 %v2074, 1065369472
      %v2349 = vadd.bf16 %v2077, 1065369472
      %v2350 = vadd.bf16 %v2080, 1065369472
      %v2351 = vadd.bf16 %v2083, 1065369472
      %v2352 = vadd.bf16 %v2086, 1065369472
      %v2353 = vadd.bf16 %v2089, 1065369472
      %v2354 = vadd.bf16 %v2092, 1065369472
      %v2355 = vadd.bf16 %v2095, 1065369472
      %v2356 = vadd.bf16 %v2098, 1065369472
      %v2357 = vadd.bf16 %v2101, 1065369472
      %v2358 = vadd.bf16 %v2104, 1065369472
      %v2359 = vadd.bf16 %v2107, 1065369472
      %v2360 = vadd.bf16 %v2110, 1065369472
      %v2361 = vadd.bf16 %v2113, 1065369472
      %v2362 = vadd.bf16 %v2116, 1065369472
      %v2363 = vadd.bf16 %v2119, 1065369472
      %v2364 = vadd.bf16 %v2122, 1065369472
      %v2365 = vadd.bf16 %v2125, 1065369472
      %v2366 = vadd.bf16 %v2128, 1065369472
      %v2367 = vadd.bf16 %v2131, 1065369472
      %v2368 = vadd.bf16 %v2134, 1065369472
      %v2369 = vadd.bf16 %v2137, 1065369472
      %v2370 = vadd.bf16 %v2140, 1065369472
      %v2371 = vadd.bf16 %v2143, 1065369472
      %v2372 = vadd.bf16 %v2146, 1065369472
      %v2373 = vadd.bf16 %v2149, 1065369472
      %v2374 = vadd.bf16 %v2152, 1065369472
      %v2375 = vadd.bf16 %v2155, 1065369472
      %v2376 = vadd.bf16 %v2158, 1065369472
      %v2377 = vadd.bf16 %v2161, 1065369472
      %v2378 = vadd.bf16 %v2164, 1065369472
      %v2379 = vadd.bf16 %v2167, 1065369472
      %v2380 = vadd.bf16 %v2170, 1065369472
      %v2381 = vadd.bf16 %v2173, 1065369472
      %v2382 = vadd.bf16 %v2176, 1065369472
      %v2383 = vadd.bf16 %v2179, 1065369472
      %v2384 = vadd.bf16 %v2182, 1065369472
      %v2385 = vadd.bf16 %v2185, 1065369472
      %v2386 = vadd.bf16 %v2188, 1065369472
      %v2387 = vadd.bf16 %v2191, 1065369472
      %v2388 = vadd.bf16 %v2194, 1065369472
      %v2389 = vadd.bf16 %v2197, 1065369472
      %v2390 = vadd.bf16 %v2200, 1065369472
      %v2391 = vadd.bf16 %v2203, 1065369472
      %v2392 = vadd.bf16 %v2206, 1065369472
      %v2393 = vadd.bf16 %v2209, 1065369472
      %v2394 = vadd.bf16 %v2212, 1065369472
      %v2395 = vadd.bf16 %v2215, 1065369472
      %v2396 = vadd.bf16 %v2218, 1065369472
      %v2397 = vadd.bf16 %v2221, 1065369472
      %v2398 = vadd.bf16 %v2224, 1065369472
      %v2399 = vadd.bf16 %v2227, 1065369472
      %v2400 = vadd.bf16 %v2230, 1065369472
      %v2401 = vadd.bf16 %v2233, 1065369472
      %v2402 = vadd.bf16 %v2236, 1065369472
      %v2403 = vadd.bf16 %v2239, 1065369472
      %v2404 = vadd.bf16 %v2242, 1065369472
      %v2405 = vadd.bf16 %v2245, 1065369472
      %v2406 = vrcp.bf16.pop %v2246
      %v2407 = vmul.bf16 1065369472, %v2406
      %v2408 = vrcp.bf16.pop %v2247
      %v2409 = vmul.bf16 1065369472, %v2408
      %v2410 = vrcp.bf16.pop %v2248
      %v2411 = vmul.bf16 1065369472, %v2410
      %v2412 = vrcp.bf16.pop %v2249
      %v2413 = vmul.bf16 1065369472, %v2412
      %v2414 = vrcp.bf16.pop %v2250
      %v2415 = vmul.bf16 1065369472, %v2414
      %v2416 = vrcp.bf16.pop %v2251
      %v2417 = vmul.bf16 1065369472, %v2416
      %v2418 = vrcp.bf16.pop %v2252
      %v2419 = vmul.bf16 1065369472, %v2418
      %v2420 = vrcp.bf16.pop %v2253
      %v2421 = vmul.bf16 1065369472, %v2420
      %v2422 = vrcp.bf16.pop %v2254
      %v2423 = vmul.bf16 1065369472, %v2422
      %v2424 = vrcp.bf16.pop %v2255
      %v2425 = vmul.bf16 1065369472, %v2424
      %v2426 = vrcp.bf16.pop %v2256
      %v2427 = vmul.bf16 1065369472, %v2426
      %v2428 = vrcp.bf16.pop %v2257
      %v2429 = vmul.bf16 1065369472, %v2428
      %v2430 = vrcp.bf16.pop %v2258
      %v2431 = vmul.bf16 1065369472, %v2430
      %v2432 = vrcp.bf16.pop %v2259
      %v2433 = vmul.bf16 1065369472, %v2432
      %v2434 = vrcp.bf16.pop %v2260
      %v2435 = vmul.bf16 1065369472, %v2434
      %v2436 = vrcp.bf16.pop %v2261
      %v2437 = vmul.bf16 1065369472, %v2436
      %v2438 = vrcp.bf16.pop %v2262
      %v2439 = vmul.bf16 1065369472, %v2438
      %v2440 = vrcp.bf16.pop %v2263
      %v2441 = vmul.bf16 1065369472, %v2440
      %v2442 = vrcp.bf16.pop %v2264
      %v2443 = vmul.bf16 1065369472, %v2442
      %v2444 = vrcp.bf16.pop %v2265
      %v2445 = vmul.bf16 1065369472, %v2444
      %v2446 = vrcp.bf16.pop %v2266
      %v2447 = vmul.bf16 1065369472, %v2446
      %v2448 = vrcp.bf16.pop %v2267
      %v2449 = vmul.bf16 1065369472, %v2448
      %v2450 = vrcp.bf16.pop %v2268
      %v2451 = vmul.bf16 1065369472, %v2450
      %v2452 = vrcp.bf16.pop %v2269
      %v2453 = vmul.bf16 1065369472, %v2452
      %v2454 = vrcp.bf16.pop %v2270
      %v2455 = vmul.bf16 1065369472, %v2454
      %v2456 = vrcp.bf16.pop %v2271
      %v2457 = vmul.bf16 1065369472, %v2456
      %v2458 = vrcp.bf16.pop %v2272
      %v2459 = vmul.bf16 1065369472, %v2458
      %v2460 = vrcp.bf16.pop %v2273
      %v2461 = vmul.bf16 1065369472, %v2460
      %v2462 = vrcp.bf16.pop %v2274
      %v2463 = vmul.bf16 1065369472, %v2462
      %v2464 = vrcp.bf16.pop %v2275
      %v2465 = vmul.bf16 1065369472, %v2464
      %v2466 = vrcp.bf16.pop %v2276
      %v2467 = vmul.bf16 1065369472, %v2466
      %v2468 = vrcp.bf16.pop %v2277
      %v2469 = vmul.bf16 1065369472, %v2468
      %v2470 = vrcp.bf16.pop %v2278
      %v2471 = vmul.bf16 1065369472, %v2470
      %v2472 = vrcp.bf16.pop %v2279
      %v2473 = vmul.bf16 1065369472, %v2472
      %v2474 = vrcp.bf16.pop %v2280
      %v2475 = vmul.bf16 1065369472, %v2474
      %v2476 = vrcp.bf16.pop %v2281
      %v2477 = vmul.bf16 1065369472, %v2476
      %v2478 = vrcp.bf16.pop %v2282
      %v2479 = vmul.bf16 1065369472, %v2478
      %v2480 = vrcp.bf16.pop %v2283
      %v2481 = vmul.bf16 1065369472, %v2480
      %v2482 = vrcp.bf16.pop %v2284
      %v2483 = vmul.bf16 1065369472, %v2482
      %v2484 = vrcp.bf16.pop %v2285
      %v2485 = vmul.bf16 1065369472, %v2484
      %v2486 = vrcp.bf16.pop %v2286
      %v2487 = vmul.bf16 1065369472, %v2486
      %v2488 = vrcp.bf16.pop %v2287
      %v2489 = vmul.bf16 1065369472, %v2488
      %v2490 = vrcp.bf16.pop %v2288
      %v2491 = vmul.bf16 1065369472, %v2490
      %v2492 = vrcp.bf16.pop %v2289
      %v2493 = vmul.bf16 1065369472, %v2492
      %v2494 = vrcp.bf16.pop %v2290
      %v2495 = vmul.bf16 1065369472, %v2494
      %v2496 = vrcp.bf16.pop %v2291
      %v2497 = vmul.bf16 1065369472, %v2496
      %v2498 = vrcp.bf16.pop %v2292
      %v2499 = vmul.bf16 1065369472, %v2498
      %v2500 = vrcp.bf16.pop %v2293
      %v2501 = vmul.bf16 1065369472, %v2500
      %v2502 = vrcp.bf16.pop %v2294
      %v2503 = vmul.bf16 1065369472, %v2502
      %v2504 = vrcp.bf16.pop %v2295
      %v2505 = vmul.bf16 1065369472, %v2504
      %v2506 = vrcp.bf16.pop %v2296
      %v2507 = vmul.bf16 1065369472, %v2506
      %v2508 = vrcp.bf16.pop %v2297
      %v2509 = vmul.bf16 1065369472, %v2508
      %v2510 = vrcp.bf16.pop %v2298
      %v2511 = vmul.bf16 1065369472, %v2510
      %v2512 = vrcp.bf16.pop %v2299
      %v2513 = vmul.bf16 1065369472, %v2512
      %v2514 = vrcp.bf16.pop %v2300
      %v2515 = vmul.bf16 1065369472, %v2514
      %v2516 = vrcp.bf16.pop %v2301
      %v2517 = vmul.bf16 1065369472, %v2516
      %v2518 = vrcp.bf16.pop %v2302
      %v2519 = vmul.bf16 1065369472, %v2518
      %v2520 = vrcp.bf16.pop %v2303
      %v2521 = vmul.bf16 1065369472, %v2520
      %v2522 = vrcp.bf16.pop %v2304
      %v2523 = vmul.bf16 1065369472, %v2522
      %v2524 = vrcp.bf16.pop %v2305
      %v2525 = vmul.bf16 1065369472, %v2524
      %v2526 = vrcp.bf16.pop %v2306
      %v2527 = vmul.bf16 1065369472, %v2526
      %v2528 = vrcp.bf16.pop %v2307
      %v2529 = vmul.bf16 1065369472, %v2528
      %v2530 = vrcp.bf16.pop %v2308
      %v2531 = vmul.bf16 1065369472, %v2530
      %v2532 = vrcp.bf16.pop %v2309
      %v2533 = vmul.bf16 1065369472, %v2532
      %v2534 = vrcp.bf16.pop %v2310
      %v2535 = vmul.bf16 1065369472, %v2534
      %v2536 = vrcp.bf16.pop %v2311
      %v2537 = vmul.bf16 1065369472, %v2536
      %v2538 = vrcp.bf16.pop %v2312
      %v2539 = vmul.bf16 1065369472, %v2538
      %v2540 = vrcp.bf16.pop %v2313
      %v2541 = vmul.bf16 1065369472, %v2540
      %v2542 = vrcp.bf16.pop %v2314
      %v2543 = vmul.bf16 1065369472, %v2542
      %v2544 = vrcp.bf16.pop %v2315
      %v2545 = vmul.bf16 1065369472, %v2544
      %v2546 = vrcp.bf16.pop %v2316
      %v2547 = vmul.bf16 1065369472, %v2546
      %v2548 = vrcp.bf16.pop %v2317
      %v2549 = vmul.bf16 1065369472, %v2548
      %v2550 = vrcp.bf16.pop %v2318
      %v2551 = vmul.bf16 1065369472, %v2550
      %v2552 = vrcp.bf16.pop %v2319
      %v2553 = vmul.bf16 1065369472, %v2552
      %v2554 = vrcp.bf16.pop %v2320
      %v2555 = vmul.bf16 1065369472, %v2554
      %v2556 = vrcp.bf16.pop %v2321
      %v2557 = vmul.bf16 1065369472, %v2556
      %v2558 = vrcp.bf16.pop %v2322
      %v2559 = vmul.bf16 1065369472, %v2558
      %v2560 = vrcp.bf16.pop %v2323
      %v2561 = vmul.bf16 1065369472, %v2560
      %v2562 = vrcp.bf16.pop %v2324
      %v2563 = vmul.bf16 1065369472, %v2562
      %v2564 = vrcp.bf16.pop %v2325
      %v2565 = vmul.bf16 1065369472, %v2564
      %v2566 = vrcp.bf16.pop %v2326
      %v2567 = vmul.bf16 1065369472, %v2566
      %v2568 = vrcp.bf16.pop %v2327
      %v2569 = vmul.bf16 1065369472, %v2568
      %v2570 = vrcp.bf16.pop %v2328
      %v2571 = vmul.bf16 1065369472, %v2570
      %v2572 = vrcp.bf16.pop %v2329
      %v2573 = vmul.bf16 1065369472, %v2572
      %v2574 = vrcp.bf16.pop %v2330
      %v2575 = vmul.bf16 1065369472, %v2574
      %v2576 = vrcp.bf16.pop %v2331
      %v2577 = vmul.bf16 1065369472, %v2576
      %v2578 = vrcp.bf16.pop %v2332
      %v2579 = vmul.bf16 1065369472, %v2578
      %v2580 = vrcp.bf16.pop %v2333
      %v2581 = vmul.bf16 1065369472, %v2580
      %v2582 = vrcp.bf16.pop %v2334
      %v2583 = vmul.bf16 1065369472, %v2582
      %v2584 = vrcp.bf16.pop %v2335
      %v2585 = vmul.bf16 1065369472, %v2584
      %v2586 = vrcp.bf16.pop %v2336
      %v2587 = vmul.bf16 1065369472, %v2586
      %v2588 = vrcp.bf16.pop %v2337
      %v2589 = vmul.bf16 1065369472, %v2588
      %v2590 = vrcp.bf16.pop %v2338
      %v2591 = vmul.bf16 1065369472, %v2590
      %v2592 = vrcp.bf16.pop %v2339
      %v2593 = vmul.bf16 1065369472, %v2592
      %v2594 = vrcp.bf16.pop %v2340
      %v2595 = vmul.bf16 1065369472, %v2594
      %v2596 = vrcp.bf16.pop %v2341
      %v2597 = vmul.bf16 1065369472, %v2596
      %v2598 = vrcp.bf16.pop %v2342
      %v2599 = vmul.bf16 1065369472, %v2598
      %v2600 = vrcp.bf16.pop %v2343
      %v2601 = vmul.bf16 1065369472, %v2600
      %v2602 = vrcp.bf16.pop %v2344
      %v2603 = vmul.bf16 1065369472, %v2602
      %v2604 = vrcp.bf16.pop %v2345
      %v2605 = vmul.bf16 1065369472, %v2604
      %v2606 = vrcp.bf16.pop %v2346
      %v2607 = vmul.bf16 1065369472, %v2606
      %v2608 = vrcp.bf16.pop %v2347
      %v2609 = vmul.bf16 1065369472, %v2608
      %v2610 = vrcp.bf16.pop %v2348
      %v2611 = vmul.bf16 1065369472, %v2610
      %v2612 = vrcp.bf16.pop %v2349
      %v2613 = vmul.bf16 1065369472, %v2612
      %v2614 = vrcp.bf16.pop %v2350
      %v2615 = vmul.bf16 1065369472, %v2614
      %v2616 = vrcp.bf16.pop %v2351
      %v2617 = vmul.bf16 1065369472, %v2616
      %v2618 = vrcp.bf16.pop %v2352
      %v2619 = vmul.bf16 1065369472, %v2618
      %v2620 = vrcp.bf16.pop %v2353
      %v2621 = vmul.bf16 1065369472, %v2620
      %v2622 = vrcp.bf16.pop %v2354
      %v2623 = vmul.bf16 1065369472, %v2622
      %v2624 = vrcp.bf16.pop %v2355
      %v2625 = vmul.bf16 1065369472, %v2624
      %v2626 = vrcp.bf16.pop %v2356
      %v2627 = vmul.bf16 1065369472, %v2626
      %v2628 = vrcp.bf16.pop %v2357
      %v2629 = vmul.bf16 1065369472, %v2628
      %v2630 = vrcp.bf16.pop %v2358
      %v2631 = vmul.bf16 1065369472, %v2630
      %v2632 = vrcp.bf16.pop %v2359
      %v2633 = vmul.bf16 1065369472, %v2632
      %v2634 = vrcp.bf16.pop %v2360
      %v2635 = vmul.bf16 1065369472, %v2634
      %v2636 = vrcp.bf16.pop %v2361
      %v2637 = vmul.bf16 1065369472, %v2636
      %v2638 = vrcp.bf16.pop %v2362
      %v2639 = vmul.bf16 1065369472, %v2638
      %v2640 = vrcp.bf16.pop %v2363
      %v2641 = vmul.bf16 1065369472, %v2640
      %v2642 = vrcp.bf16.pop %v2364
      %v2643 = vmul.bf16 1065369472, %v2642
      %v2644 = vrcp.bf16.pop %v2365
      %v2645 = vmul.bf16 1065369472, %v2644
      %v2646 = vrcp.bf16.pop %v2366
      %v2647 = vmul.bf16 1065369472, %v2646
      %v2648 = vrcp.bf16.pop %v2367
      %v2649 = vmul.bf16 1065369472, %v2648
      %v2650 = vrcp.bf16.pop %v2368
      %v2651 = vmul.bf16 1065369472, %v2650
      %v2652 = vrcp.bf16.pop %v2369
      %v2653 = vmul.bf16 1065369472, %v2652
      %v2654 = vrcp.bf16.pop %v2370
      %v2655 = vmul.bf16 1065369472, %v2654
      %v2656 = vrcp.bf16.pop %v2371
      %v2657 = vmul.bf16 1065369472, %v2656
      %v2658 = vrcp.bf16.pop %v2372
      %v2659 = vmul.bf16 1065369472, %v2658
      %v2660 = vrcp.bf16.pop %v2373
      %v2661 = vmul.bf16 1065369472, %v2660
      %v2662 = vrcp.bf16.pop %v2374
      %v2663 = vmul.bf16 1065369472, %v2662
      %v2664 = vrcp.bf16.pop %v2375
      %v2665 = vmul.bf16 1065369472, %v2664
      %v2666 = vrcp.bf16.pop %v2376
      %v2667 = vmul.bf16 1065369472, %v2666
      %v2668 = vrcp.bf16.pop %v2377
      %v2669 = vmul.bf16 1065369472, %v2668
      %v2670 = vrcp.bf16.pop %v2378
      %v2671 = vmul.bf16 1065369472, %v2670
      %v2672 = vrcp.bf16.pop %v2379
      %v2673 = vmul.bf16 1065369472, %v2672
      %v2674 = vrcp.bf16.pop %v2380
      %v2675 = vmul.bf16 1065369472, %v2674
      %v2676 = vrcp.bf16.pop %v2381
      %v2677 = vmul.bf16 1065369472, %v2676
      %v2678 = vrcp.bf16.pop %v2382
      %v2679 = vmul.bf16 1065369472, %v2678
      %v2680 = vrcp.bf16.pop %v2383
      %v2681 = vmul.bf16 1065369472, %v2680
      %v2682 = vrcp.bf16.pop %v2384
      %v2683 = vmul.bf16 1065369472, %v2682
      %v2684 = vrcp.bf16.pop %v2385
      %v2685 = vmul.bf16 1065369472, %v2684
      %v2686 = vrcp.bf16.pop %v2386
      %v2687 = vmul.bf16 1065369472, %v2686
      %v2688 = vrcp.bf16.pop %v2387
      %v2689 = vmul.bf16 1065369472, %v2688
      %v2690 = vrcp.bf16.pop %v2388
      %v2691 = vmul.bf16 1065369472, %v2690
      %v2692 = vrcp.bf16.pop %v2389
      %v2693 = vmul.bf16 1065369472, %v2692
      %v2694 = vrcp.bf16.pop %v2390
      %v2695 = vmul.bf16 1065369472, %v2694
      %v2696 = vrcp.bf16.pop %v2391
      %v2697 = vmul.bf16 1065369472, %v2696
      %v2698 = vrcp.bf16.pop %v2392
      %v2699 = vmul.bf16 1065369472, %v2698
      %v2700 = vrcp.bf16.pop %v2393
      %v2701 = vmul.bf16 1065369472, %v2700
      %v2702 = vrcp.bf16.pop %v2394
      %v2703 = vmul.bf16 1065369472, %v2702
      %v2704 = vrcp.bf16.pop %v2395
      %v2705 = vmul.bf16 1065369472, %v2704
      %v2706 = vrcp.bf16.pop %v2396
      %v2707 = vmul.bf16 1065369472, %v2706
      %v2708 = vrcp.bf16.pop %v2397
      %v2709 = vmul.bf16 1065369472, %v2708
      %v2710 = vrcp.bf16.pop %v2398
      %v2711 = vmul.bf16 1065369472, %v2710
      %v2712 = vrcp.bf16.pop %v2399
      %v2713 = vmul.bf16 1065369472, %v2712
      %v2714 = vrcp.bf16.pop %v2400
      %v2715 = vmul.bf16 1065369472, %v2714
      %v2716 = vrcp.bf16.pop %v2401
      %v2717 = vmul.bf16 1065369472, %v2716
      %v2718 = vrcp.bf16.pop %v2402
      %v2719 = vmul.bf16 1065369472, %v2718
      %v2720 = vrcp.bf16.pop %v2403
      %v2721 = vmul.bf16 1065369472, %v2720
      %v2722 = vrcp.bf16.pop %v2404
      %v2723 = vmul.bf16 1065369472, %v2722
      %v2724 = vrcp.bf16.pop %v2405
      %v2725 = vmul.bf16 1065369472, %v2724
      %v2726 = vmul.bf16 %v1446, %v2407
      %v2727 = vmul.bf16 %v1447, %v2409
      %v2728 = vmul.bf16 %v1448, %v2411
      %v2729 = vmul.bf16 %v1449, %v2413
      %v2730 = vmul.bf16 %v1450, %v2415
      %v2731 = vmul.bf16 %v1451, %v2417
      %v2732 = vmul.bf16 %v1452, %v2419
      %v2733 = vmul.bf16 %v1453, %v2421
      %v2734 = vmul.bf16 %v1454, %v2423
      %v2735 = vmul.bf16 %v1455, %v2425
      %v2736 = vmul.bf16 %v1456, %v2427
      %v2737 = vmul.bf16 %v1457, %v2429
      %v2738 = vmul.bf16 %v1458, %v2431
      %v2739 = vmul.bf16 %v1459, %v2433
      %v2740 = vmul.bf16 %v1460, %v2435
      %v2741 = vmul.bf16 %v1461, %v2437
      %v2742 = vmul.bf16 %v1462, %v2439
      %v2743 = vmul.bf16 %v1463, %v2441
      %v2744 = vmul.bf16 %v1464, %v2443
      %v2745 = vmul.bf16 %v1465, %v2445
      %v2746 = vmul.bf16 %v1466, %v2447
      %v2747 = vmul.bf16 %v1467, %v2449
      %v2748 = vmul.bf16 %v1468, %v2451
      %v2749 = vmul.bf16 %v1469, %v2453
      %v2750 = vmul.bf16 %v1470, %v2455
      %v2751 = vmul.bf16 %v1471, %v2457
      %v2752 = vmul.bf16 %v1472, %v2459
      %v2753 = vmul.bf16 %v1473, %v2461
      %v2754 = vmul.bf16 %v1474, %v2463
      %v2755 = vmul.bf16 %v1475, %v2465
      %v2756 = vmul.bf16 %v1476, %v2467
      %v2757 = vmul.bf16 %v1477, %v2469
      %v2758 = vmul.bf16 %v1478, %v2471
      %v2759 = vmul.bf16 %v1479, %v2473
      %v2760 = vmul.bf16 %v1480, %v2475
      %v2761 = vmul.bf16 %v1481, %v2477
      %v2762 = vmul.bf16 %v1482, %v2479
      %v2763 = vmul.bf16 %v1483, %v2481
      %v2764 = vmul.bf16 %v1484, %v2483
      %v2765 = vmul.bf16 %v1485, %v2485
      %v2766 = vmul.bf16 %v1486, %v2487
      %v2767 = vmul.bf16 %v1487, %v2489
      %v2768 = vmul.bf16 %v1488, %v2491
      %v2769 = vmul.bf16 %v1489, %v2493
      %v2770 = vmul.bf16 %v1490, %v2495
      %v2771 = vmul.bf16 %v1491, %v2497
      %v2772 = vmul.bf16 %v1492, %v2499
      %v2773 = vmul.bf16 %v1493, %v2501
      %v2774 = vmul.bf16 %v1494, %v2503
      %v2775 = vmul.bf16 %v1495, %v2505
      %v2776 = vmul.bf16 %v1496, %v2507
      %v2777 = vmul.bf16 %v1497, %v2509
      %v2778 = vmul.bf16 %v1498, %v2511
      %v2779 = vmul.bf16 %v1499, %v2513
      %v2780 = vmul.bf16 %v1500, %v2515
      %v2781 = vmul.bf16 %v1501, %v2517
      %v2782 = vmul.bf16 %v1502, %v2519
      %v2783 = vmul.bf16 %v1503, %v2521
      %v2784 = vmul.bf16 %v1504, %v2523
      %v2785 = vmul.bf16 %v1505, %v2525
      %v2786 = vmul.bf16 %v1506, %v2527
      %v2787 = vmul.bf16 %v1507, %v2529
      %v2788 = vmul.bf16 %v1508, %v2531
      %v2789 = vmul.bf16 %v1509, %v2533
      %v2790 = vmul.bf16 %v1510, %v2535
      %v2791 = vmul.bf16 %v1511, %v2537
      %v2792 = vmul.bf16 %v1512, %v2539
      %v2793 = vmul.bf16 %v1513, %v2541
      %v2794 = vmul.bf16 %v1514, %v2543
      %v2795 = vmul.bf16 %v1515, %v2545
      %v2796 = vmul.bf16 %v1516, %v2547
      %v2797 = vmul.bf16 %v1517, %v2549
      %v2798 = vmul.bf16 %v1518, %v2551
      %v2799 = vmul.bf16 %v1519, %v2553
      %v2800 = vmul.bf16 %v1520, %v2555
      %v2801 = vmul.bf16 %v1521, %v2557
      %v2802 = vmul.bf16 %v1522, %v2559
      %v2803 = vmul.bf16 %v1523, %v2561
      %v2804 = vmul.bf16 %v1524, %v2563
      %v2805 = vmul.bf16 %v1525, %v2565
      %v2806 = vmul.bf16 %v1526, %v2567
      %v2807 = vmul.bf16 %v1527, %v2569
      %v2808 = vmul.bf16 %v1528, %v2571
      %v2809 = vmul.bf16 %v1529, %v2573
      %v2810 = vmul.bf16 %v1530, %v2575
      %v2811 = vmul.bf16 %v1531, %v2577
      %v2812 = vmul.bf16 %v1532, %v2579
      %v2813 = vmul.bf16 %v1533, %v2581
      %v2814 = vmul.bf16 %v1534, %v2583
      %v2815 = vmul.bf16 %v1535, %v2585
      %v2816 = vmul.bf16 %v1536, %v2587
      %v2817 = vmul.bf16 %v1537, %v2589
      %v2818 = vmul.bf16 %v1538, %v2591
      %v2819 = vmul.bf16 %v1539, %v2593
      %v2820 = vmul.bf16 %v1540, %v2595
      %v2821 = vmul.bf16 %v1541, %v2597
      %v2822 = vmul.bf16 %v1542, %v2599
      %v2823 = vmul.bf16 %v1543, %v2601
      %v2824 = vmul.bf16 %v1544, %v2603
      %v2825 = vmul.bf16 %v1545, %v2605
      %v2826 = vmul.bf16 %v1546, %v2607
      %v2827 = vmul.bf16 %v1547, %v2609
      %v2828 = vmul.bf16 %v1548, %v2611
      %v2829 = vmul.bf16 %v1549, %v2613
      %v2830 = vmul.bf16 %v1550, %v2615
      %v2831 = vmul.bf16 %v1551, %v2617
      %v2832 = vmul.bf16 %v1552, %v2619
      %v2833 = vmul.bf16 %v1553, %v2621
      %v2834 = vmul.bf16 %v1554, %v2623
      %v2835 = vmul.bf16 %v1555, %v2625
      %v2836 = vmul.bf16 %v1556, %v2627
      %v2837 = vmul.bf16 %v1557, %v2629
      %v2838 = vmul.bf16 %v1558, %v2631
      %v2839 = vmul.bf16 %v1559, %v2633
      %v2840 = vmul.bf16 %v1560, %v2635
      %v2841 = vmul.bf16 %v1561, %v2637
      %v2842 = vmul.bf16 %v1562, %v2639
      %v2843 = vmul.bf16 %v1563, %v2641
      %v2844 = vmul.bf16 %v1564, %v2643
      %v2845 = vmul.bf16 %v1565, %v2645
      %v2846 = vmul.bf16 %v1566, %v2647
      %v2847 = vmul.bf16 %v1567, %v2649
      %v2848 = vmul.bf16 %v1568, %v2651
      %v2849 = vmul.bf16 %v1569, %v2653
      %v2850 = vmul.bf16 %v1570, %v2655
      %v2851 = vmul.bf16 %v1571, %v2657
      %v2852 = vmul.bf16 %v1572, %v2659
      %v2853 = vmul.bf16 %v1573, %v2661
      %v2854 = vmul.bf16 %v1574, %v2663
      %v2855 = vmul.bf16 %v1575, %v2665
      %v2856 = vmul.bf16 %v1576, %v2667
      %v2857 = vmul.bf16 %v1577, %v2669
      %v2858 = vmul.bf16 %v1578, %v2671
      %v2859 = vmul.bf16 %v1579, %v2673
      %v2860 = vmul.bf16 %v1580, %v2675
      %v2861 = vmul.bf16 %v1581, %v2677
      %v2862 = vmul.bf16 %v1582, %v2679
      %v2863 = vmul.bf16 %v1583, %v2681
      %v2864 = vmul.bf16 %v1584, %v2683
      %v2865 = vmul.bf16 %v1585, %v2685
      %v2866 = vmul.bf16 %v1586, %v2687
      %v2867 = vmul.bf16 %v1587, %v2689
      %v2868 = vmul.bf16 %v1588, %v2691
      %v2869 = vmul.bf16 %v1589, %v2693
      %v2870 = vmul.bf16 %v1590, %v2695
      %v2871 = vmul.bf16 %v1591, %v2697
      %v2872 = vmul.bf16 %v1592, %v2699
      %v2873 = vmul.bf16 %v1593, %v2701
      %v2874 = vmul.bf16 %v1594, %v2703
      %v2875 = vmul.bf16 %v1595, %v2705
      %v2876 = vmul.bf16 %v1596, %v2707
      %v2877 = vmul.bf16 %v1597, %v2709
      %v2878 = vmul.bf16 %v1598, %v2711
      %v2879 = vmul.bf16 %v1599, %v2713
      %v2880 = vmul.bf16 %v1600, %v2715
      %v2881 = vmul.bf16 %v1601, %v2717
      %v2882 = vmul.bf16 %v1602, %v2719
      %v2883 = vmul.bf16 %v1603, %v2721
      %v2884 = vmul.bf16 %v1604, %v2723
      %v2885 = vmul.bf16 %v1605, %v2725
      %v2886 = vld [vmem:[#allocation2] sm:$0xff]
      %v2887 = vld [vmem:[#allocation2 + $0x8] sm:$0x3]
      %2888 = vmatprep.subr.bf16.mxu0 %v2797
      %2889 = vmatpush1.bf16.msra.mxu0 %v2796
      %2890 = vmatprep.subr.bf16.mxu0 %v2787
      %2891 = vmatpush1.bf16.msra.mxu0 %v2786
      %2892 = vmatprep.subr.bf16.mxu0 %v2777
      %2893 = vmatpush1.bf16.msra.mxu0 %v2776
      %2894 = vmatprep.subr.bf16.mxu0 %v2767
      %2895 = vmatpush1.bf16.msra.mxu0 %v2766
      %2896 = vmatprep.subr.bf16.mxu0 %v2757
      %2897 = vmatpush1.bf16.msra.mxu0 %v2756
      %2898 = vmatprep.subr.bf16.mxu0 %v2747
      %2899 = vmatpush1.bf16.msra.mxu0 %v2746
      %2900 = vmatprep.subr.bf16.mxu0 %v2737
      %2901 = vmatpush1.bf16.msra.mxu0 %v2736
      %2902 = vmatprep.subr.bf16.mxu0 %v2727
      %2903 = vmatpush1.bf16.msra.mxu0 %v2726
      %2904 = vmatprep.subr.bf16.mxu0 %v2877
      %2905 = vmatpush2.bf16.msra.mxu0 %v2876
      %2906 = vmatprep.subr.bf16.mxu0 %v2867
      %2907 = vmatpush2.bf16.msra.mxu0 %v2866
      %2908 = vmatprep.subr.bf16.mxu0 %v2857
      %2909 = vmatpush2.bf16.msra.mxu0 %v2856
      %2910 = vmatprep.subr.bf16.mxu0 %v2847
      %2911 = vmatpush2.bf16.msra.mxu0 %v2846
      %2912 = vmatprep.subr.bf16.mxu0 %v2837
      %2913 = vmatpush2.bf16.msra.mxu0 %v2836
      %2914 = vmatprep.subr.bf16.mxu0 %v2827
      %2915 = vmatpush2.bf16.msra.mxu0 %v2826
      %2916 = vmatprep.subr.bf16.mxu0 %v2817
      %2917 = vmatpush2.bf16.msra.mxu0 %v2816
      %2918 = vmatprep.subr.bf16.mxu0 %v2807
      %2919 = vmatpush2.bf16.msra.mxu0 %v2806
      %2920 = vmatprep.mubr.bf16.mxu0 1065369472
      %2921 = vmatmul.mubr.bf16.gmra.mxu0 1065369472
      %v2922 = vpop.f32.mrf.mxu0
      %v2923 = vadd.f32 0.0, %v2922
      %v2924 = vpop.f32.mrf.mxu0
      %v2925 = vadd.f32 0.0, %v2924
      %v2926 = vpop.f32.mrf.mxu0
      %v2927 = vpop.f32.mrf.mxu0
      %2928 = vdwg.mxu0
      %2929 = vmatprep.subr.bf16.mxu0 %v2799
      %2930 = vmatpush1.bf16.msra.mxu0 %v2798
      %2931 = vmatprep.subr.bf16.mxu0 %v2789
      %2932 = vmatpush1.bf16.msra.mxu0 %v2788
      %2933 = vmatprep.subr.bf16.mxu0 %v2779
      %2934 = vmatpush1.bf16.msra.mxu0 %v2778
      %2935 = vmatprep.subr.bf16.mxu0 %v2769
      %2936 = vmatpush1.bf16.msra.mxu0 %v2768
      %2937 = vmatprep.subr.bf16.mxu0 %v2759
      %2938 = vmatpush1.bf16.msra.mxu0 %v2758
      %2939 = vmatprep.subr.bf16.mxu0 %v2749
      %2940 = vmatpush1.bf16.msra.mxu0 %v2748
      %2941 = vmatprep.subr.bf16.mxu0 %v2739
      %2942 = vmatpush1.bf16.msra.mxu0 %v2738
      %2943 = vmatprep.subr.bf16.mxu0 %v2729
      %2944 = vmatpush1.bf16.msra.mxu0 %v2728
      %2945 = vmatprep.subr.bf16.mxu0 %v2879
      %2946 = vmatpush2.bf16.msra.mxu0 %v2878
      %2947 = vmatprep.subr.bf16.mxu0 %v2869
      %2948 = vmatpush2.bf16.msra.mxu0 %v2868
      %2949 = vmatprep.subr.bf16.mxu0 %v2859
      %2950 = vmatpush2.bf16.msra.mxu0 %v2858
      %2951 = vmatprep.subr.bf16.mxu0 %v2849
      %2952 = vmatpush2.bf16.msra.mxu0 %v2848
      %2953 = vmatprep.subr.bf16.mxu0 %v2839
      %2954 = vmatpush2.bf16.msra.mxu0 %v2838
      %2955 = vmatprep.subr.bf16.mxu0 %v2829
      %2956 = vmatpush2.bf16.msra.mxu0 %v2828
      %2957 = vmatprep.subr.bf16.mxu0 %v2819
      %2958 = vmatpush2.bf16.msra.mxu0 %v2818
      %2959 = vmatprep.subr.bf16.mxu0 %v2809
      %2960 = vmatpush2.bf16.msra.mxu0 %v2808
      %2961 = vmatprep.mubr.bf16.mxu0 1065369472
      %2962 = vmatmul.mubr.bf16.gmra.mxu0 1065369472
      %v2963 = vpop.f32.mrf.mxu0
      %v2964 = vadd.f32 0.0, %v2963
      %v2965 = vpop.f32.mrf.mxu0
      %v2966 = vadd.f32 0.0, %v2965
      %v2967 = vpop.f32.mrf.mxu0
      %v2968 = vpop.f32.mrf.mxu0
      %2969 = vdwg.mxu0
      %2970 = vmatprep.subr.bf16.mxu0 %v2801
      %2971 = vmatpush1.bf16.msra.mxu0 %v2800
      %2972 = vmatprep.subr.bf16.mxu0 %v2791
      %2973 = vmatpush1.bf16.msra.mxu0 %v2790
      %2974 = vmatprep.subr.bf16.mxu0 %v2781
      %2975 = vmatpush1.bf16.msra.mxu0 %v2780
      %2976 = vmatprep.subr.bf16.mxu0 %v2771
      %2977 = vmatpush1.bf16.msra.mxu0 %v2770
      %2978 = vmatprep.subr.bf16.mxu0 %v2761
      %2979 = vmatpush1.bf16.msra.mxu0 %v2760
      %2980 = vmatprep.subr.bf16.mxu0 %v2751
      %2981 = vmatpush1.bf16.msra.mxu0 %v2750
      %2982 = vmatprep.subr.bf16.mxu0 %v2741
      %2983 = vmatpush1.bf16.msra.mxu0 %v2740
      %2984 = vmatprep.subr.bf16.mxu0 %v2731
      %2985 = vmatpush1.bf16.msra.mxu0 %v2730
      %2986 = vmatprep.subr.bf16.mxu0 %v2881
      %2987 = vmatpush2.bf16.msra.mxu0 %v2880
      %2988 = vmatprep.subr.bf16.mxu0 %v2871
      %2989 = vmatpush2.bf16.msra.mxu0 %v2870
      %2990 = vmatprep.subr.bf16.mxu0 %v2861
      %2991 = vmatpush2.bf16.msra.mxu0 %v2860
      %2992 = vmatprep.subr.bf16.mxu0 %v2851
      %2993 = vmatpush2.bf16.msra.mxu0 %v2850
      %2994 = vmatprep.subr.bf16.mxu0 %v2841
      %2995 = vmatpush2.bf16.msra.mxu0 %v2840
      %2996 = vmatprep.subr.bf16.mxu0 %v2831
      %2997 = vmatpush2.bf16.msra.mxu0 %v2830
      %2998 = vmatprep.subr.bf16.mxu0 %v2821
      %2999 = vmatpush2.bf16.msra.mxu0 %v2820
      %3000 = vmatprep.subr.bf16.mxu0 %v2811
      %3001 = vmatpush2.bf16.msra.mxu0 %v2810
      %3002 = vmatprep.mubr.bf16.mxu0 1065369472
      %3003 = vmatmul.mubr.bf16.gmra.mxu0 1065369472
      %v3004 = vpop.f32.mrf.mxu0
      %v3005 = vadd.f32 0.0, %v3004
      %v3006 = vpop.f32.mrf.mxu0
      %v3007 = vadd.f32 0.0, %v3006
      %v3008 = vpop.f32.mrf.mxu0
      %v3009 = vpop.f32.mrf.mxu0
      %3010 = vdwg.mxu0
      %3011 = vmatprep.subr.bf16.mxu0 %v2803
      %3012 = vmatpush1.bf16.msra.mxu0 %v2802
      %3013 = vmatprep.subr.bf16.mxu0 %v2793
      %3014 = vmatpush1.bf16.msra.mxu0 %v2792
      %3015 = vmatprep.subr.bf16.mxu0 %v2783
      %3016 = vmatpush1.bf16.msra.mxu0 %v2782
      %3017 = vmatprep.subr.bf16.mxu0 %v2773
      %3018 = vmatpush1.bf16.msra.mxu0 %v2772
      %3019 = vmatprep.subr.bf16.mxu0 %v2763
      %3020 = vmatpush1.bf16.msra.mxu0 %v2762
      %3021 = vmatprep.subr.bf16.mxu0 %v2753
      %3022 = vmatpush1.bf16.msra.mxu0 %v2752
      %3023 = vmatprep.subr.bf16.mxu0 %v2743
      %3024 = vmatpush1.bf16.msra.mxu0 %v2742
      %3025 = vmatprep.subr.bf16.mxu0 %v2733
      %3026 = vmatpush1.bf16.msra.mxu0 %v2732
      %3027 = vmatprep.subr.bf16.mxu0 %v2883
      %3028 = vmatpush2.bf16.msra.mxu0 %v2882
      %3029 = vmatprep.subr.bf16.mxu0 %v2873
      %3030 = vmatpush2.bf16.msra.mxu0 %v2872
      %3031 = vmatprep.subr.bf16.mxu0 %v2863
      %3032 = vmatpush2.bf16.msra.mxu0 %v2862
      %3033 = vmatprep.subr.bf16.mxu0 %v2853
      %3034 = vmatpush2.bf16.msra.mxu0 %v2852
      %3035 = vmatprep.subr.bf16.mxu0 %v2843
      %3036 = vmatpush2.bf16.msra.mxu0 %v2842
      %3037 = vmatprep.subr.bf16.mxu0 %v2833
      %3038 = vmatpush2.bf16.msra.mxu0 %v2832
      %3039 = vmatprep.subr.bf16.mxu0 %v2823
      %3040 = vmatpush2.bf16.msra.mxu0 %v2822
      %3041 = vmatprep.subr.bf16.mxu0 %v2813
      %3042 = vmatpush2.bf16.msra.mxu0 %v2812
      %3043 = vmatprep.mubr.bf16.mxu0 1065369472
      %3044 = vmatmul.mubr.bf16.gmra.mxu0 1065369472
      %v3045 = vpop.f32.mrf.mxu0
      %v3046 = vadd.f32 0.0, %v3045
      %v3047 = vpop.f32.mrf.mxu0
      %v3048 = vadd.f32 0.0, %v3047
      %v3049 = vpop.f32.mrf.mxu0
      %v3050 = vpop.f32.mrf.mxu0
      %3051 = vdwg.mxu0
      %3052 = vmatprep.subr.bf16.mxu0 %v2805
      %3053 = vmatpush1.bf16.msra.mxu0 %v2804
      %3054 = vmatprep.subr.bf16.mxu0 %v2795
      %3055 = vmatpush1.bf16.msra.mxu0 %v2794
      %3056 = vmatprep.subr.bf16.mxu0 %v2785
      %3057 = vmatpush1.bf16.msra.mxu0 %v2784
      %3058 = vmatprep.subr.bf16.mxu0 %v2775
      %3059 = vmatpush1.bf16.msra.mxu0 %v2774
      %3060 = vmatprep.subr.bf16.mxu0 %v2765
      %3061 = vmatpush1.bf16.msra.mxu0 %v2764
      %3062 = vmatprep.subr.bf16.mxu0 %v2755
      %3063 = vmatpush1.bf16.msra.mxu0 %v2754
      %3064 = vmatprep.subr.bf16.mxu0 %v2745
      %3065 = vmatpush1.bf16.msra.mxu0 %v2744
      %3066 = vmatprep.subr.bf16.mxu0 %v2735
      %3067 = vmatpush1.bf16.msra.mxu0 %v2734
      %3068 = vmatprep.subr.bf16.mxu0 %v2885
      %3069 = vmatpush2.bf16.msra.mxu0 %v2884
      %3070 = vmatprep.subr.bf16.mxu0 %v2875
      %3071 = vmatpush2.bf16.msra.mxu0 %v2874
      %3072 = vmatprep.subr.bf16.mxu0 %v2865
      %3073 = vmatpush2.bf16.msra.mxu0 %v2864
      %3074 = vmatprep.subr.bf16.mxu0 %v2855
      %3075 = vmatpush2.bf16.msra.mxu0 %v2854
      %3076 = vmatprep.subr.bf16.mxu0 %v2845
      %3077 = vmatpush2.bf16.msra.mxu0 %v2844
      %3078 = vmatprep.subr.bf16.mxu0 %v2835
      %3079 = vmatpush2.bf16.msra.mxu0 %v2834
      %3080 = vmatprep.subr.bf16.mxu0 %v2825
      %3081 = vmatpush2.bf16.msra.mxu0 %v2824
      %3082 = vmatprep.subr.bf16.mxu0 %v2815
      %3083 = vmatpush2.bf16.msra.mxu0 %v2814
      %3084 = vmatprep.mubr.bf16.mxu0 1065369472
      %3085 = vmatmul.mubr.bf16.gmra.mxu0 1065369472
      %v3086 = vpop.f32.mrf.mxu0
      %v3087 = vadd.f32 0.0, %v3086
      %v3088 = vpop.f32.mrf.mxu0
      %v3089 = vadd.f32 0.0, %v3088
      %v3090 = vpop.f32.mrf.mxu0
      %v3091 = vpop.f32.mrf.mxu0
      %3092 = vdwg.mxu0
      %v3103 = vcombine.low %v2923, %v2925
      %v3104 = vcombine.low %v2964, %v2966
      %v3105 = vcombine.low %v3005, %v3007
      %v3106 = vcombine.low %v3046, %v3048
      %v3108 = vunpack.c.l.s4 1966171168
      %v3109 = vunpack.c.0.s8 %v3108
      %v3110 = vlaneseq
      %v3111 = vshrl.u32 %v3110, 7
      %v3112 = vsub.s32 %v3109, %v3111
      %v3113 = vrot.slane %v3103, %v3112
      %v3115 = vunpack.c.l.s4 1966171168
      %v3116 = vunpack.c.0.s8 %v3115
      %v3117 = vlaneseq
      %v3118 = vshrl.u32 %v3117, 7
      %v3119 = vsub.s32 %v3116, %v3118
      %v3120 = vrot.slane %v3104, %v3119
      %v3122 = vunpack.c.l.s4 1966171168
      %v3123 = vunpack.c.0.s8 %v3122
      %v3124 = vlaneseq
      %v3125 = vshrl.u32 %v3124, 7
      %v3126 = vsub.s32 %v3123, %v3125
      %v3127 = vrot.slane %v3105, %v3126
      %v3129 = vunpack.c.l.s4 1966171168
      %v3130 = vunpack.c.0.s8 %v3129
      %v3131 = vlaneseq
      %v3132 = vshrl.u32 %v3131, 7
      %v3133 = vsub.s32 %v3130, %v3132
      %v3134 = vrot.slane %v3106, %v3133
      %v3135 = vcombine.low %v3113, %v3120
      %v3136 = vcombine.low %v3127, %v3134
      %v3138 = vunpack.c.l.s4 1966171168
      %v3139 = vunpack.c.0.s8 %v3138
      %v3140 = vlaneseq
      %v3141 = vshrl.u32 %v3140, 7
      %v3142 = vsub.s32 %v3139, %v3141
      %v3143 = vrot.slane %v3135, %v3142
      %v3145 = vunpack.c.l.s4 1966171168
      %v3146 = vunpack.c.0.s8 %v3145
      %v3147 = vlaneseq
      %v3148 = vshrl.u32 %v3147, 7
      %v3149 = vsub.s32 %v3146, %v3148
      %v3150 = vrot.slane %v3136, %v3149
      %v3151 = vcombine.low %v3143, %v3150
      %v3152 = vcombine.low %v3087, %v3089
      %v3154 = vunpack.c.l.s4 1966171168
      %v3155 = vunpack.c.0.s8 %v3154
      %v3156 = vlaneseq
      %v3157 = vshrl.u32 %v3156, 7
      %v3158 = vsub.s32 %v3155, %v3157
      %v3159 = vrot.slane %v3152, %v3158
      %v3161 = vunpack.c.l.s4 1966171168
      %v3162 = vunpack.c.0.s8 %v3161
      %v3163 = vlaneseq
      %v3164 = vshrl.u32 %v3163, 7
      %v3165 = vsub.s32 %v3162, %v3164
      %v3166 = vrot.slane %v3159, %v3165
      %v3169 = vadd.f32 %v2886, %v3151
      %v3170 = vadd.f32 %v2887, %v3166
      %3171 = vst [vmem:[#allocation2] sm:$0xff] %v3169
      %v3172 = vlaneseq
      %vm3173 = vcmp.ge.s32.totalorder %v3172, 0
      %vm3174 = vcmp.lt.s32.totalorder %v3172, 256
      %vm3175 = vmand %vm3173, %vm3174
      %3176 = vst.msk [vmem:[#allocation2 + $0x8] sm:$0x3] %vm3175, %v3170
      // Predicated region
      $region45: #{customized_effnet_forward.1} parent=39 // pred_check
        %p3177 = pneg %p251
      $region46: #{customized_effnet_forward.1} parent=39 // pred_check_branch
        %3179 = sbr.rel (%p3177) target = $region48
      $region47: #{customized_effnet_forward.1} parent=39 // pred_region
        %v3180 = vld [vmem:[#allocation2] sm:$0xff]
        %v3181 = vld [vmem:[#allocation2 + $0x8] sm:$0x3]
        %v3182 = vmul.f32 %v3180, 0.00390625
        %v3183 = vmul.f32 %v3181, 0.00390625
        %v3184 = vld [vmem:[%s3] sm:$0xff]
        %v3185 = vld [vmem:[%s3 + $0x8] sm:$0xff]
        %v3186 = vld [vmem:[%s3 + $0x10] sm:$0xff]
        %v3187 = vld [vmem:[%s3 + $0x18] sm:$0xff]
        %v3188 = vld [vmem:[%s3 + $0x20] sm:$0xff]
        %v3189 = vld [vmem:[%s3 + $0x28] sm:$0xff]
        %v3190 = vld [vmem:[%s3 + $0x30] sm:$0xff]
        %v3191 = vld [vmem:[%s3 + $0x38] sm:$0xff]
        %v3192 = vld [vmem:[%s3 + $0x40] sm:$0xff]
        %v3193 = vld [vmem:[%s3 + $0x48] sm:$0xff]
        %v3194 = vld [vmem:[%s3 + $0x50] sm:$0xff]
        %v3195 = vld [vmem:[%s3 + $0x58] sm:$0xff]
        %v3196 = vld [vmem:[%s3 + $0x60] sm:$0xff]
        %v3197 = vld [vmem:[%s3 + $0x68] sm:$0xff]
        %v3198 = vld [vmem:[%s3 + $0x70] sm:$0xff]
        %v3199 = vld [vmem:[%s3 + $0x78] sm:$0xff]
        %v3200 = vld [vmem:[%s3 + $0x80] sm:$0xff]
        %v3201 = vld [vmem:[%s3 + $0x88] sm:$0xff]
        %v3202 = vld [vmem:[%s3 + $0x90] sm:$0xff]
        %v3203 = vld [vmem:[%s3 + $0x98] sm:$0xff]
        %v3204 = vld [vmem:[%s3 + $0xa0] sm:$0xff]
        %v3205 = vld [vmem:[%s3 + $0xa8] sm:$0xff]
        %v3206 = vld [vmem:[%s3 + $0xb0] sm:$0xff]
        %v3207 = vld [vmem:[%s3 + $0xb8] sm:$0xff]
        %v3208 = vld [vmem:[%s3 + $0xc0] sm:$0xff]
        %v3209 = vld [vmem:[%s3 + $0xc8] sm:$0xff]
        %v3210 = vld [vmem:[%s3 + $0xd0] sm:$0xff]
        %v3211 = vld [vmem:[%s3 + $0xd8] sm:$0xff]
        %v3212 = vld [vmem:[%s3 + $0xe0] sm:$0xff]
        %v3213 = vld [vmem:[%s3 + $0xe8] sm:$0xff]
        %v3214 = vld [vmem:[%s3 + $0xf0] sm:$0xff]
        %v3215 = vld [vmem:[%s3 + $0xf8] sm:$0xff]
        %v3216 = vld [vmem:[%s3 + $0x100] sm:$0xff]
        %v3217 = vld [vmem:[%s3 + $0x108] sm:$0xff]
        %v3218 = vld [vmem:[%s3 + $0x110] sm:$0xff]
        %v3219 = vld [vmem:[%s3 + $0x118] sm:$0xff]
        %v3220 = vld [vmem:[%s3 + $0x120] sm:$0xff]
        %v3221 = vld [vmem:[%s3 + $0x128] sm:$0xff]
        %v3222 = vld [vmem:[%s3 + $0x130] sm:$0xff]
        %v3223 = vld [vmem:[%s3 + $0x138] sm:$0xff]
        %v3224 = vld [vmem:[%s3 + $0x140] sm:$0xff]
        %v3225 = vld [vmem:[%s3 + $0x148] sm:$0xff]
        %v3226 = vld [vmem:[%s3 + $0x150] sm:$0xff]
        %v3227 = vld [vmem:[%s3 + $0x158] sm:$0xff]
        %v3228 = vld [vmem:[%s3 + $0x160] sm:$0xff]
        %v3229 = vld [vmem:[%s3 + $0x168] sm:$0xff]
        %v3230 = vld [vmem:[%s3 + $0x170] sm:$0xff]
        %v3231 = vld [vmem:[%s3 + $0x178] sm:$0xff]
        %v3232 = vld [vmem:[%s3 + $0x180] sm:$0xff]
        %v3233 = vld [vmem:[%s3 + $0x188] sm:$0xff]
        %v3234 = vld [vmem:[%s3 + $0x190] sm:$0xff]
        %v3235 = vld [vmem:[%s3 + $0x198] sm:$0xff]
        %v3236 = vld [vmem:[%s3 + $0x1a0] sm:$0xff]
        %v3237 = vld [vmem:[%s3 + $0x1a8] sm:$0xff]
        %v3238 = vld [vmem:[%s3 + $0x1b0] sm:$0xff]
        %v3239 = vld [vmem:[%s3 + $0x1b8] sm:$0xff]
        %v3240 = vld [vmem:[%s3 + $0x1c0] sm:$0xff]
        %v3241 = vld [vmem:[%s3 + $0x1c8] sm:$0xff]
        %v3242 = vld [vmem:[%s3 + $0x1d0] sm:$0xff]
        %v3243 = vld [vmem:[%s3 + $0x1d8] sm:$0xff]
        %v3244 = vld [vmem:[%s3 + $0x1e0] sm:$0xff]
        %v3245 = vld [vmem:[%s3 + $0x1e8] sm:$0xff]
        %v3246 = vld [vmem:[%s3 + $0x1f0] sm:$0xff]
        %v3247 = vld [vmem:[%s3 + $0x1f8] sm:$0xff]
        %v3248 = vld [vmem:[%s3 + $0x200] sm:$0xff]
        %v3249 = vld [vmem:[%s3 + $0x208] sm:$0xff]
        %v3250 = vld [vmem:[%s3 + $0x210] sm:$0xff]
        %v3251 = vld [vmem:[%s3 + $0x218] sm:$0xff]
        %v3252 = vld [vmem:[%s3 + $0x220] sm:$0xff]
        %v3253 = vld [vmem:[%s3 + $0x228] sm:$0xff]
        %v3254 = vld [vmem:[%s3 + $0x230] sm:$0xff]
        %v3255 = vld [vmem:[%s3 + $0x238] sm:$0xff]
        %v3256 = vld [vmem:[%s3 + $0x240] sm:$0xff]
        %v3257 = vld [vmem:[%s3 + $0x248] sm:$0xff]
        %v3258 = vld [vmem:[%s3 + $0x250] sm:$0xff]
        %v3259 = vld [vmem:[%s3 + $0x258] sm:$0xff]
        %v3260 = vld [vmem:[%s3 + $0x260] sm:$0xff]
        %v3261 = vld [vmem:[%s3 + $0x268] sm:$0xff]
        %v3262 = vld [vmem:[%s3 + $0x270] sm:$0xff]
        %v3263 = vld [vmem:[%s3 + $0x278] sm:$0xff]
        %v3264 = vld [vmem:[%s3 + $0x280] sm:$0xff]
        %v3265 = vld [vmem:[%s3 + $0x288] sm:$0xff]
        %v3266 = vld [vmem:[%s3 + $0x290] sm:$0xff]
        %v3267 = vld [vmem:[%s3 + $0x298] sm:$0xff]
        %v3268 = vld [vmem:[%s3 + $0x2a0] sm:$0xff]
        %v3269 = vld [vmem:[%s3 + $0x2a8] sm:$0xff]
        %v3270 = vld [vmem:[%s3 + $0x2b0] sm:$0xff]
        %v3271 = vld [vmem:[%s3 + $0x2b8] sm:$0xff]
        %v3272 = vld [vmem:[%s3 + $0x2c0] sm:$0xff]
        %v3273 = vld [vmem:[%s3 + $0x2c8] sm:$0xff]
        %v3274 = vld [vmem:[%s3 + $0x2d0] sm:$0xff]
        %v3275 = vld [vmem:[%s3 + $0x2d8] sm:$0xff]
        %v3276 = vld [vmem:[%s3 + $0x2e0] sm:$0xff]
        %v3277 = vld [vmem:[%s3 + $0x2e8] sm:$0xff]
        %v3278 = vld [vmem:[%s3 + $0x2f0] sm:$0xff]
        %v3279 = vld [vmem:[%s3 + $0x2f8] sm:$0xff]
        %v3280 = vld [vmem:[%s3 + $0x300] sm:$0xff]
        %v3281 = vld [vmem:[%s3 + $0x308] sm:$0xff]
        %v3282 = vld [vmem:[%s3 + $0x310] sm:$0xff]
        %v3283 = vld [vmem:[%s3 + $0x318] sm:$0xff]
        %v3284 = vld [vmem:[%s3 + $0x320] sm:$0xff]
        %v3285 = vld [vmem:[%s3 + $0x328] sm:$0xff]
        %v3286 = vld [vmem:[%s3 + $0x330] sm:$0xff]
        %v3287 = vld [vmem:[%s3 + $0x338] sm:$0xff]
        %v3288 = vld [vmem:[%s3 + $0x340] sm:$0xff]
        %v3289 = vld [vmem:[%s3 + $0x348] sm:$0xff]
        %v3290 = vld [vmem:[%s3 + $0x350] sm:$0xff]
        %v3291 = vld [vmem:[%s3 + $0x358] sm:$0xff]
        %v3292 = vld [vmem:[%s3 + $0x360] sm:$0xff]
        %v3293 = vld [vmem:[%s3 + $0x368] sm:$0xff]
        %v3294 = vld [vmem:[%s3 + $0x370] sm:$0xff]
        %v3295 = vld [vmem:[%s3 + $0x378] sm:$0xff]
        %v3296 = vld [vmem:[%s3 + $0x380] sm:$0xff]
        %v3297 = vld [vmem:[%s3 + $0x388] sm:$0xff]
        %v3298 = vld [vmem:[%s3 + $0x390] sm:$0xff]
        %v3299 = vld [vmem:[%s3 + $0x398] sm:$0xff]
        %v3300 = vld [vmem:[%s3 + $0x3a0] sm:$0xff]
        %v3301 = vld [vmem:[%s3 + $0x3a8] sm:$0xff]
        %v3302 = vld [vmem:[%s3 + $0x3b0] sm:$0xff]
        %v3303 = vld [vmem:[%s3 + $0x3b8] sm:$0xff]
        %v3304 = vld [vmem:[%s3 + $0x3c0] sm:$0xff]
        %v3305 = vld [vmem:[%s3 + $0x3c8] sm:$0xff]
        %v3306 = vld [vmem:[%s3 + $0x3d0] sm:$0xff]
        %v3307 = vld [vmem:[%s3 + $0x3d8] sm:$0xff]
        %v3308 = vld [vmem:[%s3 + $0x3e0] sm:$0xff]
        %v3309 = vld [vmem:[%s3 + $0x3e8] sm:$0xff]
        %v3310 = vld [vmem:[%s3 + $0x3f0] sm:$0xff]
        %v3311 = vld [vmem:[%s3 + $0x3f8] sm:$0xff]
        %v3312 = vld [vmem:[%s3 + $0x400] sm:$0xff]
        %v3313 = vld [vmem:[%s3 + $0x408] sm:$0xff]
        %v3314 = vld [vmem:[%s3 + $0x410] sm:$0xff]
        %v3315 = vld [vmem:[%s3 + $0x418] sm:$0xff]
        %v3316 = vld [vmem:[%s3 + $0x420] sm:$0xff]
        %v3317 = vld [vmem:[%s3 + $0x428] sm:$0xff]
        %v3318 = vld [vmem:[%s3 + $0x430] sm:$0xff]
        %v3319 = vld [vmem:[%s3 + $0x438] sm:$0xff]
        %v3320 = vld [vmem:[%s3 + $0x440] sm:$0xff]
        %v3321 = vld [vmem:[%s3 + $0x448] sm:$0xff]
        %v3322 = vld [vmem:[%s3 + $0x450] sm:$0xff]
        %v3323 = vld [vmem:[%s3 + $0x458] sm:$0xff]
        %v3324 = vld [vmem:[%s3 + $0x460] sm:$0xff]
        %v3325 = vld [vmem:[%s3 + $0x468] sm:$0xff]
        %v3326 = vld [vmem:[%s3 + $0x470] sm:$0xff]
        %v3327 = vld [vmem:[%s3 + $0x478] sm:$0xff]
        %v3328 = vld [vmem:[%s3 + $0x480] sm:$0xff]
        %v3329 = vld [vmem:[%s3 + $0x488] sm:$0xff]
        %v3330 = vld [vmem:[%s3 + $0x490] sm:$0xff]
        %v3331 = vld [vmem:[%s3 + $0x498] sm:$0xff]
        %v3332 = vld [vmem:[%s3 + $0x4a0] sm:$0xff]
        %v3333 = vld [vmem:[%s3 + $0x4a8] sm:$0xff]
        %v3334 = vld [vmem:[%s3 + $0x4b0] sm:$0xff]
        %v3335 = vld [vmem:[%s3 + $0x4b8] sm:$0xff]
        %v3336 = vld [vmem:[%s3 + $0x4c0] sm:$0xff]
        %v3337 = vld [vmem:[%s3 + $0x4c8] sm:$0xff]
        %v3338 = vld [vmem:[%s3 + $0x4d0] sm:$0xff]
        %v3339 = vld [vmem:[%s3 + $0x4d8] sm:$0xff]
        %v3340 = vld [vmem:[%s3 + $0x4e0] sm:$0xff]
        %v3341 = vld [vmem:[%s3 + $0x4e8] sm:$0xff]
        %v3342 = vld [vmem:[%s3 + $0x4f0] sm:$0xff]
        %v3343 = vld [vmem:[%s3 + $0x4f8] sm:$0xff]
        %v3344 = vld [vmem:[%s4] sm:$0x1]
        %v3347 = vlaneseq
        %v3348 = vshrl.u32 %v3347, 7
        %v3349 = vsub.s32 0, %v3348
        %v3350 = vrot.slane %v3182, %v3349
        %v3351 = vlaneseq
        %v3352 = vshrl.u32 %v3351, 7
        %v3353 = vsub.s32 1, %v3352
        %v3354 = vrot.slane %v3182, %v3353
        %v3355 = vlaneseq
        %v3356 = vshrl.u32 %v3355, 7
        %v3357 = vsub.s32 2, %v3356
        %v3358 = vrot.slane %v3182, %v3357
        %v3359 = vlaneseq
        %v3360 = vshrl.u32 %v3359, 7
        %v3361 = vsub.s32 3, %v3360
        %v3362 = vrot.slane %v3182, %v3361
        %v3363 = vlaneseq
        %v3364 = vshrl.u32 %v3363, 7
        %v3365 = vsub.s32 4, %v3364
        %v3366 = vrot.slane %v3182, %v3365
        %v3367 = vlaneseq
        %v3368 = vshrl.u32 %v3367, 7
        %v3369 = vsub.s32 5, %v3368
        %v3370 = vrot.slane %v3182, %v3369
        %v3371 = vlaneseq
        %v3372 = vshrl.u32 %v3371, 7
        %v3373 = vsub.s32 6, %v3372
        %v3374 = vrot.slane %v3182, %v3373
        %v3375 = vlaneseq
        %v3376 = vshrl.u32 %v3375, 7
        %v3377 = vsub.s32 7, %v3376
        %v3378 = vrot.slane %v3182, %v3377
        %v3379 = vlaneseq
        %v3380 = vshrl.u32 %v3379, 7
        %v3381 = vsub.s32 0, %v3380
        %v3382 = vrot.slane %v3183, %v3381
        %v3383 = vlaneseq
        %v3384 = vshrl.u32 %v3383, 7
        %v3385 = vsub.s32 1, %v3384
        %v3386 = vrot.slane %v3183, %v3385
        %3397 = vmatprep.subr.mxu0 0.0
        %3398 = vmatpush1.msra.mxu0 %v3199
        %3399 = vmatprep.subr.mxu0 0.0
        %3400 = vmatpush1.msra.mxu0 %v3198
        %3401 = vmatprep.subr.mxu0 0.0
        %3402 = vmatpush1.msra.mxu0 %v3197
        %3403 = vmatprep.subr.mxu0 0.0
        %3404 = vmatpush1.msra.mxu0 %v3196
        %3405 = vmatprep.subr.mxu0 0.0
        %3406 = vmatpush1.msra.mxu0 %v3195
        %3407 = vmatprep.subr.mxu0 0.0
        %3408 = vmatpush1.msra.mxu0 %v3194
        %3409 = vmatprep.subr.mxu0 0.0
        %3410 = vmatpush1.msra.mxu0 %v3193
        %3411 = vmatprep.subr.mxu0 0.0
        %3412 = vmatpush1.msra.mxu0 %v3192
        %3413 = vmatprep.subr.mxu0 0.0
        %3414 = vmatpush1.msra.mxu0 %v3191
        %3415 = vmatprep.subr.mxu0 0.0
        %3416 = vmatpush1.msra.mxu0 %v3190
        %3417 = vmatprep.subr.mxu0 0.0
        %3418 = vmatpush1.msra.mxu0 %v3189
        %3419 = vmatprep.subr.mxu0 0.0
        %3420 = vmatpush1.msra.mxu0 %v3188
        %3421 = vmatprep.subr.mxu0 0.0
        %3422 = vmatpush1.msra.mxu0 %v3187
        %3423 = vmatprep.subr.mxu0 0.0
        %3424 = vmatpush1.msra.mxu0 %v3186
        %3425 = vmatprep.subr.mxu0 0.0
        %3426 = vmatpush1.msra.mxu0 %v3185
        %3427 = vmatprep.subr.mxu0 0.0
        %3428 = vmatpush1.msra.mxu0 %v3184
        %3429 = vmatprep.subr.mxu0 0.0
        %3430 = vmatpush2.msra.mxu0 %v3215
        %3431 = vmatprep.subr.mxu0 0.0
        %3432 = vmatpush2.msra.mxu0 %v3214
        %3433 = vmatprep.subr.mxu0 0.0
        %3434 = vmatpush2.msra.mxu0 %v3213
        %3435 = vmatprep.subr.mxu0 0.0
        %3436 = vmatpush2.msra.mxu0 %v3212
        %3437 = vmatprep.subr.mxu0 0.0
        %3438 = vmatpush2.msra.mxu0 %v3211
        %3439 = vmatprep.subr.mxu0 0.0
        %3440 = vmatpush2.msra.mxu0 %v3210
        %3441 = vmatprep.subr.mxu0 0.0
        %3442 = vmatpush2.msra.mxu0 %v3209
        %3443 = vmatprep.subr.mxu0 0.0
        %3444 = vmatpush2.msra.mxu0 %v3208
        %3445 = vmatprep.subr.mxu0 0.0
        %3446 = vmatpush2.msra.mxu0 %v3207
        %3447 = vmatprep.subr.mxu0 0.0
        %3448 = vmatpush2.msra.mxu0 %v3206
        %3449 = vmatprep.subr.mxu0 0.0
        %3450 = vmatpush2.msra.mxu0 %v3205
        %3451 = vmatprep.subr.mxu0 0.0
        %3452 = vmatpush2.msra.mxu0 %v3204
        %3453 = vmatprep.subr.mxu0 0.0
        %3454 = vmatpush2.msra.mxu0 %v3203
        %3455 = vmatprep.subr.mxu0 0.0
        %3456 = vmatpush2.msra.mxu0 %v3202
        %3457 = vmatprep.subr.mxu0 0.0
        %3458 = vmatpush2.msra.mxu0 %v3201
        %3459 = vmatprep.subr.mxu0 0.0
        %3460 = vmatpush2.msra.mxu0 %v3200
        %3461 = vmatprep.mubr.f32.mxu0 %v3354
        %3462 = vmatmul.mubr.f32.gmra.mxu0 %v3350
        %v3463 = vpop.f32.mrf.mxu0
        %v3464 = vadd.f32 %v3344, %v3463
        %v3465 = vpop.f32.mrf.mxu0
        %3466 = vdwg.mxu0
        %3467 = vmatprep.subr.mxu0 0.0
        %3468 = vmatpush1.msra.mxu0 %v3231
        %3469 = vmatprep.subr.mxu0 0.0
        %3470 = vmatpush1.msra.mxu0 %v3230
        %3471 = vmatprep.subr.mxu0 0.0
        %3472 = vmatpush1.msra.mxu0 %v3229
        %3473 = vmatprep.subr.mxu0 0.0
        %3474 = vmatpush1.msra.mxu0 %v3228
        %3475 = vmatprep.subr.mxu0 0.0
        %3476 = vmatpush1.msra.mxu0 %v3227
        %3477 = vmatprep.subr.mxu0 0.0
        %3478 = vmatpush1.msra.mxu0 %v3226
        %3479 = vmatprep.subr.mxu0 0.0
        %3480 = vmatpush1.msra.mxu0 %v3225
        %3481 = vmatprep.subr.mxu0 0.0
        %3482 = vmatpush1.msra.mxu0 %v3224
        %3483 = vmatprep.subr.mxu0 0.0
        %3484 = vmatpush1.msra.mxu0 %v3223
        %3485 = vmatprep.subr.mxu0 0.0
        %3486 = vmatpush1.msra.mxu0 %v3222
        %3487 = vmatprep.subr.mxu0 0.0
        %3488 = vmatpush1.msra.mxu0 %v3221
        %3489 = vmatprep.subr.mxu0 0.0
        %3490 = vmatpush1.msra.mxu0 %v3220
        %3491 = vmatprep.subr.mxu0 0.0
        %3492 = vmatpush1.msra.mxu0 %v3219
        %3493 = vmatprep.subr.mxu0 0.0
        %3494 = vmatpush1.msra.mxu0 %v3218
        %3495 = vmatprep.subr.mxu0 0.0
        %3496 = vmatpush1.msra.mxu0 %v3217
        %3497 = vmatprep.subr.mxu0 0.0
        %3498 = vmatpush1.msra.mxu0 %v3216
        %3499 = vmatprep.subr.mxu0 0.0
        %3500 = vmatpush2.msra.mxu0 %v3247
        %3501 = vmatprep.subr.mxu0 0.0
        %3502 = vmatpush2.msra.mxu0 %v3246
        %3503 = vmatprep.subr.mxu0 0.0
        %3504 = vmatpush2.msra.mxu0 %v3245
        %3505 = vmatprep.subr.mxu0 0.0
        %3506 = vmatpush2.msra.mxu0 %v3244
        %3507 = vmatprep.subr.mxu0 0.0
        %3508 = vmatpush2.msra.mxu0 %v3243
        %3509 = vmatprep.subr.mxu0 0.0
        %3510 = vmatpush2.msra.mxu0 %v3242
        %3511 = vmatprep.subr.mxu0 0.0
        %3512 = vmatpush2.msra.mxu0 %v3241
        %3513 = vmatprep.subr.mxu0 0.0
        %3514 = vmatpush2.msra.mxu0 %v3240
        %3515 = vmatprep.subr.mxu0 0.0
        %3516 = vmatpush2.msra.mxu0 %v3239
        %3517 = vmatprep.subr.mxu0 0.0
        %3518 = vmatpush2.msra.mxu0 %v3238
        %3519 = vmatprep.subr.mxu0 0.0
        %3520 = vmatpush2.msra.mxu0 %v3237
        %3521 = vmatprep.subr.mxu0 0.0
        %3522 = vmatpush2.msra.mxu0 %v3236
        %3523 = vmatprep.subr.mxu0 0.0
        %3524 = vmatpush2.msra.mxu0 %v3235
        %3525 = vmatprep.subr.mxu0 0.0
        %3526 = vmatpush2.msra.mxu0 %v3234
        %3527 = vmatprep.subr.mxu0 0.0
        %3528 = vmatpush2.msra.mxu0 %v3233
        %3529 = vmatprep.subr.mxu0 0.0
        %3530 = vmatpush2.msra.mxu0 %v3232
        %3531 = vmatprep.mubr.f32.mxu0 %v3362
        %3532 = vmatmul.mubr.f32.gmra.mxu0 %v3358
        %v3533 = vpop.f32.mrf.mxu0
        %v3534 = vadd.f32 %v3464, %v3533
        %v3535 = vpop.f32.mrf.mxu0
        %3536 = vdwg.mxu0
        %3537 = vmatprep.subr.mxu0 0.0
        %3538 = vmatpush1.msra.mxu0 %v3263
        %3539 = vmatprep.subr.mxu0 0.0
        %3540 = vmatpush1.msra.mxu0 %v3262
        %3541 = vmatprep.subr.mxu0 0.0
        %3542 = vmatpush1.msra.mxu0 %v3261
        %3543 = vmatprep.subr.mxu0 0.0
        %3544 = vmatpush1.msra.mxu0 %v3260
        %3545 = vmatprep.subr.mxu0 0.0
        %3546 = vmatpush1.msra.mxu0 %v3259
        %3547 = vmatprep.subr.mxu0 0.0
        %3548 = vmatpush1.msra.mxu0 %v3258
        %3549 = vmatprep.subr.mxu0 0.0
        %3550 = vmatpush1.msra.mxu0 %v3257
        %3551 = vmatprep.subr.mxu0 0.0
        %3552 = vmatpush1.msra.mxu0 %v3256
        %3553 = vmatprep.subr.mxu0 0.0
        %3554 = vmatpush1.msra.mxu0 %v3255
        %3555 = vmatprep.subr.mxu0 0.0
        %3556 = vmatpush1.msra.mxu0 %v3254
        %3557 = vmatprep.subr.mxu0 0.0
        %3558 = vmatpush1.msra.mxu0 %v3253
        %3559 = vmatprep.subr.mxu0 0.0
        %3560 = vmatpush1.msra.mxu0 %v3252
        %3561 = vmatprep.subr.mxu0 0.0
        %3562 = vmatpush1.msra.mxu0 %v3251
        %3563 = vmatprep.subr.mxu0 0.0
        %3564 = vmatpush1.msra.mxu0 %v3250
        %3565 = vmatprep.subr.mxu0 0.0
        %3566 = vmatpush1.msra.mxu0 %v3249
        %3567 = vmatprep.subr.mxu0 0.0
        %3568 = vmatpush1.msra.mxu0 %v3248
        %3569 = vmatprep.subr.mxu0 0.0
        %3570 = vmatpush2.msra.mxu0 %v3279
        %3571 = vmatprep.subr.mxu0 0.0
        %3572 = vmatpush2.msra.mxu0 %v3278
        %3573 = vmatprep.subr.mxu0 0.0
        %3574 = vmatpush2.msra.mxu0 %v3277
        %3575 = vmatprep.subr.mxu0 0.0
        %3576 = vmatpush2.msra.mxu0 %v3276
        %3577 = vmatprep.subr.mxu0 0.0
        %3578 = vmatpush2.msra.mxu0 %v3275
        %3579 = vmatprep.subr.mxu0 0.0
        %3580 = vmatpush2.msra.mxu0 %v3274
        %3581 = vmatprep.subr.mxu0 0.0
        %3582 = vmatpush2.msra.mxu0 %v3273
        %3583 = vmatprep.subr.mxu0 0.0
        %3584 = vmatpush2.msra.mxu0 %v3272
        %3585 = vmatprep.subr.mxu0 0.0
        %3586 = vmatpush2.msra.mxu0 %v3271
        %3587 = vmatprep.subr.mxu0 0.0
        %3588 = vmatpush2.msra.mxu0 %v3270
        %3589 = vmatprep.subr.mxu0 0.0
        %3590 = vmatpush2.msra.mxu0 %v3269
        %3591 = vmatprep.subr.mxu0 0.0
        %3592 = vmatpush2.msra.mxu0 %v3268
        %3593 = vmatprep.subr.mxu0 0.0
        %3594 = vmatpush2.msra.mxu0 %v3267
        %3595 = vmatprep.subr.mxu0 0.0
        %3596 = vmatpush2.msra.mxu0 %v3266
        %3597 = vmatprep.subr.mxu0 0.0
        %3598 = vmatpush2.msra.mxu0 %v3265
        %3599 = vmatprep.subr.mxu0 0.0
        %3600 = vmatpush2.msra.mxu0 %v3264
        %3601 = vmatprep.mubr.f32.mxu0 %v3370
        %3602 = vmatmul.mubr.f32.gmra.mxu0 %v3366
        %v3603 = vpop.f32.mrf.mxu0
        %v3604 = vadd.f32 %v3534, %v3603
        %v3605 = vpop.f32.mrf.mxu0
        %3606 = vdwg.mxu0
        %3607 = vmatprep.subr.mxu0 0.0
        %3608 = vmatpush1.msra.mxu0 %v3295
        %3609 = vmatprep.subr.mxu0 0.0
        %3610 = vmatpush1.msra.mxu0 %v3294
        %3611 = vmatprep.subr.mxu0 0.0
        %3612 = vmatpush1.msra.mxu0 %v3293
        %3613 = vmatprep.subr.mxu0 0.0
        %3614 = vmatpush1.msra.mxu0 %v3292
        %3615 = vmatprep.subr.mxu0 0.0
        %3616 = vmatpush1.msra.mxu0 %v3291
        %3617 = vmatprep.subr.mxu0 0.0
        %3618 = vmatpush1.msra.mxu0 %v3290
        %3619 = vmatprep.subr.mxu0 0.0
        %3620 = vmatpush1.msra.mxu0 %v3289
        %3621 = vmatprep.subr.mxu0 0.0
        %3622 = vmatpush1.msra.mxu0 %v3288
        %3623 = vmatprep.subr.mxu0 0.0
        %3624 = vmatpush1.msra.mxu0 %v3287
        %3625 = vmatprep.subr.mxu0 0.0
        %3626 = vmatpush1.msra.mxu0 %v3286
        %3627 = vmatprep.subr.mxu0 0.0
        %3628 = vmatpush1.msra.mxu0 %v3285
        %3629 = vmatprep.subr.mxu0 0.0
        %3630 = vmatpush1.msra.mxu0 %v3284
        %3631 = vmatprep.subr.mxu0 0.0
        %3632 = vmatpush1.msra.mxu0 %v3283
        %3633 = vmatprep.subr.mxu0 0.0
        %3634 = vmatpush1.msra.mxu0 %v3282
        %3635 = vmatprep.subr.mxu0 0.0
        %3636 = vmatpush1.msra.mxu0 %v3281
        %3637 = vmatprep.subr.mxu0 0.0
        %3638 = vmatpush1.msra.mxu0 %v3280
        %3639 = vmatprep.subr.mxu0 0.0
        %3640 = vmatpush2.msra.mxu0 %v3311
        %3641 = vmatprep.subr.mxu0 0.0
        %3642 = vmatpush2.msra.mxu0 %v3310
        %3643 = vmatprep.subr.mxu0 0.0
        %3644 = vmatpush2.msra.mxu0 %v3309
        %3645 = vmatprep.subr.mxu0 0.0
        %3646 = vmatpush2.msra.mxu0 %v3308
        %3647 = vmatprep.subr.mxu0 0.0
        %3648 = vmatpush2.msra.mxu0 %v3307
        %3649 = vmatprep.subr.mxu0 0.0
        %3650 = vmatpush2.msra.mxu0 %v3306
        %3651 = vmatprep.subr.mxu0 0.0
        %3652 = vmatpush2.msra.mxu0 %v3305
        %3653 = vmatprep.subr.mxu0 0.0
        %3654 = vmatpush2.msra.mxu0 %v3304
        %3655 = vmatprep.subr.mxu0 0.0
        %3656 = vmatpush2.msra.mxu0 %v3303
        %3657 = vmatprep.subr.mxu0 0.0
        %3658 = vmatpush2.msra.mxu0 %v3302
        %3659 = vmatprep.subr.mxu0 0.0
        %3660 = vmatpush2.msra.mxu0 %v3301
        %3661 = vmatprep.subr.mxu0 0.0
        %3662 = vmatpush2.msra.mxu0 %v3300
        %3663 = vmatprep.subr.mxu0 0.0
        %3664 = vmatpush2.msra.mxu0 %v3299
        %3665 = vmatprep.subr.mxu0 0.0
        %3666 = vmatpush2.msra.mxu0 %v3298
        %3667 = vmatprep.subr.mxu0 0.0
        %3668 = vmatpush2.msra.mxu0 %v3297
        %3669 = vmatprep.subr.mxu0 0.0
        %3670 = vmatpush2.msra.mxu0 %v3296
        %3671 = vmatprep.mubr.f32.mxu0 %v3378
        %3672 = vmatmul.mubr.f32.gmra.mxu0 %v3374
        %v3673 = vpop.f32.mrf.mxu0
        %v3674 = vadd.f32 %v3604, %v3673
        %v3675 = vpop.f32.mrf.mxu0
        %3676 = vdwg.mxu0
        %3677 = vmatprep.subr.mxu0 0.0
        %3678 = vmatpush1.msra.mxu0 %v3327
        %3679 = vmatprep.subr.mxu0 0.0
        %3680 = vmatpush1.msra.mxu0 %v3326
        %3681 = vmatprep.subr.mxu0 0.0
        %3682 = vmatpush1.msra.mxu0 %v3325
        %3683 = vmatprep.subr.mxu0 0.0
        %3684 = vmatpush1.msra.mxu0 %v3324
        %3685 = vmatprep.subr.mxu0 0.0
        %3686 = vmatpush1.msra.mxu0 %v3323
        %3687 = vmatprep.subr.mxu0 0.0
        %3688 = vmatpush1.msra.mxu0 %v3322
        %3689 = vmatprep.subr.mxu0 0.0
        %3690 = vmatpush1.msra.mxu0 %v3321
        %3691 = vmatprep.subr.mxu0 0.0
        %3692 = vmatpush1.msra.mxu0 %v3320
        %3693 = vmatprep.subr.mxu0 0.0
        %3694 = vmatpush1.msra.mxu0 %v3319
        %3695 = vmatprep.subr.mxu0 0.0
        %3696 = vmatpush1.msra.mxu0 %v3318
        %3697 = vmatprep.subr.mxu0 0.0
        %3698 = vmatpush1.msra.mxu0 %v3317
        %3699 = vmatprep.subr.mxu0 0.0
        %3700 = vmatpush1.msra.mxu0 %v3316
        %3701 = vmatprep.subr.mxu0 0.0
        %3702 = vmatpush1.msra.mxu0 %v3315
        %3703 = vmatprep.subr.mxu0 0.0
        %3704 = vmatpush1.msra.mxu0 %v3314
        %3705 = vmatprep.subr.mxu0 0.0
        %3706 = vmatpush1.msra.mxu0 %v3313
        %3707 = vmatprep.subr.mxu0 0.0
        %3708 = vmatpush1.msra.mxu0 %v3312
        %3709 = vmatprep.subr.mxu0 0.0
        %3710 = vmatpush2.msra.mxu0 %v3343
        %3711 = vmatprep.subr.mxu0 0.0
        %3712 = vmatpush2.msra.mxu0 %v3342
        %3713 = vmatprep.subr.mxu0 0.0
        %3714 = vmatpush2.msra.mxu0 %v3341
        %3715 = vmatprep.subr.mxu0 0.0
        %3716 = vmatpush2.msra.mxu0 %v3340
        %3717 = vmatprep.subr.mxu0 0.0
        %3718 = vmatpush2.msra.mxu0 %v3339
        %3719 = vmatprep.subr.mxu0 0.0
        %3720 = vmatpush2.msra.mxu0 %v3338
        %3721 = vmatprep.subr.mxu0 0.0
        %3722 = vmatpush2.msra.mxu0 %v3337
        %3723 = vmatprep.subr.mxu0 0.0
        %3724 = vmatpush2.msra.mxu0 %v3336
        %3725 = vmatprep.subr.mxu0 0.0
        %3726 = vmatpush2.msra.mxu0 %v3335
        %3727 = vmatprep.subr.mxu0 0.0
        %3728 = vmatpush2.msra.mxu0 %v3334
        %3729 = vmatprep.subr.mxu0 0.0
        %3730 = vmatpush2.msra.mxu0 %v3333
        %3731 = vmatprep.subr.mxu0 0.0
        %3732 = vmatpush2.msra.mxu0 %v3332
        %3733 = vmatprep.subr.mxu0 0.0
        %3734 = vmatpush2.msra.mxu0 %v3331
        %3735 = vmatprep.subr.mxu0 0.0
        %3736 = vmatpush2.msra.mxu0 %v3330
        %3737 = vmatprep.subr.mxu0 0.0
        %3738 = vmatpush2.msra.mxu0 %v3329
        %3739 = vmatprep.subr.mxu0 0.0
        %3740 = vmatpush2.msra.mxu0 %v3328
        %3741 = vmatprep.mubr.f32.mxu0 %v3386
        %3742 = vmatmul.mubr.f32.gmra.mxu0 %v3382
        %v3743 = vpop.f32.mrf.mxu0
        %v3744 = vadd.f32 %v3674, %v3743
        %v3745 = vpop.f32.mrf.mxu0
        %3746 = vdwg.mxu0
        %3747 = vst [vmem:[%s248] sm:$0x1] %v3744
      $region48: #{customized_effnet_forward.1} parent=39 // pred_fallthru
        _
      %p3748 = scmp.lt.s32.totalorder %s20, 1
      %s3749 = scalar_select %p3748, %s20, 1
      %s3750 = scalar_lea.vmem %s5, %s3749
      // Predicated region
      $region49: #{customized_effnet_forward.1} parent=39 // pred_check
        %p3751 = pneg %p158
      $region50: #{customized_effnet_forward.1} parent=39 // pred_check_branch
        %3753 = sbr.rel (%p3751) target = $region52
      $region51: #{customized_effnet_forward.1} parent=39 // pred_region
        _
      $region52: #{customized_effnet_forward.1} parent=39 // pred_fallthru
        _
    $region40: #{customized_effnet_forward.1} parent=5 // pred_fallthru
      _
    %p3754 = scmp.le.s32.totalorder 2, %s11
    // Predicated region
    $region53: #{customized_effnet_forward.1} parent=5 // pred_check
      %p3755 = pneg %p3754
    $region54: #{customized_effnet_forward.1} parent=5 // pred_check_branch
      %3757 = sbr.rel (%p3755) target = $region56
    $region55: #{customized_effnet_forward.1} parent=5 // pred_region
      %s3758 = ssub.s32 %s11, 2
      // Predicated region
      $region57: #{customized_effnet_forward.1} parent=55 // pred_check
        %p3759 = pneg %p164
      $region58: #{customized_effnet_forward.1} parent=55 // pred_check_branch
        %3761 = sbr.rel (%p3759) target = $region60
      $region59: #{customized_effnet_forward.1} parent=55 // pred_region
        %p3762 = scmp.lt.s32.totalorder %s22, 1
        %s3763 = scalar_select %p3762, %s22, 1
        %s3764 = scalar_lea.vmem %s5, %s3763
      $region60: #{customized_effnet_forward.1} parent=55 // pred_fallthru
        _
    $region56: #{customized_effnet_forward.1} parent=5 // pred_fallthru
      _
  $region6: #{customized_effnet_forward.1} parent=0 // loop_footer
    %s15 = sadd.s32 1, %s11
  $region7: #{customized_effnet_forward.1} parent=0 // loop_footer_branch
    %10 = sbr.rel target = $region3
  $region8: #{customized_effnet_forward.1} parent=0 // loop_exit
    _

</llo_original>
